<compile_context>
chip_gen: v7x
topology: tpu7x:2x2x1
jax: 0.10.0
libtpu: 0.0.40
codegen_flags: <defaults>
</compile_context>

<pallas_src>
import jax
import jax.numpy as jnp
from jax.experimental import pallas as pl
from jax.experimental.pallas import tpu as pltpu


# ---------------------------------------------------------------------------
# Parameter init (same structure / RNG usage as the reference implementation)
# ---------------------------------------------------------------------------
def bn_init(n):
    # (gamma, beta, running_mean, running_var)
    return (jnp.ones((n,), jnp.float32), jnp.zeros((n,), jnp.float32),
            jnp.zeros((n,), jnp.float32), jnp.ones((n,), jnp.float32))


def renorm_maxnorm(w, max_norm=1.0):
    # torch.renorm(p=2, dim=0, maxnorm=max_norm) applied per output filter.
    norms = jnp.sqrt(jnp.sum(w.reshape(w.shape[0], -1) ** 2, axis=1))
    scale = jnp.minimum(1.0, max_norm / jnp.maximum(norms, 1e-7))
    return w * scale.reshape((-1,) + (1,) * (w.ndim - 1))


def init_eegnet(key, in_chans, n_classes, T):
    F1, D, F2, KL = 8, 2, 16, 64
    T1 = T + 1            # conv_temporal, pad 32, kernel 64
    T2 = T1 // 4          # pool (1,4)
    T3 = T2 + 1           # separable depthwise, pad 8, kernel 16
    T4 = T3 // 8          # pool (1,8)
    ks = jax.random.split(key, 6)
    return dict(
        conv_temporal_w=0.05 * jax.random.normal(ks[0], (F1, 1, 1, KL), jnp.float32),
        conv_spatial_w=0.05 * jax.random.normal(ks[1], (F1 * D, 1, in_chans, 1), jnp.float32),
        conv_sep_depth_w=0.05 * jax.random.normal(ks[2], (F1 * D, 1, 1, 16), jnp.float32),
        conv_sep_point_w=0.05 * jax.random.normal(ks[3], (F2, F1 * D, 1, 1), jnp.float32),
        cls_w=0.05 * jax.random.normal(ks[4], (n_classes, F2, 1, T4), jnp.float32),
        cls_b=0.01 * jax.random.normal(ks[5], (n_classes,), jnp.float32),
        bn_t=bn_init(F1), bn_1=bn_init(F1 * D), bn_2=bn_init(F2),
    )


def init_shallow(key, in_chans, n_classes, final_conv_length):
    NF, FT = 40, 25
    ks = jax.random.split(key, 4)
    return dict(
        conv_time_w=0.05 * jax.random.normal(ks[0], (NF, 1, FT, 1), jnp.float32),
        conv_spat_w=0.05 * jax.random.normal(ks[1], (NF, NF, 1, in_chans), jnp.float32),
        cls_w=0.05 * jax.random.normal(ks[2], (n_classes, NF, final_conv_length, 1), jnp.float32),
        cls_b=0.01 * jax.random.normal(ks[3], (n_classes,), jnp.float32),
        bn=bn_init(NF),
    )


def init_model_params(key, in_chans, n_class, n_branch, final_conv_length, T):
    ks = jax.random.split(key, 1 + 2 * n_branch)
    params = {
        'score': init_eegnet(ks[0], in_chans, n_branch * 2, T),
        'branches': [],
    }
    for i in range(n_branch):
        params['branches'].append((
            init_eegnet(ks[1 + 2 * i], in_chans, n_class, T),
            init_shallow(ks[2 + 2 * i], in_chans, n_class, final_conv_length),
        ))
    return params


# ---------------------------------------------------------------------------
# One-time parameter preparation: fold BN, merge convs, stack networks.
# Runs once, outside the jitted forward (no per-forward weight rebuilding).
# ---------------------------------------------------------------------------
def prepare_params(params, T):
    F1, D, F2, KL, KS = 8, 2, 16, 64, 16
    NF, FT = 40, 25
    T1 = T + 1
    T2 = T1 // 4
    T3 = T2 + 1
    T4 = T3 // 8

    eeg_nets = [params['score']] + [br[0] for br in params['branches']]
    sh_nets = [br[1] for br in params['branches']]
    NE = len(eeg_nets)
    C = eeg_nets[0]['conv_spatial_w'].shape[2]

    # ---- EEGNet stack: merge conv_temporal + BN_t + conv_spatial + BN_1 ----
    w1_blocks, b1_list, dw_list, pt_blocks, bpt_list, eeg_heads = [], [], [], [], [], []
    for p in eeg_nets:
        g_t, be_t, mu_t, var_t = p['bn_t']
        a_t = g_t / jnp.sqrt(var_t + 1e-3)
        s_t = be_t - mu_t * a_t
        g_1, be_1, mu_1, var_1 = p['bn_1']
        a_1 = g_1 / jnp.sqrt(var_1 + 1e-3)
        s_1 = be_1 - mu_1 * a_1
        wt = p['conv_temporal_w'].reshape(F1, KL)
        wsp = renorm_maxnorm(p['conv_spatial_w'], 1.0).reshape(F1 * D, C)
        f1i = jnp.arange(F1 * D) // D
        W1 = (a_1[:, None, None] * a_t[f1i][:, None, None]
              * wsp[:, :, None] * wt[f1i][:, None, :])                       # (16, C, KL)
        b1 = a_1 * (s_t[f1i] * jnp.sum(wsp, axis=1)) + s_1                   # (16,)
        w1_blocks.append(W1.reshape(F1 * D, C * KL))
        b1_list.append(b1)
        dw_list.append(p['conv_sep_depth_w'].reshape(F1 * D, KS))
        g_2, be_2, mu_2, var_2 = p['bn_2']
        a_2 = g_2 / jnp.sqrt(var_2 + 1e-3)
        s_2 = be_2 - mu_2 * a_2
        pt_blocks.append(a_2[:, None] * p['conv_sep_point_w'].reshape(F2, F1 * D))
        bpt_list.append(s_2)
        n_e = p['cls_w'].shape[0]
        eeg_heads.append((p['cls_w'].reshape(n_e, F2, T4).astype(jnp.float32),
                          p['cls_b'].reshape(n_e, 1).astype(jnp.float32)))

    RE = NE * F1 * D
    w1 = jnp.concatenate(w1_blocks, axis=0).astype(jnp.bfloat16)             # (RE, C*KL)
    b1 = jnp.concatenate(b1_list, axis=0)[:, None].astype(jnp.float32)       # (RE, 1)
    dw = jnp.concatenate(dw_list, axis=0).astype(jnp.float32)                # (RE, KS)
    wpt = jnp.zeros((RE, RE), jnp.float32)                                   # block-diag pointwise
    for e, blk in enumerate(pt_blocks):
        wpt = wpt.at[e * F2:(e + 1) * F2, e * F1 * D:(e + 1) * F1 * D].set(blk)
    wpt = wpt.astype(jnp.bfloat16)
    bpt = jnp.concatenate(bpt_list, axis=0)[:, None].astype(jnp.float32)

    # ---- Shallow stack: merge conv_time + conv_spat + BN ----
    wsh_blocks, bsh_list, sh_heads = [], [], []
    fcl = sh_nets[0]['cls_w'].shape[2]
    for p in sh_nets:
        g, be, mu, var = p['bn']
        a = g / jnp.sqrt(var + 1e-5)
        s = be - mu * a
        wt = p['conv_time_w'].reshape(NF, FT)
        wsp = p['conv_spat_w'].reshape(NF, NF, C)
        Wm = jnp.einsum('ofc,fk->ock', wsp, wt)                              # (NF, C, FT)
        Wm = a[:, None, None] * Wm
        wsh_blocks.append(Wm.reshape(NF, C * FT))
        bsh_list.append(s)
        n_c = p['cls_w'].shape[0]
        sh_heads.append((p['cls_w'].reshape(n_c, NF, fcl).astype(jnp.float32),
                         p['cls_b'].reshape(n_c, 1).astype(jnp.float32)))
    wsh = jnp.concatenate(wsh_blocks, axis=0).astype(jnp.bfloat16)           # (NS*NF, C*FT)
    bsh = jnp.concatenate(bsh_list, axis=0)[:, None].astype(jnp.float32)

    # ---- non-overlapping pooling matrices (applied on the MXU in-kernel) ----
    r = jnp.arange(T1)[:, None]
    c = jnp.arange(T2)[None, :]
    p4 = jnp.where((r >= 4 * c) & (r < 4 * c + 4), 0.25, 0.0).astype(jnp.float32)
    r = jnp.arange(T3)[:, None]
    c = jnp.arange(T4)[None, :]
    p8 = jnp.where((r >= 8 * c) & (r < 8 * c + 8), 0.125, 0.0).astype(jnp.float32)

    return dict(w1=w1, b1=b1, dw=dw, wpt=wpt, bpt=bpt,
                wsh=wsh, bsh=bsh, p4=p4, p8=p8,
                eeg_heads=eeg_heads, sh_heads=sh_heads)


# ---------------------------------------------------------------------------
# Fused forward: one Pallas kernel for score net + all branches + gate.
# ---------------------------------------------------------------------------
def model_forward(prep, x):
    B, C, T = x.shape
    F1, D, F2, KL, KS = 8, 2, 16, 64, 16
    NF, FT, PL, PS = 40, 25, 75, 15
    T1 = T + 1
    T2 = T1 // 4
    T3 = T2 + 1
    T4 = T3 // 8
    T1s = T - FT + 1

    NE = len(prep['eeg_heads'])
    NS = len(prep['sh_heads'])
    n_branch = NS
    G = 2 * n_branch
    n_class = prep['eeg_heads'][1][0].shape[0]
    P = prep['sh_heads'][0][0].shape[2]
    RE = NE * F1 * D
    RS = NS * NF
    assert prep['eeg_heads'][0][0].shape[0] == G

    # ---- im2col patches (single gather per conv type), bf16 MXU operands ----
    xpad = jnp.pad(x, ((0, 0), (0, 0), (KL // 2, KL // 2)))
    idx_e = jnp.arange(T1)[:, None] + jnp.arange(KL)[None, :]
    pe = jnp.transpose(xpad[:, :, idx_e], (0, 1, 3, 2)).reshape(B, C * KL, T1)
    pe = pe.astype(jnp.bfloat16)
    idx_s = jnp.arange(T1s)[:, None] + jnp.arange(FT)[None, :]
    ps = jnp.transpose(x[:, :, idx_s], (0, 1, 3, 2)).reshape(B, C * FT, T1s)
    ps = ps.astype(jnp.bfloat16)

    head_arrays = []
    for wc, bc in prep['eeg_heads']:
        head_arrays += [wc, bc]
    for wc, bc in prep['sh_heads']:
        head_arrays += [wc, bc]
    inputs = [pe, ps, prep['w1'], prep['b1'], prep['dw'], prep['wpt'], prep['bpt'],
              prep['wsh'], prep['bsh'], prep['p4'], prep['p8']] + head_arrays
    n_in = len(inputs)

    def _elu(v):
        return jnp.where(v > 0, v, jnp.exp(jnp.minimum(v, 0.0)) - 1.0)

    def _lsm_col(v):  # log_softmax along axis 0 of an (n, 1) column
        m = jnp.max(v, axis=0, keepdims=True)
        z = v - m
        return z - jnp.log(jnp.sum(jnp.exp(z), axis=0, keepdims=True))

    def kernel(*refs):
        (pe_ref, ps_ref, w1_ref, b1_ref, dw_ref, wpt_ref, bpt_ref,
         wsh_ref, bsh_ref, p4_ref, p8_ref) = refs[:11]
        head_refs = refs[11:n_in]
        out_label_ref, out_wsm_ref, out_outs_ref = refs[n_in:]

        w1 = w1_ref[...]
        b1 = b1_ref[...]
        dw = dw_ref[...]
        wpt = wpt_ref[...]
        bpt = bpt_ref[...]
        wsh = wsh_ref[...]
        bsh = bsh_ref[...]
        p4 = p4_ref[...]
        p8 = p8_ref[...]

        label_cols, w_cols, outs_list = [], [], []
        for b in range(B):
            # ---- stacked EEGNets: merged temporal+spatial conv (+BN folds) ----
            z = jnp.dot(w1, pe_ref[b], preferred_element_type=jnp.float32) + b1   # (RE, T1)
            z = _elu(z)
            z = jnp.dot(z, p4, preferred_element_type=jnp.float32)                # (RE, T2)
            # depthwise separable conv: VPU shift-MAC with per-row kernels
            zpad = jnp.concatenate(
                [jnp.zeros((RE, KS // 2), jnp.float32), z,
                 jnp.zeros((RE, KS // 2), jnp.float32)], axis=1)                  # (RE, T2+KS)
            acc = jnp.zeros((RE, T3), jnp.float32)
            for k in range(KS):
                acc = acc + dw[:, k:k + 1] * zpad[:, k:k + T3]
            # pointwise conv (+BN_2 fold), ELU, mean-pool 8
            y = jnp.dot(wpt, acc.astype(jnp.bfloat16),
                        preferred_element_type=jnp.float32) + bpt                 # (RE, T3)
            y = _elu(y)
            y = jnp.dot(y, p8, preferred_element_type=jnp.float32)                # (RE, T4)

            # ---- stacked ShallowFBCSP: merged time+spat conv (+BN fold) ----
            zs = jnp.dot(wsh, ps_ref[b], preferred_element_type=jnp.float32) + bsh  # (RS, T1s)
            zs = zs * zs                                                           # square
            pooled = [jnp.mean(zs[:, p_ * PS:p_ * PS + PL], axis=1, keepdims=True)
                      for p_ in range(P)]                                          # overlapping pool
            zs = pooled[0] if P == 1 else jnp.concatenate(pooled, axis=1)          # (RS, P)
            zs = jnp.log(jnp.maximum(zs, 1e-6))                                    # safe_log

            # ---- classifier heads + per-net LogSoftmax ----
            lsm_eeg = []
            for e in range(NE):
                wc = head_refs[2 * e][...]
                bc = head_refs[2 * e + 1][...]
                feat = y[e * F1 * D:(e + 1) * F1 * D, :]                           # (F2, T4)
                s = jnp.sum(jnp.sum(wc * feat[None, :, :], axis=2), axis=1,
                            keepdims=True) + bc                                    # (n_e, 1)
                lsm_eeg.append(_lsm_col(s))
            lsm_sh = []
            for si in range(NS):
                wc = head_refs[2 * NE + 2 * si][...]
                bc = head_refs[2 * NE + 2 * si + 1][...]
                feat = zs[si * NF:(si + 1) * NF, :]                                # (NF, P)
                s = jnp.sum(jnp.sum(wc * feat[None, :, :], axis=2), axis=1,
                            keepdims=True) + bc                                    # (nc, 1)
                lsm_sh.append(_lsm_col(s))

            # ---- gate: softmax(score log-probs), weighted sum of branch log-probs
            sc = lsm_eeg[0]                                                        # (G, 1)
            m = jnp.max(sc, axis=0, keepdims=True)
            ex = jnp.exp(sc - m)
            wgt = ex / jnp.sum(ex, axis=0, keepdims=True)                          # (G, 1)
            cols = []
            for i in range(n_branch):
                cols.append(lsm_eeg[1 + i])
                cols.append(lsm_sh[i])
            outs_b = jnp.concatenate(cols, axis=1)                                 # (nc, G)
            wl_b = jnp.dot(outs_b, wgt, preferred_element_type=jnp.float32)        # (nc, 1)

            label_cols.append(wl_b)
            w_cols.append(wgt)
            outs_list.append(outs_b)

        out_label_ref[...] = jnp.concatenate(label_cols, axis=1)                   # (nc, B)
        out_wsm_ref[...] = jnp.concatenate(w_cols, axis=1)                         # (G, B)
        out_outs_ref[...] = jnp.stack(outs_list, axis=0)                           # (B, nc, G)

    vmem = pl.BlockSpec(memory_space=pltpu.MemorySpace.VMEM)
    out_label, out_wsm, out_outs = pl.pallas_call(
        kernel,
        out_shape=(jax.ShapeDtypeStruct((n_class, B), jnp.float32),
                   jax.ShapeDtypeStruct((G, B), jnp.float32),
                   jax.ShapeDtypeStruct((B, n_class, G), jnp.float32)),
        in_specs=[vmem] * n_in,
        out_specs=(vmem, vmem, vmem),
    )(*inputs)

    weighted_label = out_label.T                     # (B, n_class)
    weight_sm = out_wsm.T                            # (B, G)
    weighted = weight_sm[:, None, :]                 # (B, 1, G)
    outputs = jnp.transpose(out_outs, (0, 2, 1))     # (B, G, n_class)
    return weighted_label, weight_sm, weighted, outputs


if __name__ == "__main__":
    # Small, consistent config: in_channel=4, n_class=4, n_branch=2,
    # input_window_samples=128, final_conv_length=2 ((128-24-75)//15+1 == 2).
    B, C, T = 2, 4, 128
    n_class, n_branch, final_conv_length = 4, 2, 2

    key = jax.random.PRNGKey(0)
    kx, kp = jax.random.split(key)
    x = jax.random.normal(kx, (B, C, T), jnp.float32)
    params = init_model_params(kp, C, n_class, n_branch, final_conv_length, T)

    # One-time weight merging / BN folding / network stacking (outside jit).
    prep = prepare_params(params, T)

    fwd = jax.jit(model_forward)
    weighted_label, weight_sm, weighted, outputs = fwd(prep, x)
    jax.block_until_ready((weighted_label, weight_sm, weighted, outputs))

    assert weighted_label.shape == (B, n_class)
    assert weight_sm.shape == (B, n_branch * 2)
    assert weighted.shape == (B, 1, n_branch * 2)
    assert outputs.shape == (B, n_branch * 2, n_class)
    # gate softmax sanity
    assert jnp.allclose(jnp.sum(weight_sm, axis=1), 1.0, atol=1e-5)
    print("KERNEL_OK")
</pallas_src>

<mosaic_0001>
module attributes {stable_mosaic.version = 11 : i64} {
  func.func @kernel(%arg0: memref<2x256x129xbf16, #tpu.memory_space<vmem>>, %arg1: memref<2x100x104xbf16, #tpu.memory_space<vmem>>, %arg2: memref<48x256xbf16, #tpu.memory_space<vmem>>, %arg3: memref<48x1xf32, #tpu.memory_space<vmem>>, %arg4: memref<48x16xf32, #tpu.memory_space<vmem>>, %arg5: memref<48x48xbf16, #tpu.memory_space<vmem>>, %arg6: memref<48x1xf32, #tpu.memory_space<vmem>>, %arg7: memref<80x100xbf16, #tpu.memory_space<vmem>>, %arg8: memref<80x1xf32, #tpu.memory_space<vmem>>, %arg9: memref<129x32xf32, #tpu.memory_space<vmem>>, %arg10: memref<33x4xf32, #tpu.memory_space<vmem>>, %arg11: memref<4x16x4xf32, #tpu.memory_space<vmem>>, %arg12: memref<4x1xf32, #tpu.memory_space<vmem>>, %arg13: memref<4x16x4xf32, #tpu.memory_space<vmem>>, %arg14: memref<4x1xf32, #tpu.memory_space<vmem>>, %arg15: memref<4x16x4xf32, #tpu.memory_space<vmem>>, %arg16: memref<4x1xf32, #tpu.memory_space<vmem>>, %arg17: memref<4x40x2xf32, #tpu.memory_space<vmem>>, %arg18: memref<4x1xf32, #tpu.memory_space<vmem>>, %arg19: memref<4x40x2xf32, #tpu.memory_space<vmem>>, %arg20: memref<4x1xf32, #tpu.memory_space<vmem>>, %arg21: memref<4x2xf32, #tpu.memory_space<vmem>>, %arg22: memref<4x2xf32, #tpu.memory_space<vmem>>, %arg23: memref<2x4x4xf32, #tpu.memory_space<vmem>>) attributes {dimension_semantics = [], scalar_prefetch = 0 : i64, scratch_operands = 0 : i64, tpu.core_type = #tpu.core_type<tc>} {
    %c0 = arith.constant 0 : index
    %c0_0 = arith.constant 0 : index
    %0 = vector.load %arg2[%c0, %c0_0] : memref<48x256xbf16, #tpu.memory_space<vmem>>, vector<48x256xbf16>
    %c0_1 = arith.constant 0 : index
    %c0_2 = arith.constant 0 : index
    %1 = vector.load %arg3[%c0_1, %c0_2] : memref<48x1xf32, #tpu.memory_space<vmem>>, vector<48x1xf32>
    %c0_3 = arith.constant 0 : index
    %c0_4 = arith.constant 0 : index
    %2 = vector.load %arg4[%c0_3, %c0_4] : memref<48x16xf32, #tpu.memory_space<vmem>>, vector<48x16xf32>
    %c0_5 = arith.constant 0 : index
    %c0_6 = arith.constant 0 : index
    %3 = vector.load %arg5[%c0_5, %c0_6] : memref<48x48xbf16, #tpu.memory_space<vmem>>, vector<48x48xbf16>
    %c0_7 = arith.constant 0 : index
    %c0_8 = arith.constant 0 : index
    %4 = vector.load %arg6[%c0_7, %c0_8] : memref<48x1xf32, #tpu.memory_space<vmem>>, vector<48x1xf32>
    %c0_9 = arith.constant 0 : index
    %c0_10 = arith.constant 0 : index
    %5 = vector.load %arg7[%c0_9, %c0_10] : memref<80x100xbf16, #tpu.memory_space<vmem>>, vector<80x100xbf16>
    %c0_11 = arith.constant 0 : index
    %c0_12 = arith.constant 0 : index
    %6 = vector.load %arg8[%c0_11, %c0_12] : memref<80x1xf32, #tpu.memory_space<vmem>>, vector<80x1xf32>
    %c0_13 = arith.constant 0 : index
    %c0_14 = arith.constant 0 : index
    %7 = vector.load %arg9[%c0_13, %c0_14] : memref<129x32xf32, #tpu.memory_space<vmem>>, vector<129x32xf32>
    %c0_15 = arith.constant 0 : index
    %c0_16 = arith.constant 0 : index
    %8 = vector.load %arg10[%c0_15, %c0_16] : memref<33x4xf32, #tpu.memory_space<vmem>>, vector<33x4xf32>
    %c0_17 = arith.constant 0 : index
    %c0_18 = arith.constant 0 : index
    %c0_19 = arith.constant 0 : index
    %9 = vector.load %arg0[%c0_17, %c0_18, %c0_19] : memref<2x256x129xbf16, #tpu.memory_space<vmem>>, vector<1x256x129xbf16>
    %10 = vector.shape_cast %9 : vector<1x256x129xbf16> to vector<256x129xbf16>
    %cst = arith.constant dense<0.000000e+00> : vector<48x129xf32>
    %11 = tpu.matmul %0, %10, %cst {dimension_numbers = #tpu.dot_dimension_numbers<[1], [0], [0], [1], [0, 0, 1, 1], [], []>} : vector<48x256xbf16>, vector<256x129xbf16>, vector<48x129xf32> -> vector<48x129xf32>
    %12 = vector.broadcast %1 : vector<48x1xf32> to vector<48x129xf32>
    %13 = arith.addf %11, %12 : vector<48x129xf32>
    %cst_20 = arith.constant 0.000000e+00 : f32
    %14 = vector.broadcast %cst_20 : f32 to vector<48x129xf32>
    %15 = arith.cmpf ogt, %13, %14 : vector<48x129xf32>
    %cst_21 = arith.constant 0.000000e+00 : f32
    %16 = vector.broadcast %cst_21 : f32 to vector<48x129xf32>
    %17 = arith.minimumf %13, %16 : vector<48x129xf32>
    %18 = math.exp %17 : vector<48x129xf32>
    %cst_22 = arith.constant 1.000000e+00 : f32
    %19 = vector.broadcast %cst_22 : f32 to vector<48x129xf32>
    %20 = arith.subf %18, %19 : vector<48x129xf32>
    %21 = arith.select %15, %13, %20 : vector<48x129xi1>, vector<48x129xf32>
    %cst_23 = arith.constant dense<0.000000e+00> : vector<48x32xf32>
    %22 = tpu.matmul %21, %7, %cst_23 {dimension_numbers = #tpu.dot_dimension_numbers<[1], [0], [0], [1], [0, 0, 1, 1], [], []>} : vector<48x129xf32>, vector<129x32xf32>, vector<48x32xf32> -> vector<48x32xf32>
    %cst_24 = arith.constant 0.000000e+00 : f32
    %23 = vector.broadcast %cst_24 : f32 to vector<48x8xf32>
    %cst_25 = arith.constant 0.000000e+00 : f32
    %24 = vector.broadcast %cst_25 : f32 to vector<48x8xf32>
    %25 = tpu.concatenate %23, %22, %24 in 1 : vector<48x8xf32>, vector<48x32xf32>, vector<48x8xf32> -> vector<48x48xf32>
    %cst_26 = arith.constant 0.000000e+00 : f32
    %26 = vector.broadcast %cst_26 : f32 to vector<48x33xf32>
    %27 = vector.extract_strided_slice %2 {offsets = [0, 0], sizes = [48, 1], strides = [1, 1]} : vector<48x16xf32> to vector<48x1xf32>
    %28 = vector.extract_strided_slice %25 {offsets = [0, 0], sizes = [48, 33], strides = [1, 1]} : vector<48x48xf32> to vector<48x33xf32>
    %29 = vector.broadcast %27 : vector<48x1xf32> to vector<48x33xf32>
    %30 = arith.mulf %29, %28 : vector<48x33xf32>
    %31 = arith.addf %26, %30 : vector<48x33xf32>
    %32 = vector.extract_strided_slice %2 {offsets = [0, 1], sizes = [48, 1], strides = [1, 1]} : vector<48x16xf32> to vector<48x1xf32>
    %33 = vector.extract_strided_slice %25 {offsets = [0, 1], sizes = [48, 33], strides = [1, 1]} : vector<48x48xf32> to vector<48x33xf32>
    %34 = vector.broadcast %32 : vector<48x1xf32> to vector<48x33xf32>
    %35 = arith.mulf %34, %33 : vector<48x33xf32>
    %36 = arith.addf %31, %35 : vector<48x33xf32>
    %37 = vector.extract_strided_slice %2 {offsets = [0, 2], sizes = [48, 1], strides = [1, 1]} : vector<48x16xf32> to vector<48x1xf32>
    %38 = vector.extract_strided_slice %25 {offsets = [0, 2], sizes = [48, 33], strides = [1, 1]} : vector<48x48xf32> to vector<48x33xf32>
    %39 = vector.broadcast %37 : vector<48x1xf32> to vector<48x33xf32>
    %40 = arith.mulf %39, %38 : vector<48x33xf32>
    %41 = arith.addf %36, %40 : vector<48x33xf32>
    %42 = vector.extract_strided_slice %2 {offsets = [0, 3], sizes = [48, 1], strides = [1, 1]} : vector<48x16xf32> to vector<48x1xf32>
    %43 = vector.extract_strided_slice %25 {offsets = [0, 3], sizes = [48, 33], strides = [1, 1]} : vector<48x48xf32> to vector<48x33xf32>
    %44 = vector.broadcast %42 : vector<48x1xf32> to vector<48x33xf32>
    %45 = arith.mulf %44, %43 : vector<48x33xf32>
    %46 = arith.addf %41, %45 : vector<48x33xf32>
    %47 = vector.extract_strided_slice %2 {offsets = [0, 4], sizes = [48, 1], strides = [1, 1]} : vector<48x16xf32> to vector<48x1xf32>
    %48 = vector.extract_strided_slice %25 {offsets = [0, 4], sizes = [48, 33], strides = [1, 1]} : vector<48x48xf32> to vector<48x33xf32>
    %49 = vector.broadcast %47 : vector<48x1xf32> to vector<48x33xf32>
    %50 = arith.mulf %49, %48 : vector<48x33xf32>
    %51 = arith.addf %46, %50 : vector<48x33xf32>
    %52 = vector.extract_strided_slice %2 {offsets = [0, 5], sizes = [48, 1], strides = [1, 1]} : vector<48x16xf32> to vector<48x1xf32>
    %53 = vector.extract_strided_slice %25 {offsets = [0, 5], sizes = [48, 33], strides = [1, 1]} : vector<48x48xf32> to vector<48x33xf32>
    %54 = vector.broadcast %52 : vector<48x1xf32> to vector<48x33xf32>
    %55 = arith.mulf %54, %53 : vector<48x33xf32>
    %56 = arith.addf %51, %55 : vector<48x33xf32>
    %57 = vector.extract_strided_slice %2 {offsets = [0, 6], sizes = [48, 1], strides = [1, 1]} : vector<48x16xf32> to vector<48x1xf32>
    %58 = vector.extract_strided_slice %25 {offsets = [0, 6], sizes = [48, 33], strides = [1, 1]} : vector<48x48xf32> to vector<48x33xf32>
    %59 = vector.broadcast %57 : vector<48x1xf32> to vector<48x33xf32>
    %60 = arith.mulf %59, %58 : vector<48x33xf32>
    %61 = arith.addf %56, %60 : vector<48x33xf32>
    %62 = vector.extract_strided_slice %2 {offsets = [0, 7], sizes = [48, 1], strides = [1, 1]} : vector<48x16xf32> to vector<48x1xf32>
    %63 = vector.extract_strided_slice %25 {offsets = [0, 7], sizes = [48, 33], strides = [1, 1]} : vector<48x48xf32> to vector<48x33xf32>
    %64 = vector.broadcast %62 : vector<48x1xf32> to vector<48x33xf32>
    %65 = arith.mulf %64, %63 : vector<48x33xf32>
    %66 = arith.addf %61, %65 : vector<48x33xf32>
    %67 = vector.extract_strided_slice %2 {offsets = [0, 8], sizes = [48, 1], strides = [1, 1]} : vector<48x16xf32> to vector<48x1xf32>
    %68 = vector.extract_strided_slice %25 {offsets = [0, 8], sizes = [48, 33], strides = [1, 1]} : vector<48x48xf32> to vector<48x33xf32>
    %69 = vector.broadcast %67 : vector<48x1xf32> to vector<48x33xf32>
    %70 = arith.mulf %69, %68 : vector<48x33xf32>
    %71 = arith.addf %66, %70 : vector<48x33xf32>
    %72 = vector.extract_strided_slice %2 {offsets = [0, 9], sizes = [48, 1], strides = [1, 1]} : vector<48x16xf32> to vector<48x1xf32>
    %73 = vector.extract_strided_slice %25 {offsets = [0, 9], sizes = [48, 33], strides = [1, 1]} : vector<48x48xf32> to vector<48x33xf32>
    %74 = vector.broadcast %72 : vector<48x1xf32> to vector<48x33xf32>
    %75 = arith.mulf %74, %73 : vector<48x33xf32>
    %76 = arith.addf %71, %75 : vector<48x33xf32>
    %77 = vector.extract_strided_slice %2 {offsets = [0, 10], sizes = [48, 1], strides = [1, 1]} : vector<48x16xf32> to vector<48x1xf32>
    %78 = vector.extract_strided_slice %25 {offsets = [0, 10], sizes = [48, 33], strides = [1, 1]} : vector<48x48xf32> to vector<48x33xf32>
    %79 = vector.broadcast %77 : vector<48x1xf32> to vector<48x33xf32>
    %80 = arith.mulf %79, %78 : vector<48x33xf32>
    %81 = arith.addf %76, %80 : vector<48x33xf32>
    %82 = vector.extract_strided_slice %2 {offsets = [0, 11], sizes = [48, 1], strides = [1, 1]} : vector<48x16xf32> to vector<48x1xf32>
    %83 = vector.extract_strided_slice %25 {offsets = [0, 11], sizes = [48, 33], strides = [1, 1]} : vector<48x48xf32> to vector<48x33xf32>
    %84 = vector.broadcast %82 : vector<48x1xf32> to vector<48x33xf32>
    %85 = arith.mulf %84, %83 : vector<48x33xf32>
    %86 = arith.addf %81, %85 : vector<48x33xf32>
    %87 = vector.extract_strided_slice %2 {offsets = [0, 12], sizes = [48, 1], strides = [1, 1]} : vector<48x16xf32> to vector<48x1xf32>
    %88 = vector.extract_strided_slice %25 {offsets = [0, 12], sizes = [48, 33], strides = [1, 1]} : vector<48x48xf32> to vector<48x33xf32>
    %89 = vector.broadcast %87 : vector<48x1xf32> to vector<48x33xf32>
    %90 = arith.mulf %89, %88 : vector<48x33xf32>
    %91 = arith.addf %86, %90 : vector<48x33xf32>
    %92 = vector.extract_strided_slice %2 {offsets = [0, 13], sizes = [48, 1], strides = [1, 1]} : vector<48x16xf32> to vector<48x1xf32>
    %93 = vector.extract_strided_slice %25 {offsets = [0, 13], sizes = [48, 33], strides = [1, 1]} : vector<48x48xf32> to vector<48x33xf32>
    %94 = vector.broadcast %92 : vector<48x1xf32> to vector<48x33xf32>
    %95 = arith.mulf %94, %93 : vector<48x33xf32>
    %96 = arith.addf %91, %95 : vector<48x33xf32>
    %97 = vector.extract_strided_slice %2 {offsets = [0, 14], sizes = [48, 1], strides = [1, 1]} : vector<48x16xf32> to vector<48x1xf32>
    %98 = vector.extract_strided_slice %25 {offsets = [0, 14], sizes = [48, 33], strides = [1, 1]} : vector<48x48xf32> to vector<48x33xf32>
    %99 = vector.broadcast %97 : vector<48x1xf32> to vector<48x33xf32>
    %100 = arith.mulf %99, %98 : vector<48x33xf32>
    %101 = arith.addf %96, %100 : vector<48x33xf32>
    %102 = vector.extract_strided_slice %2 {offsets = [0, 15], sizes = [48, 1], strides = [1, 1]} : vector<48x16xf32> to vector<48x1xf32>
    %103 = vector.extract_strided_slice %25 {offsets = [0, 15], sizes = [48, 33], strides = [1, 1]} : vector<48x48xf32> to vector<48x33xf32>
    %104 = vector.broadcast %102 : vector<48x1xf32> to vector<48x33xf32>
    %105 = arith.mulf %104, %103 : vector<48x33xf32>
    %106 = arith.addf %101, %105 : vector<48x33xf32>
    %107 = arith.truncf %106 : vector<48x33xf32> to vector<48x33xbf16>
    %cst_27 = arith.constant dense<0.000000e+00> : vector<48x33xf32>
    %108 = tpu.matmul %3, %107, %cst_27 {dimension_numbers = #tpu.dot_dimension_numbers<[1], [0], [0], [1], [0, 0, 1, 1], [], []>} : vector<48x48xbf16>, vector<48x33xbf16>, vector<48x33xf32> -> vector<48x33xf32>
    %109 = vector.broadcast %4 : vector<48x1xf32> to vector<48x33xf32>
    %110 = arith.addf %108, %109 : vector<48x33xf32>
    %cst_28 = arith.constant 0.000000e+00 : f32
    %111 = vector.broadcast %cst_28 : f32 to vector<48x33xf32>
    %112 = arith.cmpf ogt, %110, %111 : vector<48x33xf32>
    %cst_29 = arith.constant 0.000000e+00 : f32
    %113 = vector.broadcast %cst_29 : f32 to vector<48x33xf32>
    %114 = arith.minimumf %110, %113 : vector<48x33xf32>
    %115 = math.exp %114 : vector<48x33xf32>
    %cst_30 = arith.constant 1.000000e+00 : f32
    %116 = vector.broadcast %cst_30 : f32 to vector<48x33xf32>
    %117 = arith.subf %115, %116 : vector<48x33xf32>
    %118 = arith.select %112, %110, %117 : vector<48x33xi1>, vector<48x33xf32>
    %cst_31 = arith.constant dense<0.000000e+00> : vector<48x4xf32>
    %119 = tpu.matmul %118, %8, %cst_31 {dimension_numbers = #tpu.dot_dimension_numbers<[1], [0], [0], [1], [0, 0, 1, 1], [], []>} : vector<48x33xf32>, vector<33x4xf32>, vector<48x4xf32> -> vector<48x4xf32>
    %c0_32 = arith.constant 0 : index
    %c0_33 = arith.constant 0 : index
    %c0_34 = arith.constant 0 : index
    %120 = vector.load %arg1[%c0_32, %c0_33, %c0_34] : memref<2x100x104xbf16, #tpu.memory_space<vmem>>, vector<1x100x104xbf16>
    %121 = vector.shape_cast %120 : vector<1x100x104xbf16> to vector<100x104xbf16>
    %cst_35 = arith.constant dense<0.000000e+00> : vector<80x104xf32>
    %122 = tpu.matmul %5, %121, %cst_35 {dimension_numbers = #tpu.dot_dimension_numbers<[1], [0], [0], [1], [0, 0, 1, 1], [], []>} : vector<80x100xbf16>, vector<100x104xbf16>, vector<80x104xf32> -> vector<80x104xf32>
    %123 = vector.broadcast %6 : vector<80x1xf32> to vector<80x104xf32>
    %124 = arith.addf %122, %123 : vector<80x104xf32>
    %125 = arith.mulf %124, %124 : vector<80x104xf32>
    %126 = vector.extract_strided_slice %125 {offsets = [0, 0], sizes = [80, 75], strides = [1, 1]} : vector<80x104xf32> to vector<80x75xf32>
    %cst_36 = arith.constant dense<0.000000e+00> : vector<80xf32>
    %127 = vector.multi_reduction <add>, %126, %cst_36 [1] : vector<80x75xf32> to vector<80xf32>
    %128 = vector.shape_cast %127 : vector<80xf32> to vector<80x1xf32>
    %cst_37 = arith.constant 7.500000e+01 : f32
    %129 = vector.broadcast %cst_37 : f32 to vector<80x1xf32>
    %130 = arith.divf %128, %129 : vector<80x1xf32>
    %131 = vector.extract_strided_slice %125 {offsets = [0, 15], sizes = [80, 75], strides = [1, 1]} : vector<80x104xf32> to vector<80x75xf32>
    %cst_38 = arith.constant dense<0.000000e+00> : vector<80xf32>
    %132 = vector.multi_reduction <add>, %131, %cst_38 [1] : vector<80x75xf32> to vector<80xf32>
    %133 = vector.shape_cast %132 : vector<80xf32> to vector<80x1xf32>
    %cst_39 = arith.constant 7.500000e+01 : f32
    %134 = vector.broadcast %cst_39 : f32 to vector<80x1xf32>
    %135 = arith.divf %133, %134 : vector<80x1xf32>
    %136 = tpu.concatenate %130, %135 in 1 : vector<80x1xf32>, vector<80x1xf32> -> vector<80x2xf32>
    %cst_40 = arith.constant 9.99999997E-7 : f32
    %137 = vector.broadcast %cst_40 : f32 to vector<80x2xf32>
    %138 = arith.maximumf %136, %137 : vector<80x2xf32>
    %139 = math.log %138 : vector<80x2xf32>
    %c0_41 = arith.constant 0 : index
    %c0_42 = arith.constant 0 : index
    %c0_43 = arith.constant 0 : index
    %140 = vector.load %arg11[%c0_41, %c0_42, %c0_43] : memref<4x16x4xf32, #tpu.memory_space<vmem>>, vector<4x16x4xf32>
    %c0_44 = arith.constant 0 : index
    %c0_45 = arith.constant 0 : index
    %141 = vector.load %arg12[%c0_44, %c0_45] : memref<4x1xf32, #tpu.memory_space<vmem>>, vector<4x1xf32>
    %142 = vector.extract_strided_slice %119 {offsets = [0, 0], sizes = [16, 4], strides = [1, 1]} : vector<48x4xf32> to vector<16x4xf32>
    %143 = vector.shape_cast %142 : vector<16x4xf32> to vector<1x16x4xf32>
    %144 = vector.broadcast %143 : vector<1x16x4xf32> to vector<4x16x4xf32>
    %145 = arith.mulf %140, %144 : vector<4x16x4xf32>
    %cst_46 = arith.constant dense<0.000000e+00> : vector<4x16xf32>
    %146 = vector.multi_reduction <add>, %145, %cst_46 [2] : vector<4x16x4xf32> to vector<4x16xf32>
    %cst_47 = arith.constant dense<0.000000e+00> : vector<4xf32>
    %147 = vector.multi_reduction <add>, %146, %cst_47 [1] : vector<4x16xf32> to vector<4xf32>
    %148 = vector.shape_cast %147 : vector<4xf32> to vector<4x1xf32>
    %149 = arith.addf %148, %141 : vector<4x1xf32>
    %cst_48 = arith.constant dense<0xFF800000> : vector<1xf32>
    %150 = vector.multi_reduction <maximumf>, %149, %cst_48 [0] : vector<4x1xf32> to vector<1xf32>
    %151 = vector.shape_cast %150 : vector<1xf32> to vector<1x1xf32>
    %152 = vector.broadcast %151 : vector<1x1xf32> to vector<4x1xf32>
    %153 = arith.subf %149, %152 : vector<4x1xf32>
    %154 = math.exp %153 : vector<4x1xf32>
    %cst_49 = arith.constant dense<0.000000e+00> : vector<1xf32>
    %155 = vector.multi_reduction <add>, %154, %cst_49 [0] : vector<4x1xf32> to vector<1xf32>
    %156 = vector.shape_cast %155 : vector<1xf32> to vector<1x1xf32>
    %157 = math.log %156 : vector<1x1xf32>
    %158 = vector.broadcast %157 : vector<1x1xf32> to vector<4x1xf32>
    %159 = arith.subf %153, %158 : vector<4x1xf32>
    %c0_50 = arith.constant 0 : index
    %c0_51 = arith.constant 0 : index
    %c0_52 = arith.constant 0 : index
    %160 = vector.load %arg13[%c0_50, %c0_51, %c0_52] : memref<4x16x4xf32, #tpu.memory_space<vmem>>, vector<4x16x4xf32>
    %c0_53 = arith.constant 0 : index
    %c0_54 = arith.constant 0 : index
    %161 = vector.load %arg14[%c0_53, %c0_54] : memref<4x1xf32, #tpu.memory_space<vmem>>, vector<4x1xf32>
    %162 = vector.extract_strided_slice %119 {offsets = [16, 0], sizes = [16, 4], strides = [1, 1]} : vector<48x4xf32> to vector<16x4xf32>
    %163 = vector.shape_cast %162 : vector<16x4xf32> to vector<1x16x4xf32>
    %164 = vector.broadcast %163 : vector<1x16x4xf32> to vector<4x16x4xf32>
    %165 = arith.mulf %160, %164 : vector<4x16x4xf32>
    %cst_55 = arith.constant dense<0.000000e+00> : vector<4x16xf32>
    %166 = vector.multi_reduction <add>, %165, %cst_55 [2] : vector<4x16x4xf32> to vector<4x16xf32>
    %cst_56 = arith.constant dense<0.000000e+00> : vector<4xf32>
    %167 = vector.multi_reduction <add>, %166, %cst_56 [1] : vector<4x16xf32> to vector<4xf32>
    %168 = vector.shape_cast %167 : vector<4xf32> to vector<4x1xf32>
    %169 = arith.addf %168, %161 : vector<4x1xf32>
    %cst_57 = arith.constant dense<0xFF800000> : vector<1xf32>
    %170 = vector.multi_reduction <maximumf>, %169, %cst_57 [0] : vector<4x1xf32> to vector<1xf32>
    %171 = vector.shape_cast %170 : vector<1xf32> to vector<1x1xf32>
    %172 = vector.broadcast %171 : vector<1x1xf32> to vector<4x1xf32>
    %173 = arith.subf %169, %172 : vector<4x1xf32>
    %174 = math.exp %173 : vector<4x1xf32>
    %cst_58 = arith.constant dense<0.000000e+00> : vector<1xf32>
    %175 = vector.multi_reduction <add>, %174, %cst_58 [0] : vector<4x1xf32> to vector<1xf32>
    %176 = vector.shape_cast %175 : vector<1xf32> to vector<1x1xf32>
    %177 = math.log %176 : vector<1x1xf32>
    %178 = vector.broadcast %177 : vector<1x1xf32> to vector<4x1xf32>
    %179 = arith.subf %173, %178 : vector<4x1xf32>
    %c0_59 = arith.constant 0 : index
    %c0_60 = arith.constant 0 : index
    %c0_61 = arith.constant 0 : index
    %180 = vector.load %arg15[%c0_59, %c0_60, %c0_61] : memref<4x16x4xf32, #tpu.memory_space<vmem>>, vector<4x16x4xf32>
    %c0_62 = arith.constant 0 : index
    %c0_63 = arith.constant 0 : index
    %181 = vector.load %arg16[%c0_62, %c0_63] : memref<4x1xf32, #tpu.memory_space<vmem>>, vector<4x1xf32>
    %182 = vector.extract_strided_slice %119 {offsets = [32, 0], sizes = [16, 4], strides = [1, 1]} : vector<48x4xf32> to vector<16x4xf32>
    %183 = vector.shape_cast %182 : vector<16x4xf32> to vector<1x16x4xf32>
    %184 = vector.broadcast %183 : vector<1x16x4xf32> to vector<4x16x4xf32>
    %185 = arith.mulf %180, %184 : vector<4x16x4xf32>
    %cst_64 = arith.constant dense<0.000000e+00> : vector<4x16xf32>
    %186 = vector.multi_reduction <add>, %185, %cst_64 [2] : vector<4x16x4xf32> to vector<4x16xf32>
    %cst_65 = arith.constant dense<0.000000e+00> : vector<4xf32>
    %187 = vector.multi_reduction <add>, %186, %cst_65 [1] : vector<4x16xf32> to vector<4xf32>
    %188 = vector.shape_cast %187 : vector<4xf32> to vector<4x1xf32>
    %189 = arith.addf %188, %181 : vector<4x1xf32>
    %cst_66 = arith.constant dense<0xFF800000> : vector<1xf32>
    %190 = vector.multi_reduction <maximumf>, %189, %cst_66 [0] : vector<4x1xf32> to vector<1xf32>
    %191 = vector.shape_cast %190 : vector<1xf32> to vector<1x1xf32>
    %192 = vector.broadcast %191 : vector<1x1xf32> to vector<4x1xf32>
    %193 = arith.subf %189, %192 : vector<4x1xf32>
    %194 = math.exp %193 : vector<4x1xf32>
    %cst_67 = arith.constant dense<0.000000e+00> : vector<1xf32>
    %195 = vector.multi_reduction <add>, %194, %cst_67 [0] : vector<4x1xf32> to vector<1xf32>
    %196 = vector.shape_cast %195 : vector<1xf32> to vector<1x1xf32>
    %197 = math.log %196 : vector<1x1xf32>
    %198 = vector.broadcast %197 : vector<1x1xf32> to vector<4x1xf32>
    %199 = arith.subf %193, %198 : vector<4x1xf32>
    %c0_68 = arith.constant 0 : index
    %c0_69 = arith.constant 0 : index
    %c0_70 = arith.constant 0 : index
    %200 = vector.load %arg17[%c0_68, %c0_69, %c0_70] : memref<4x40x2xf32, #tpu.memory_space<vmem>>, vector<4x40x2xf32>
    %c0_71 = arith.constant 0 : index
    %c0_72 = arith.constant 0 : index
    %201 = vector.load %arg18[%c0_71, %c0_72] : memref<4x1xf32, #tpu.memory_space<vmem>>, vector<4x1xf32>
    %202 = vector.extract_strided_slice %139 {offsets = [0, 0], sizes = [40, 2], strides = [1, 1]} : vector<80x2xf32> to vector<40x2xf32>
    %203 = vector.shape_cast %202 : vector<40x2xf32> to vector<1x40x2xf32>
    %204 = vector.broadcast %203 : vector<1x40x2xf32> to vector<4x40x2xf32>
    %205 = arith.mulf %200, %204 : vector<4x40x2xf32>
    %cst_73 = arith.constant dense<0.000000e+00> : vector<4x40xf32>
    %206 = vector.multi_reduction <add>, %205, %cst_73 [2] : vector<4x40x2xf32> to vector<4x40xf32>
    %cst_74 = arith.constant dense<0.000000e+00> : vector<4xf32>
    %207 = vector.multi_reduction <add>, %206, %cst_74 [1] : vector<4x40xf32> to vector<4xf32>
    %208 = vector.shape_cast %207 : vector<4xf32> to vector<4x1xf32>
    %209 = arith.addf %208, %201 : vector<4x1xf32>
    %cst_75 = arith.constant dense<0xFF800000> : vector<1xf32>
    %210 = vector.multi_reduction <maximumf>, %209, %cst_75 [0] : vector<4x1xf32> to vector<1xf32>
    %211 = vector.shape_cast %210 : vector<1xf32> to vector<1x1xf32>
    %212 = vector.broadcast %211 : vector<1x1xf32> to vector<4x1xf32>
    %213 = arith.subf %209, %212 : vector<4x1xf32>
    %214 = math.exp %213 : vector<4x1xf32>
    %cst_76 = arith.constant dense<0.000000e+00> : vector<1xf32>
    %215 = vector.multi_reduction <add>, %214, %cst_76 [0] : vector<4x1xf32> to vector<1xf32>
    %216 = vector.shape_cast %215 : vector<1xf32> to vector<1x1xf32>
    %217 = math.log %216 : vector<1x1xf32>
    %218 = vector.broadcast %217 : vector<1x1xf32> to vector<4x1xf32>
    %219 = arith.subf %213, %218 : vector<4x1xf32>
    %c0_77 = arith.constant 0 : index
    %c0_78 = arith.constant 0 : index
    %c0_79 = arith.constant 0 : index
    %220 = vector.load %arg19[%c0_77, %c0_78, %c0_79] : memref<4x40x2xf32, #tpu.memory_space<vmem>>, vector<4x40x2xf32>
    %c0_80 = arith.constant 0 : index
    %c0_81 = arith.constant 0 : index
    %221 = vector.load %arg20[%c0_80, %c0_81] : memref<4x1xf32, #tpu.memory_space<vmem>>, vector<4x1xf32>
    %222 = vector.extract_strided_slice %139 {offsets = [40, 0], sizes = [40, 2], strides = [1, 1]} : vector<80x2xf32> to vector<40x2xf32>
    %223 = vector.shape_cast %222 : vector<40x2xf32> to vector<1x40x2xf32>
    %224 = vector.broadcast %223 : vector<1x40x2xf32> to vector<4x40x2xf32>
    %225 = arith.mulf %220, %224 : vector<4x40x2xf32>
    %cst_82 = arith.constant dense<0.000000e+00> : vector<4x40xf32>
    %226 = vector.multi_reduction <add>, %225, %cst_82 [2] : vector<4x40x2xf32> to vector<4x40xf32>
    %cst_83 = arith.constant dense<0.000000e+00> : vector<4xf32>
    %227 = vector.multi_reduction <add>, %226, %cst_83 [1] : vector<4x40xf32> to vector<4xf32>
    %228 = vector.shape_cast %227 : vector<4xf32> to vector<4x1xf32>
    %229 = arith.addf %228, %221 : vector<4x1xf32>
    %cst_84 = arith.constant dense<0xFF800000> : vector<1xf32>
    %230 = vector.multi_reduction <maximumf>, %229, %cst_84 [0] : vector<4x1xf32> to vector<1xf32>
    %231 = vector.shape_cast %230 : vector<1xf32> to vector<1x1xf32>
    %232 = vector.broadcast %231 : vector<1x1xf32> to vector<4x1xf32>
    %233 = arith.subf %229, %232 : vector<4x1xf32>
    %234 = math.exp %233 : vector<4x1xf32>
    %cst_85 = arith.constant dense<0.000000e+00> : vector<1xf32>
    %235 = vector.multi_reduction <add>, %234, %cst_85 [0] : vector<4x1xf32> to vector<1xf32>
    %236 = vector.shape_cast %235 : vector<1xf32> to vector<1x1xf32>
    %237 = math.log %236 : vector<1x1xf32>
    %238 = vector.broadcast %237 : vector<1x1xf32> to vector<4x1xf32>
    %239 = arith.subf %233, %238 : vector<4x1xf32>
    %cst_86 = arith.constant dense<0xFF800000> : vector<1xf32>
    %240 = vector.multi_reduction <maximumf>, %159, %cst_86 [0] : vector<4x1xf32> to vector<1xf32>
    %241 = vector.shape_cast %240 : vector<1xf32> to vector<1x1xf32>
    %242 = vector.broadcast %241 : vector<1x1xf32> to vector<4x1xf32>
    %243 = arith.subf %159, %242 : vector<4x1xf32>
    %244 = math.exp %243 : vector<4x1xf32>
    %cst_87 = arith.constant dense<0.000000e+00> : vector<1xf32>
    %245 = vector.multi_reduction <add>, %244, %cst_87 [0] : vector<4x1xf32> to vector<1xf32>
    %246 = vector.shape_cast %245 : vector<1xf32> to vector<1x1xf32>
    %247 = vector.broadcast %246 : vector<1x1xf32> to vector<4x1xf32>
    %248 = arith.divf %244, %247 : vector<4x1xf32>
    %249 = tpu.concatenate %179, %219, %199, %239 in 1 : vector<4x1xf32>, vector<4x1xf32>, vector<4x1xf32>, vector<4x1xf32> -> vector<4x4xf32>
    %cst_88 = arith.constant dense<0.000000e+00> : vector<4x1xf32>
    %250 = tpu.matmul %249, %248, %cst_88 {dimension_numbers = #tpu.dot_dimension_numbers<[1], [0], [0], [1], [0, 0, 1, 1], [], []>} : vector<4x4xf32>, vector<4x1xf32>, vector<4x1xf32> -> vector<4x1xf32>
    %c1 = arith.constant 1 : index
    %c0_89 = arith.constant 0 : index
    %c0_90 = arith.constant 0 : index
    %251 = vector.load %arg0[%c1, %c0_89, %c0_90] : memref<2x256x129xbf16, #tpu.memory_space<vmem>>, vector<1x256x129xbf16>
    %252 = vector.shape_cast %251 : vector<1x256x129xbf16> to vector<256x129xbf16>
    %cst_91 = arith.constant dense<0.000000e+00> : vector<48x129xf32>
    %253 = tpu.matmul %0, %252, %cst_91 {dimension_numbers = #tpu.dot_dimension_numbers<[1], [0], [0], [1], [0, 0, 1, 1], [], []>} : vector<48x256xbf16>, vector<256x129xbf16>, vector<48x129xf32> -> vector<48x129xf32>
    %254 = vector.broadcast %1 : vector<48x1xf32> to vector<48x129xf32>
    %255 = arith.addf %253, %254 : vector<48x129xf32>
    %cst_92 = arith.constant 0.000000e+00 : f32
    %256 = vector.broadcast %cst_92 : f32 to vector<48x129xf32>
    %257 = arith.cmpf ogt, %255, %256 : vector<48x129xf32>
    %cst_93 = arith.constant 0.000000e+00 : f32
    %258 = vector.broadcast %cst_93 : f32 to vector<48x129xf32>
    %259 = arith.minimumf %255, %258 : vector<48x129xf32>
    %260 = math.exp %259 : vector<48x129xf32>
    %cst_94 = arith.constant 1.000000e+00 : f32
    %261 = vector.broadcast %cst_94 : f32 to vector<48x129xf32>
    %262 = arith.subf %260, %261 : vector<48x129xf32>
    %263 = arith.select %257, %255, %262 : vector<48x129xi1>, vector<48x129xf32>
    %cst_95 = arith.constant dense<0.000000e+00> : vector<48x32xf32>
    %264 = tpu.matmul %263, %7, %cst_95 {dimension_numbers = #tpu.dot_dimension_numbers<[1], [0], [0], [1], [0, 0, 1, 1], [], []>} : vector<48x129xf32>, vector<129x32xf32>, vector<48x32xf32> -> vector<48x32xf32>
    %cst_96 = arith.constant 0.000000e+00 : f32
    %265 = vector.broadcast %cst_96 : f32 to vector<48x8xf32>
    %cst_97 = arith.constant 0.000000e+00 : f32
    %266 = vector.broadcast %cst_97 : f32 to vector<48x8xf32>
    %267 = tpu.concatenate %265, %264, %266 in 1 : vector<48x8xf32>, vector<48x32xf32>, vector<48x8xf32> -> vector<48x48xf32>
    %cst_98 = arith.constant 0.000000e+00 : f32
    %268 = vector.broadcast %cst_98 : f32 to vector<48x33xf32>
    %269 = vector.extract_strided_slice %2 {offsets = [0, 0], sizes = [48, 1], strides = [1, 1]} : vector<48x16xf32> to vector<48x1xf32>
    %270 = vector.extract_strided_slice %267 {offsets = [0, 0], sizes = [48, 33], strides = [1, 1]} : vector<48x48xf32> to vector<48x33xf32>
    %271 = vector.broadcast %269 : vector<48x1xf32> to vector<48x33xf32>
    %272 = arith.mulf %271, %270 : vector<48x33xf32>
    %273 = arith.addf %268, %272 : vector<48x33xf32>
    %274 = vector.extract_strided_slice %2 {offsets = [0, 1], sizes = [48, 1], strides = [1, 1]} : vector<48x16xf32> to vector<48x1xf32>
    %275 = vector.extract_strided_slice %267 {offsets = [0, 1], sizes = [48, 33], strides = [1, 1]} : vector<48x48xf32> to vector<48x33xf32>
    %276 = vector.broadcast %274 : vector<48x1xf32> to vector<48x33xf32>
    %277 = arith.mulf %276, %275 : vector<48x33xf32>
    %278 = arith.addf %273, %277 : vector<48x33xf32>
    %279 = vector.extract_strided_slice %2 {offsets = [0, 2], sizes = [48, 1], strides = [1, 1]} : vector<48x16xf32> to vector<48x1xf32>
    %280 = vector.extract_strided_slice %267 {offsets = [0, 2], sizes = [48, 33], strides = [1, 1]} : vector<48x48xf32> to vector<48x33xf32>
    %281 = vector.broadcast %279 : vector<48x1xf32> to vector<48x33xf32>
    %282 = arith.mulf %281, %280 : vector<48x33xf32>
    %283 = arith.addf %278, %282 : vector<48x33xf32>
    %284 = vector.extract_strided_slice %2 {offsets = [0, 3], sizes = [48, 1], strides = [1, 1]} : vector<48x16xf32> to vector<48x1xf32>
    %285 = vector.extract_strided_slice %267 {offsets = [0, 3], sizes = [48, 33], strides = [1, 1]} : vector<48x48xf32> to vector<48x33xf32>
    %286 = vector.broadcast %284 : vector<48x1xf32> to vector<48x33xf32>
    %287 = arith.mulf %286, %285 : vector<48x33xf32>
    %288 = arith.addf %283, %287 : vector<48x33xf32>
    %289 = vector.extract_strided_slice %2 {offsets = [0, 4], sizes = [48, 1], strides = [1, 1]} : vector<48x16xf32> to vector<48x1xf32>
    %290 = vector.extract_strided_slice %267 {offsets = [0, 4], sizes = [48, 33], strides = [1, 1]} : vector<48x48xf32> to vector<48x33xf32>
    %291 = vector.broadcast %289 : vector<48x1xf32> to vector<48x33xf32>
    %292 = arith.mulf %291, %290 : vector<48x33xf32>
    %293 = arith.addf %288, %292 : vector<48x33xf32>
    %294 = vector.extract_strided_slice %2 {offsets = [0, 5], sizes = [48, 1], strides = [1, 1]} : vector<48x16xf32> to vector<48x1xf32>
    %295 = vector.extract_strided_slice %267 {offsets = [0, 5], sizes = [48, 33], strides = [1, 1]} : vector<48x48xf32> to vector<48x33xf32>
    %296 = vector.broadcast %294 : vector<48x1xf32> to vector<48x33xf32>
    %297 = arith.mulf %296, %295 : vector<48x33xf32>
    %298 = arith.addf %293, %297 : vector<48x33xf32>
    %299 = vector.extract_strided_slice %2 {offsets = [0, 6], sizes = [48, 1], strides = [1, 1]} : vector<48x16xf32> to vector<48x1xf32>
    %300 = vector.extract_strided_slice %267 {offsets = [0, 6], sizes = [48, 33], strides = [1, 1]} : vector<48x48xf32> to vector<48x33xf32>
    %301 = vector.broadcast %299 : vector<48x1xf32> to vector<48x33xf32>
    %302 = arith.mulf %301, %300 : vector<48x33xf32>
    %303 = arith.addf %298, %302 : vector<48x33xf32>
    %304 = vector.extract_strided_slice %2 {offsets = [0, 7], sizes = [48, 1], strides = [1, 1]} : vector<48x16xf32> to vector<48x1xf32>
    %305 = vector.extract_strided_slice %267 {offsets = [0, 7], sizes = [48, 33], strides = [1, 1]} : vector<48x48xf32> to vector<48x33xf32>
    %306 = vector.broadcast %304 : vector<48x1xf32> to vector<48x33xf32>
    %307 = arith.mulf %306, %305 : vector<48x33xf32>
    %308 = arith.addf %303, %307 : vector<48x33xf32>
    %309 = vector.extract_strided_slice %2 {offsets = [0, 8], sizes = [48, 1], strides = [1, 1]} : vector<48x16xf32> to vector<48x1xf32>
    %310 = vector.extract_strided_slice %267 {offsets = [0, 8], sizes = [48, 33], strides = [1, 1]} : vector<48x48xf32> to vector<48x33xf32>
    %311 = vector.broadcast %309 : vector<48x1xf32> to vector<48x33xf32>
    %312 = arith.mulf %311, %310 : vector<48x33xf32>
    %313 = arith.addf %308, %312 : vector<48x33xf32>
    %314 = vector.extract_strided_slice %2 {offsets = [0, 9], sizes = [48, 1], strides = [1, 1]} : vector<48x16xf32> to vector<48x1xf32>
    %315 = vector.extract_strided_slice %267 {offsets = [0, 9], sizes = [48, 33], strides = [1, 1]} : vector<48x48xf32> to vector<48x33xf32>
    %316 = vector.broadcast %314 : vector<48x1xf32> to vector<48x33xf32>
    %317 = arith.mulf %316, %315 : vector<48x33xf32>
    %318 = arith.addf %313, %317 : vector<48x33xf32>
    %319 = vector.extract_strided_slice %2 {offsets = [0, 10], sizes = [48, 1], strides = [1, 1]} : vector<48x16xf32> to vector<48x1xf32>
    %320 = vector.extract_strided_slice %267 {offsets = [0, 10], sizes = [48, 33], strides = [1, 1]} : vector<48x48xf32> to vector<48x33xf32>
    %321 = vector.broadcast %319 : vector<48x1xf32> to vector<48x33xf32>
    %322 = arith.mulf %321, %320 : vector<48x33xf32>
    %323 = arith.addf %318, %322 : vector<48x33xf32>
    %324 = vector.extract_strided_slice %2 {offsets = [0, 11], sizes = [48, 1], strides = [1, 1]} : vector<48x16xf32> to vector<48x1xf32>
    %325 = vector.extract_strided_slice %267 {offsets = [0, 11], sizes = [48, 33], strides = [1, 1]} : vector<48x48xf32> to vector<48x33xf32>
    %326 = vector.broadcast %324 : vector<48x1xf32> to vector<48x33xf32>
    %327 = arith.mulf %326, %325 : vector<48x33xf32>
    %328 = arith.addf %323, %327 : vector<48x33xf32>
    %329 = vector.extract_strided_slice %2 {offsets = [0, 12], sizes = [48, 1], strides = [1, 1]} : vector<48x16xf32> to vector<48x1xf32>
    %330 = vector.extract_strided_slice %267 {offsets = [0, 12], sizes = [48, 33], strides = [1, 1]} : vector<48x48xf32> to vector<48x33xf32>
    %331 = vector.broadcast %329 : vector<48x1xf32> to vector<48x33xf32>
    %332 = arith.mulf %331, %330 : vector<48x33xf32>
    %333 = arith.addf %328, %332 : vector<48x33xf32>
    %334 = vector.extract_strided_slice %2 {offsets = [0, 13], sizes = [48, 1], strides = [1, 1]} : vector<48x16xf32> to vector<48x1xf32>
    %335 = vector.extract_strided_slice %267 {offsets = [0, 13], sizes = [48, 33], strides = [1, 1]} : vector<48x48xf32> to vector<48x33xf32>
    %336 = vector.broadcast %334 : vector<48x1xf32> to vector<48x33xf32>
    %337 = arith.mulf %336, %335 : vector<48x33xf32>
    %338 = arith.addf %333, %337 : vector<48x33xf32>
    %339 = vector.extract_strided_slice %2 {offsets = [0, 14], sizes = [48, 1], strides = [1, 1]} : vector<48x16xf32> to vector<48x1xf32>
    %340 = vector.extract_strided_slice %267 {offsets = [0, 14], sizes = [48, 33], strides = [1, 1]} : vector<48x48xf32> to vector<48x33xf32>
    %341 = vector.broadcast %339 : vector<48x1xf32> to vector<48x33xf32>
    %342 = arith.mulf %341, %340 : vector<48x33xf32>
    %343 = arith.addf %338, %342 : vector<48x33xf32>
    %344 = vector.extract_strided_slice %2 {offsets = [0, 15], sizes = [48, 1], strides = [1, 1]} : vector<48x16xf32> to vector<48x1xf32>
    %345 = vector.extract_strided_slice %267 {offsets = [0, 15], sizes = [48, 33], strides = [1, 1]} : vector<48x48xf32> to vector<48x33xf32>
    %346 = vector.broadcast %344 : vector<48x1xf32> to vector<48x33xf32>
    %347 = arith.mulf %346, %345 : vector<48x33xf32>
    %348 = arith.addf %343, %347 : vector<48x33xf32>
    %349 = arith.truncf %348 : vector<48x33xf32> to vector<48x33xbf16>
    %cst_99 = arith.constant dense<0.000000e+00> : vector<48x33xf32>
    %350 = tpu.matmul %3, %349, %cst_99 {dimension_numbers = #tpu.dot_dimension_numbers<[1], [0], [0], [1], [0, 0, 1, 1], [], []>} : vector<48x48xbf16>, vector<48x33xbf16>, vector<48x33xf32> -> vector<48x33xf32>
    %351 = vector.broadcast %4 : vector<48x1xf32> to vector<48x33xf32>
    %352 = arith.addf %350, %351 : vector<48x33xf32>
    %cst_100 = arith.constant 0.000000e+00 : f32
    %353 = vector.broadcast %cst_100 : f32 to vector<48x33xf32>
    %354 = arith.cmpf ogt, %352, %353 : vector<48x33xf32>
    %cst_101 = arith.constant 0.000000e+00 : f32
    %355 = vector.broadcast %cst_101 : f32 to vector<48x33xf32>
    %356 = arith.minimumf %352, %355 : vector<48x33xf32>
    %357 = math.exp %356 : vector<48x33xf32>
    %cst_102 = arith.constant 1.000000e+00 : f32
    %358 = vector.broadcast %cst_102 : f32 to vector<48x33xf32>
    %359 = arith.subf %357, %358 : vector<48x33xf32>
    %360 = arith.select %354, %352, %359 : vector<48x33xi1>, vector<48x33xf32>
    %cst_103 = arith.constant dense<0.000000e+00> : vector<48x4xf32>
    %361 = tpu.matmul %360, %8, %cst_103 {dimension_numbers = #tpu.dot_dimension_numbers<[1], [0], [0], [1], [0, 0, 1, 1], [], []>} : vector<48x33xf32>, vector<33x4xf32>, vector<48x4xf32> -> vector<48x4xf32>
    %c1_104 = arith.constant 1 : index
    %c0_105 = arith.constant 0 : index
    %c0_106 = arith.constant 0 : index
    %362 = vector.load %arg1[%c1_104, %c0_105, %c0_106] : memref<2x100x104xbf16, #tpu.memory_space<vmem>>, vector<1x100x104xbf16>
    %363 = vector.shape_cast %362 : vector<1x100x104xbf16> to vector<100x104xbf16>
    %cst_107 = arith.constant dense<0.000000e+00> : vector<80x104xf32>
    %364 = tpu.matmul %5, %363, %cst_107 {dimension_numbers = #tpu.dot_dimension_numbers<[1], [0], [0], [1], [0, 0, 1, 1], [], []>} : vector<80x100xbf16>, vector<100x104xbf16>, vector<80x104xf32> -> vector<80x104xf32>
    %365 = vector.broadcast %6 : vector<80x1xf32> to vector<80x104xf32>
    %366 = arith.addf %364, %365 : vector<80x104xf32>
    %367 = arith.mulf %366, %366 : vector<80x104xf32>
    %368 = vector.extract_strided_slice %367 {offsets = [0, 0], sizes = [80, 75], strides = [1, 1]} : vector<80x104xf32> to vector<80x75xf32>
    %cst_108 = arith.constant dense<0.000000e+00> : vector<80xf32>
    %369 = vector.multi_reduction <add>, %368, %cst_108 [1] : vector<80x75xf32> to vector<80xf32>
    %370 = vector.shape_cast %369 : vector<80xf32> to vector<80x1xf32>
    %cst_109 = arith.constant 7.500000e+01 : f32
    %371 = vector.broadcast %cst_109 : f32 to vector<80x1xf32>
    %372 = arith.divf %370, %371 : vector<80x1xf32>
    %373 = vector.extract_strided_slice %367 {offsets = [0, 15], sizes = [80, 75], strides = [1, 1]} : vector<80x104xf32> to vector<80x75xf32>
    %cst_110 = arith.constant dense<0.000000e+00> : vector<80xf32>
    %374 = vector.multi_reduction <add>, %373, %cst_110 [1] : vector<80x75xf32> to vector<80xf32>
    %375 = vector.shape_cast %374 : vector<80xf32> to vector<80x1xf32>
    %cst_111 = arith.constant 7.500000e+01 : f32
    %376 = vector.broadcast %cst_111 : f32 to vector<80x1xf32>
    %377 = arith.divf %375, %376 : vector<80x1xf32>
    %378 = tpu.concatenate %372, %377 in 1 : vector<80x1xf32>, vector<80x1xf32> -> vector<80x2xf32>
    %cst_112 = arith.constant 9.99999997E-7 : f32
    %379 = vector.broadcast %cst_112 : f32 to vector<80x2xf32>
    %380 = arith.maximumf %378, %379 : vector<80x2xf32>
    %381 = math.log %380 : vector<80x2xf32>
    %c0_113 = arith.constant 0 : index
    %c0_114 = arith.constant 0 : index
    %c0_115 = arith.constant 0 : index
    %382 = vector.load %arg11[%c0_113, %c0_114, %c0_115] : memref<4x16x4xf32, #tpu.memory_space<vmem>>, vector<4x16x4xf32>
    %c0_116 = arith.constant 0 : index
    %c0_117 = arith.constant 0 : index
    %383 = vector.load %arg12[%c0_116, %c0_117] : memref<4x1xf32, #tpu.memory_space<vmem>>, vector<4x1xf32>
    %384 = vector.extract_strided_slice %361 {offsets = [0, 0], sizes = [16, 4], strides = [1, 1]} : vector<48x4xf32> to vector<16x4xf32>
    %385 = vector.shape_cast %384 : vector<16x4xf32> to vector<1x16x4xf32>
    %386 = vector.broadcast %385 : vector<1x16x4xf32> to vector<4x16x4xf32>
    %387 = arith.mulf %382, %386 : vector<4x16x4xf32>
    %cst_118 = arith.constant dense<0.000000e+00> : vector<4x16xf32>
    %388 = vector.multi_reduction <add>, %387, %cst_118 [2] : vector<4x16x4xf32> to vector<4x16xf32>
    %cst_119 = arith.constant dense<0.000000e+00> : vector<4xf32>
    %389 = vector.multi_reduction <add>, %388, %cst_119 [1] : vector<4x16xf32> to vector<4xf32>
    %390 = vector.shape_cast %389 : vector<4xf32> to vector<4x1xf32>
    %391 = arith.addf %390, %383 : vector<4x1xf32>
    %cst_120 = arith.constant dense<0xFF800000> : vector<1xf32>
    %392 = vector.multi_reduction <maximumf>, %391, %cst_120 [0] : vector<4x1xf32> to vector<1xf32>
    %393 = vector.shape_cast %392 : vector<1xf32> to vector<1x1xf32>
    %394 = vector.broadcast %393 : vector<1x1xf32> to vector<4x1xf32>
    %395 = arith.subf %391, %394 : vector<4x1xf32>
    %396 = math.exp %395 : vector<4x1xf32>
    %cst_121 = arith.constant dense<0.000000e+00> : vector<1xf32>
    %397 = vector.multi_reduction <add>, %396, %cst_121 [0] : vector<4x1xf32> to vector<1xf32>
    %398 = vector.shape_cast %397 : vector<1xf32> to vector<1x1xf32>
    %399 = math.log %398 : vector<1x1xf32>
    %400 = vector.broadcast %399 : vector<1x1xf32> to vector<4x1xf32>
    %401 = arith.subf %395, %400 : vector<4x1xf32>
    %c0_122 = arith.constant 0 : index
    %c0_123 = arith.constant 0 : index
    %c0_124 = arith.constant 0 : index
    %402 = vector.load %arg13[%c0_122, %c0_123, %c0_124] : memref<4x16x4xf32, #tpu.memory_space<vmem>>, vector<4x16x4xf32>
    %c0_125 = arith.constant 0 : index
    %c0_126 = arith.constant 0 : index
    %403 = vector.load %arg14[%c0_125, %c0_126] : memref<4x1xf32, #tpu.memory_space<vmem>>, vector<4x1xf32>
    %404 = vector.extract_strided_slice %361 {offsets = [16, 0], sizes = [16, 4], strides = [1, 1]} : vector<48x4xf32> to vector<16x4xf32>
    %405 = vector.shape_cast %404 : vector<16x4xf32> to vector<1x16x4xf32>
    %406 = vector.broadcast %405 : vector<1x16x4xf32> to vector<4x16x4xf32>
    %407 = arith.mulf %402, %406 : vector<4x16x4xf32>
    %cst_127 = arith.constant dense<0.000000e+00> : vector<4x16xf32>
    %408 = vector.multi_reduction <add>, %407, %cst_127 [2] : vector<4x16x4xf32> to vector<4x16xf32>
    %cst_128 = arith.constant dense<0.000000e+00> : vector<4xf32>
    %409 = vector.multi_reduction <add>, %408, %cst_128 [1] : vector<4x16xf32> to vector<4xf32>
    %410 = vector.shape_cast %409 : vector<4xf32> to vector<4x1xf32>
    %411 = arith.addf %410, %403 : vector<4x1xf32>
    %cst_129 = arith.constant dense<0xFF800000> : vector<1xf32>
    %412 = vector.multi_reduction <maximumf>, %411, %cst_129 [0] : vector<4x1xf32> to vector<1xf32>
    %413 = vector.shape_cast %412 : vector<1xf32> to vector<1x1xf32>
    %414 = vector.broadcast %413 : vector<1x1xf32> to vector<4x1xf32>
    %415 = arith.subf %411, %414 : vector<4x1xf32>
    %416 = math.exp %415 : vector<4x1xf32>
    %cst_130 = arith.constant dense<0.000000e+00> : vector<1xf32>
    %417 = vector.multi_reduction <add>, %416, %cst_130 [0] : vector<4x1xf32> to vector<1xf32>
    %418 = vector.shape_cast %417 : vector<1xf32> to vector<1x1xf32>
    %419 = math.log %418 : vector<1x1xf32>
    %420 = vector.broadcast %419 : vector<1x1xf32> to vector<4x1xf32>
    %421 = arith.subf %415, %420 : vector<4x1xf32>
    %c0_131 = arith.constant 0 : index
    %c0_132 = arith.constant 0 : index
    %c0_133 = arith.constant 0 : index
    %422 = vector.load %arg15[%c0_131, %c0_132, %c0_133] : memref<4x16x4xf32, #tpu.memory_space<vmem>>, vector<4x16x4xf32>
    %c0_134 = arith.constant 0 : index
    %c0_135 = arith.constant 0 : index
    %423 = vector.load %arg16[%c0_134, %c0_135] : memref<4x1xf32, #tpu.memory_space<vmem>>, vector<4x1xf32>
    %424 = vector.extract_strided_slice %361 {offsets = [32, 0], sizes = [16, 4], strides = [1, 1]} : vector<48x4xf32> to vector<16x4xf32>
    %425 = vector.shape_cast %424 : vector<16x4xf32> to vector<1x16x4xf32>
    %426 = vector.broadcast %425 : vector<1x16x4xf32> to vector<4x16x4xf32>
    %427 = arith.mulf %422, %426 : vector<4x16x4xf32>
    %cst_136 = arith.constant dense<0.000000e+00> : vector<4x16xf32>
    %428 = vector.multi_reduction <add>, %427, %cst_136 [2] : vector<4x16x4xf32> to vector<4x16xf32>
    %cst_137 = arith.constant dense<0.000000e+00> : vector<4xf32>
    %429 = vector.multi_reduction <add>, %428, %cst_137 [1] : vector<4x16xf32> to vector<4xf32>
    %430 = vector.shape_cast %429 : vector<4xf32> to vector<4x1xf32>
    %431 = arith.addf %430, %423 : vector<4x1xf32>
    %cst_138 = arith.constant dense<0xFF800000> : vector<1xf32>
    %432 = vector.multi_reduction <maximumf>, %431, %cst_138 [0] : vector<4x1xf32> to vector<1xf32>
    %433 = vector.shape_cast %432 : vector<1xf32> to vector<1x1xf32>
    %434 = vector.broadcast %433 : vector<1x1xf32> to vector<4x1xf32>
    %435 = arith.subf %431, %434 : vector<4x1xf32>
    %436 = math.exp %435 : vector<4x1xf32>
    %cst_139 = arith.constant dense<0.000000e+00> : vector<1xf32>
    %437 = vector.multi_reduction <add>, %436, %cst_139 [0] : vector<4x1xf32> to vector<1xf32>
    %438 = vector.shape_cast %437 : vector<1xf32> to vector<1x1xf32>
    %439 = math.log %438 : vector<1x1xf32>
    %440 = vector.broadcast %439 : vector<1x1xf32> to vector<4x1xf32>
    %441 = arith.subf %435, %440 : vector<4x1xf32>
    %c0_140 = arith.constant 0 : index
    %c0_141 = arith.constant 0 : index
    %c0_142 = arith.constant 0 : index
    %442 = vector.load %arg17[%c0_140, %c0_141, %c0_142] : memref<4x40x2xf32, #tpu.memory_space<vmem>>, vector<4x40x2xf32>
    %c0_143 = arith.constant 0 : index
    %c0_144 = arith.constant 0 : index
    %443 = vector.load %arg18[%c0_143, %c0_144] : memref<4x1xf32, #tpu.memory_space<vmem>>, vector<4x1xf32>
    %444 = vector.extract_strided_slice %381 {offsets = [0, 0], sizes = [40, 2], strides = [1, 1]} : vector<80x2xf32> to vector<40x2xf32>
    %445 = vector.shape_cast %444 : vector<40x2xf32> to vector<1x40x2xf32>
    %446 = vector.broadcast %445 : vector<1x40x2xf32> to vector<4x40x2xf32>
    %447 = arith.mulf %442, %446 : vector<4x40x2xf32>
    %cst_145 = arith.constant dense<0.000000e+00> : vector<4x40xf32>
    %448 = vector.multi_reduction <add>, %447, %cst_145 [2] : vector<4x40x2xf32> to vector<4x40xf32>
    %cst_146 = arith.constant dense<0.000000e+00> : vector<4xf32>
    %449 = vector.multi_reduction <add>, %448, %cst_146 [1] : vector<4x40xf32> to vector<4xf32>
    %450 = vector.shape_cast %449 : vector<4xf32> to vector<4x1xf32>
    %451 = arith.addf %450, %443 : vector<4x1xf32>
    %cst_147 = arith.constant dense<0xFF800000> : vector<1xf32>
    %452 = vector.multi_reduction <maximumf>, %451, %cst_147 [0] : vector<4x1xf32> to vector<1xf32>
    %453 = vector.shape_cast %452 : vector<1xf32> to vector<1x1xf32>
    %454 = vector.broadcast %453 : vector<1x1xf32> to vector<4x1xf32>
    %455 = arith.subf %451, %454 : vector<4x1xf32>
    %456 = math.exp %455 : vector<4x1xf32>
    %cst_148 = arith.constant dense<0.000000e+00> : vector<1xf32>
    %457 = vector.multi_reduction <add>, %456, %cst_148 [0] : vector<4x1xf32> to vector<1xf32>
    %458 = vector.shape_cast %457 : vector<1xf32> to vector<1x1xf32>
    %459 = math.log %458 : vector<1x1xf32>
    %460 = vector.broadcast %459 : vector<1x1xf32> to vector<4x1xf32>
    %461 = arith.subf %455, %460 : vector<4x1xf32>
    %c0_149 = arith.constant 0 : index
    %c0_150 = arith.constant 0 : index
    %c0_151 = arith.constant 0 : index
    %462 = vector.load %arg19[%c0_149, %c0_150, %c0_151] : memref<4x40x2xf32, #tpu.memory_space<vmem>>, vector<4x40x2xf32>
    %c0_152 = arith.constant 0 : index
    %c0_153 = arith.constant 0 : index
    %463 = vector.load %arg20[%c0_152, %c0_153] : memref<4x1xf32, #tpu.memory_space<vmem>>, vector<4x1xf32>
    %464 = vector.extract_strided_slice %381 {offsets = [40, 0], sizes = [40, 2], strides = [1, 1]} : vector<80x2xf32> to vector<40x2xf32>
    %465 = vector.shape_cast %464 : vector<40x2xf32> to vector<1x40x2xf32>
    %466 = vector.broadcast %465 : vector<1x40x2xf32> to vector<4x40x2xf32>
    %467 = arith.mulf %462, %466 : vector<4x40x2xf32>
    %cst_154 = arith.constant dense<0.000000e+00> : vector<4x40xf32>
    %468 = vector.multi_reduction <add>, %467, %cst_154 [2] : vector<4x40x2xf32> to vector<4x40xf32>
    %cst_155 = arith.constant dense<0.000000e+00> : vector<4xf32>
    %469 = vector.multi_reduction <add>, %468, %cst_155 [1] : vector<4x40xf32> to vector<4xf32>
    %470 = vector.shape_cast %469 : vector<4xf32> to vector<4x1xf32>
    %471 = arith.addf %470, %463 : vector<4x1xf32>
    %cst_156 = arith.constant dense<0xFF800000> : vector<1xf32>
    %472 = vector.multi_reduction <maximumf>, %471, %cst_156 [0] : vector<4x1xf32> to vector<1xf32>
    %473 = vector.shape_cast %472 : vector<1xf32> to vector<1x1xf32>
    %474 = vector.broadcast %473 : vector<1x1xf32> to vector<4x1xf32>
    %475 = arith.subf %471, %474 : vector<4x1xf32>
    %476 = math.exp %475 : vector<4x1xf32>
    %cst_157 = arith.constant dense<0.000000e+00> : vector<1xf32>
    %477 = vector.multi_reduction <add>, %476, %cst_157 [0] : vector<4x1xf32> to vector<1xf32>
    %478 = vector.shape_cast %477 : vector<1xf32> to vector<1x1xf32>
    %479 = math.log %478 : vector<1x1xf32>
    %480 = vector.broadcast %479 : vector<1x1xf32> to vector<4x1xf32>
    %481 = arith.subf %475, %480 : vector<4x1xf32>
    %cst_158 = arith.constant dense<0xFF800000> : vector<1xf32>
    %482 = vector.multi_reduction <maximumf>, %401, %cst_158 [0] : vector<4x1xf32> to vector<1xf32>
    %483 = vector.shape_cast %482 : vector<1xf32> to vector<1x1xf32>
    %484 = vector.broadcast %483 : vector<1x1xf32> to vector<4x1xf32>
    %485 = arith.subf %401, %484 : vector<4x1xf32>
    %486 = math.exp %485 : vector<4x1xf32>
    %cst_159 = arith.constant dense<0.000000e+00> : vector<1xf32>
    %487 = vector.multi_reduction <add>, %486, %cst_159 [0] : vector<4x1xf32> to vector<1xf32>
    %488 = vector.shape_cast %487 : vector<1xf32> to vector<1x1xf32>
    %489 = vector.broadcast %488 : vector<1x1xf32> to vector<4x1xf32>
    %490 = arith.divf %486, %489 : vector<4x1xf32>
    %491 = tpu.concatenate %421, %461, %441, %481 in 1 : vector<4x1xf32>, vector<4x1xf32>, vector<4x1xf32>, vector<4x1xf32> -> vector<4x4xf32>
    %cst_160 = arith.constant dense<0.000000e+00> : vector<4x1xf32>
    %492 = tpu.matmul %491, %490, %cst_160 {dimension_numbers = #tpu.dot_dimension_numbers<[1], [0], [0], [1], [0, 0, 1, 1], [], []>} : vector<4x4xf32>, vector<4x1xf32>, vector<4x1xf32> -> vector<4x1xf32>
    %493 = tpu.concatenate %250, %492 in 1 : vector<4x1xf32>, vector<4x1xf32> -> vector<4x2xf32>
    %c0_161 = arith.constant 0 : index
    %c0_162 = arith.constant 0 : index
    %494 = vector.load %arg21[%c0_161, %c0_162] : memref<4x2xf32, #tpu.memory_space<vmem>>, vector<4x2xf32>
    tpu.vector_store %arg21[%c0_161, %c0_162], %493 {strides = array<i32>} : memref<4x2xf32, #tpu.memory_space<vmem>>, vector<4x2xf32>,
    %495 = tpu.concatenate %248, %490 in 1 : vector<4x1xf32>, vector<4x1xf32> -> vector<4x2xf32>
    %c0_163 = arith.constant 0 : index
    %c0_164 = arith.constant 0 : index
    %496 = vector.load %arg22[%c0_163, %c0_164] : memref<4x2xf32, #tpu.memory_space<vmem>>, vector<4x2xf32>
    tpu.vector_store %arg22[%c0_163, %c0_164], %495 {strides = array<i32>} : memref<4x2xf32, #tpu.memory_space<vmem>>, vector<4x2xf32>,
    %497 = vector.shape_cast %249 : vector<4x4xf32> to vector<1x4x4xf32>
    %498 = vector.shape_cast %491 : vector<4x4xf32> to vector<1x4x4xf32>
    %499 = tpu.concatenate %497, %498 in 0 : vector<1x4x4xf32>, vector<1x4x4xf32> -> vector<2x4x4xf32>
    %c0_165 = arith.constant 0 : index
    %c0_166 = arith.constant 0 : index
    %c0_167 = arith.constant 0 : index
    %500 = vector.load %arg23[%c0_165, %c0_166, %c0_167] : memref<2x4x4xf32, #tpu.memory_space<vmem>>, vector<2x4x4xf32>
    tpu.vector_store %arg23[%c0_165, %c0_166, %c0_167], %499 {strides = array<i32>} : memref<2x4x4xf32, #tpu.memory_space<vmem>>, vector<2x4x4xf32>,
    return
  }
}

</mosaic_0001>

<llo_original>
// kernel: model_forward.1
$region0: #{model_forward.1}
  #allocation0 [shape = 'u32[]', space=smem, size = 0x4, offset = 0x4, fixed_abs, tag = 'smem constant byte address 0x4 - core index']
  #allocation1 [shape = 'u32[144,128]{1,0:T(1,128)}', space=vmem, size = 0x12000, scoped, tag = 'internal scratch']
  %s0 = inlined_call_operand.vmem [shape: bf16[2,256,129], index: 0, kind: input, shape index: {}]
  %s1 = inlined_call_operand.vmem [shape: bf16[2,100,104], index: 1, kind: input, shape index: {}]
  %s2 = inlined_call_operand.vmem [shape: bf16[48,256], index: 2, kind: input, shape index: {}]
  %s3 = inlined_call_operand.vmem [shape: f32[48,1], index: 3, kind: input, shape index: {}]
  %s4 = inlined_call_operand.vmem [shape: f32[48,16], index: 4, kind: input, shape index: {}]
  %s5 = inlined_call_operand.vmem [shape: bf16[48,48], index: 5, kind: input, shape index: {}]
  %s6 = inlined_call_operand.vmem [shape: f32[48,1], index: 6, kind: input, shape index: {}]
  %s7 = inlined_call_operand.vmem [shape: bf16[80,100], index: 7, kind: input, shape index: {}]
  %s8 = inlined_call_operand.vmem [shape: f32[80,1], index: 8, kind: input, shape index: {}]
  %s9 = inlined_call_operand.vmem [shape: f32[129,32], index: 9, kind: input, shape index: {}]
  %s10 = inlined_call_operand.vmem [shape: f32[33,4], index: 10, kind: input, shape index: {}]
  %s11 = inlined_call_operand.vmem [shape: f32[4,16,4], index: 11, kind: input, shape index: {}]
  %s12 = inlined_call_operand.vmem [shape: f32[4,1], index: 12, kind: input, shape index: {}]
  %s13 = inlined_call_operand.vmem [shape: f32[4,16,4], index: 13, kind: input, shape index: {}]
  %s14 = inlined_call_operand.vmem [shape: f32[4,1], index: 14, kind: input, shape index: {}]
  %s15 = inlined_call_operand.vmem [shape: f32[4,16,4], index: 15, kind: input, shape index: {}]
  %s16 = inlined_call_operand.vmem [shape: f32[4,1], index: 16, kind: input, shape index: {}]
  %s17 = inlined_call_operand.vmem [shape: f32[4,40,2], index: 17, kind: input, shape index: {}]
  %s18 = inlined_call_operand.vmem [shape: f32[4,1], index: 18, kind: input, shape index: {}]
  %s19 = inlined_call_operand.vmem [shape: f32[4,40,2], index: 19, kind: input, shape index: {}]
  %s20 = inlined_call_operand.vmem [shape: f32[4,1], index: 20, kind: input, shape index: {}]
  %s21 = inlined_call_operand.vmem [shape: f32[4,2], index: 21, kind: output, shape index: {0}]
  %s22 = inlined_call_operand.vmem [shape: f32[4,2], index: 22, kind: output, shape index: {1}]
  %s23 = inlined_call_operand.vmem [shape: f32[2,4,4], index: 23, kind: output, shape index: {2}]
  %24 = xla_tuple %s21, %s22, %s23
  %s25 = sld [smem:[#allocation0]]
  $region110: #{model_forward.1} parent=0
    _
  %s27 = ssub.s32 1, %s25
  %s28 = scalar_select 0, %s27, %s25
  // Predicated region
  $region2: #{model_forward.1} parent=0 // pred_check
    _
  $region3: #{model_forward.1} parent=0 // pred_check_branch
    %30 = sbr.rel (0) target = $region5
  $region4: #{model_forward.1} parent=0 // pred_region
    _
  $region5: #{model_forward.1} parent=0 // pred_fallthru
    _
  // Predicated region
  $region6: #{model_forward.1} parent=0 // pred_check
    _
  $region7: #{model_forward.1} parent=0 // pred_check_branch
    %32 = sbr.rel (0) target = $region9
  $region8: #{model_forward.1} parent=0 // pred_region
    _
  $region9: #{model_forward.1} parent=0 // pred_fallthru
    _
  // Predicated region
  $region10: #{model_forward.1} parent=0 // pred_check
    _
  $region11: #{model_forward.1} parent=0 // pred_check_branch
    %34 = sbr.rel (0) target = $region13
  $region12: #{model_forward.1} parent=0 // pred_region
    _
  $region13: #{model_forward.1} parent=0 // pred_fallthru
    _
  // Predicated region
  $region14: #{model_forward.1} parent=0 // pred_check
    _
  $region15: #{model_forward.1} parent=0 // pred_check_branch
    %36 = sbr.rel (0) target = $region17
  $region16: #{model_forward.1} parent=0 // pred_region
    _
  $region17: #{model_forward.1} parent=0 // pred_fallthru
    _
  // Predicated region
  $region18: #{model_forward.1} parent=0 // pred_check
    _
  $region19: #{model_forward.1} parent=0 // pred_check_branch
    %38 = sbr.rel (0) target = $region21
  $region20: #{model_forward.1} parent=0 // pred_region
    _
  $region21: #{model_forward.1} parent=0 // pred_fallthru
    _
  // Predicated region
  $region22: #{model_forward.1} parent=0 // pred_check
    _
  $region23: #{model_forward.1} parent=0 // pred_check_branch
    %40 = sbr.rel (0) target = $region25
  $region24: #{model_forward.1} parent=0 // pred_region
    _
  $region25: #{model_forward.1} parent=0 // pred_fallthru
    _
  // Predicated region
  $region26: #{model_forward.1} parent=0 // pred_check
    _
  $region27: #{model_forward.1} parent=0 // pred_check_branch
    %42 = sbr.rel (0) target = $region29
  $region28: #{model_forward.1} parent=0 // pred_region
    _
  $region29: #{model_forward.1} parent=0 // pred_fallthru
    _
  // Predicated region
  $region30: #{model_forward.1} parent=0 // pred_check
    _
  $region31: #{model_forward.1} parent=0 // pred_check_branch
    %44 = sbr.rel (0) target = $region33
  $region32: #{model_forward.1} parent=0 // pred_region
    _
  $region33: #{model_forward.1} parent=0 // pred_fallthru
    _
  // Predicated region
  $region34: #{model_forward.1} parent=0 // pred_check
    _
  $region35: #{model_forward.1} parent=0 // pred_check_branch
    %46 = sbr.rel (0) target = $region37
  $region36: #{model_forward.1} parent=0 // pred_region
    _
  $region37: #{model_forward.1} parent=0 // pred_fallthru
    _
  // Predicated region
  $region38: #{model_forward.1} parent=0 // pred_check
    _
  $region39: #{model_forward.1} parent=0 // pred_check_branch
    %48 = sbr.rel (0) target = $region41
  $region40: #{model_forward.1} parent=0 // pred_region
    _
  $region41: #{model_forward.1} parent=0 // pred_fallthru
    _
  // Predicated region
  $region42: #{model_forward.1} parent=0 // pred_check
    _
  $region43: #{model_forward.1} parent=0 // pred_check_branch
    %50 = sbr.rel (0) target = $region45
  $region44: #{model_forward.1} parent=0 // pred_region
    _
  $region45: #{model_forward.1} parent=0 // pred_fallthru
    _
  // Predicated region
  $region46: #{model_forward.1} parent=0 // pred_check
    _
  $region47: #{model_forward.1} parent=0 // pred_check_branch
    %52 = sbr.rel (0) target = $region49
  $region48: #{model_forward.1} parent=0 // pred_region
    _
  $region49: #{model_forward.1} parent=0 // pred_fallthru
    _
  // Predicated region
  $region50: #{model_forward.1} parent=0 // pred_check
    _
  $region51: #{model_forward.1} parent=0 // pred_check_branch
    %54 = sbr.rel (0) target = $region53
  $region52: #{model_forward.1} parent=0 // pred_region
    _
  $region53: #{model_forward.1} parent=0 // pred_fallthru
    _
  // Predicated region
  $region54: #{model_forward.1} parent=0 // pred_check
    _
  $region55: #{model_forward.1} parent=0 // pred_check_branch
    %56 = sbr.rel (0) target = $region57
  $region56: #{model_forward.1} parent=0 // pred_region
    _
  $region57: #{model_forward.1} parent=0 // pred_fallthru
    _
  // Predicated region
  $region58: #{model_forward.1} parent=0 // pred_check
    _
  $region59: #{model_forward.1} parent=0 // pred_check_branch
    %58 = sbr.rel (0) target = $region61
  $region60: #{model_forward.1} parent=0 // pred_region
    _
  $region61: #{model_forward.1} parent=0 // pred_fallthru
    _
  // Predicated region
  $region62: #{model_forward.1} parent=0 // pred_check
    _
  $region63: #{model_forward.1} parent=0 // pred_check_branch
    %60 = sbr.rel (0) target = $region65
  $region64: #{model_forward.1} parent=0 // pred_region
    _
  $region65: #{model_forward.1} parent=0 // pred_fallthru
    _
  // Predicated region
  $region66: #{model_forward.1} parent=0 // pred_check
    _
  $region67: #{model_forward.1} parent=0 // pred_check_branch
    %62 = sbr.rel (0) target = $region69
  $region68: #{model_forward.1} parent=0 // pred_region
    _
  $region69: #{model_forward.1} parent=0 // pred_fallthru
    _
  // Predicated region
  $region70: #{model_forward.1} parent=0 // pred_check
    _
  $region71: #{model_forward.1} parent=0 // pred_check_branch
    %64 = sbr.rel (0) target = $region73
  $region72: #{model_forward.1} parent=0 // pred_region
    _
  $region73: #{model_forward.1} parent=0 // pred_fallthru
    _
  // Predicated region
  $region74: #{model_forward.1} parent=0 // pred_check
    _
  $region75: #{model_forward.1} parent=0 // pred_check_branch
    %66 = sbr.rel (0) target = $region77
  $region76: #{model_forward.1} parent=0 // pred_region
    _
  $region77: #{model_forward.1} parent=0 // pred_fallthru
    _
  // Predicated region
  $region78: #{model_forward.1} parent=0 // pred_check
    _
  $region79: #{model_forward.1} parent=0 // pred_check_branch
    %68 = sbr.rel (0) target = $region81
  $region80: #{model_forward.1} parent=0 // pred_region
    _
  $region81: #{model_forward.1} parent=0 // pred_fallthru
    _
  // Predicated region
  $region82: #{model_forward.1} parent=0 // pred_check
    _
  $region83: #{model_forward.1} parent=0 // pred_check_branch
    %70 = sbr.rel (0) target = $region85
  $region84: #{model_forward.1} parent=0 // pred_region
    _
  $region85: #{model_forward.1} parent=0 // pred_fallthru
    _
  %v72 = vld [vmem:[%s2] sm:$0xff]
  %v73 = vld [vmem:[%s2 + $0x8] sm:$0xff]
  %v74 = vld [vmem:[%s2 + $0x10] sm:$0xff]
  %v75 = vld [vmem:[%s2 + $0x18] sm:$0xff]
  %v76 = vld [vmem:[%s2 + $0x20] sm:$0xff]
  %v77 = vld [vmem:[%s2 + $0x28] sm:$0xff]
  %v78 = vld [vmem:[%s3] sm:$0xff]
  %v79 = vld [vmem:[%s3 + $0x8] sm:$0xff]
  %v80 = vld [vmem:[%s3 + $0x10] sm:$0xff]
  %v81 = vld [vmem:[%s3 + $0x18] sm:$0xff]
  %v82 = vld [vmem:[%s3 + $0x20] sm:$0xff]
  %v83 = vld [vmem:[%s3 + $0x28] sm:$0xff]
  %v84 = vld [vmem:[%s4] sm:$0xff]
  %v85 = vld [vmem:[%s4 + $0x8] sm:$0xff]
  %v86 = vld [vmem:[%s4 + $0x10] sm:$0xff]
  %v87 = vld [vmem:[%s4 + $0x18] sm:$0xff]
  %v88 = vld [vmem:[%s4 + $0x20] sm:$0xff]
  %v89 = vld [vmem:[%s4 + $0x28] sm:$0xff]
  %v90 = vld [vmem:[%s5] sm:$0xf]
  %v91 = vld [vmem:[%s5 + $0x4] sm:$0xf]
  %v92 = vld [vmem:[%s5 + $0x8] sm:$0xf]
  %v93 = vld [vmem:[%s5 + $0xc] sm:$0xf]
  %v94 = vld [vmem:[%s5 + $0x10] sm:$0xf]
  %v95 = vld [vmem:[%s5 + $0x14] sm:$0xf]
  %v96 = vld [vmem:[%s6] sm:$0xff]
  %v97 = vld [vmem:[%s6 + $0x8] sm:$0xff]
  %v98 = vld [vmem:[%s6 + $0x10] sm:$0xff]
  %v99 = vld [vmem:[%s6 + $0x18] sm:$0xff]
  %v100 = vld [vmem:[%s6 + $0x20] sm:$0xff]
  %v101 = vld [vmem:[%s6 + $0x28] sm:$0xff]
  %v102 = vld [vmem:[%s7] sm:$0xf]
  %v103 = vld [vmem:[%s7 + $0x4] sm:$0xf]
  %v104 = vld [vmem:[%s7 + $0x8] sm:$0xf]
  %v105 = vld [vmem:[%s7 + $0xc] sm:$0xf]
  %v106 = vld [vmem:[%s7 + $0x10] sm:$0xf]
  %v107 = vld [vmem:[%s7 + $0x14] sm:$0xf]
  %v108 = vld [vmem:[%s7 + $0x18] sm:$0xf]
  %v109 = vld [vmem:[%s7 + $0x1c] sm:$0xf]
  %v110 = vld [vmem:[%s7 + $0x20] sm:$0xf]
  %v111 = vld [vmem:[%s7 + $0x24] sm:$0xf]
  %v112 = vld [vmem:[%s8] sm:$0xff]
  %v113 = vld [vmem:[%s8 + $0x8] sm:$0xff]
  %v114 = vld [vmem:[%s8 + $0x10] sm:$0xff]
  %v115 = vld [vmem:[%s8 + $0x18] sm:$0xff]
  %v116 = vld [vmem:[%s8 + $0x20] sm:$0xff]
  %v117 = vld [vmem:[%s8 + $0x28] sm:$0xff]
  %v118 = vld [vmem:[%s8 + $0x30] sm:$0xff]
  %v119 = vld [vmem:[%s8 + $0x38] sm:$0xff]
  %v120 = vld [vmem:[%s8 + $0x40] sm:$0xff]
  %v121 = vld [vmem:[%s8 + $0x48] sm:$0xff]
  %v122 = vld [vmem:[%s9] sm:$0xff]
  %v123 = vld [vmem:[%s9 + $0x8] sm:$0xff]
  %v124 = vld [vmem:[%s9 + $0x10] sm:$0xff]
  %v125 = vld [vmem:[%s9 + $0x18] sm:$0xff]
  %v126 = vld [vmem:[%s9 + $0x20] sm:$0xff]
  %v127 = vld [vmem:[%s9 + $0x28] sm:$0xff]
  %v128 = vld [vmem:[%s9 + $0x30] sm:$0xff]
  %v129 = vld [vmem:[%s9 + $0x38] sm:$0xff]
  %v130 = vld [vmem:[%s9 + $0x40] sm:$0xff]
  %v131 = vld [vmem:[%s9 + $0x48] sm:$0xff]
  %v132 = vld [vmem:[%s9 + $0x50] sm:$0xff]
  %v133 = vld [vmem:[%s9 + $0x58] sm:$0xff]
  %v134 = vld [vmem:[%s9 + $0x60] sm:$0xff]
  %v135 = vld [vmem:[%s9 + $0x68] sm:$0xff]
  %v136 = vld [vmem:[%s9 + $0x70] sm:$0xff]
  %v137 = vld [vmem:[%s9 + $0x78] sm:$0xff]
  %v138 = vld [vmem:[%s9 + $0x80] sm:$0x1]
  %v139 = vld [vmem:[%s10] sm:$0xff]
  %v140 = vld [vmem:[%s10 + $0x8] sm:$0xff]
  %v141 = vld [vmem:[%s10 + $0x10] sm:$0xff]
  %v142 = vld [vmem:[%s10 + $0x18] sm:$0xff]
  %v143 = vld [vmem:[%s10 + $0x20] sm:$0x1]
  %v144 = vld [vmem:[%s0] sm:$0xff]
  %v145 = vld [vmem:[%s0 + $0x8] sm:$0xff]
  %v146 = vld [vmem:[%s0 + $0x10] sm:$0xff]
  %v147 = vld [vmem:[%s0 + $0x18] sm:$0xff]
  %v148 = vld [vmem:[%s0 + $0x20] sm:$0xff]
  %v149 = vld [vmem:[%s0 + $0x28] sm:$0xff]
  %v150 = vld [vmem:[%s0 + $0x30] sm:$0xff]
  %v151 = vld [vmem:[%s0 + $0x38] sm:$0xff]
  %v152 = vld [vmem:[%s0 + $0x40] sm:$0xff]
  %v153 = vld [vmem:[%s0 + $0x48] sm:$0xff]
  %v154 = vld [vmem:[%s0 + $0x50] sm:$0xff]
  %v155 = vld [vmem:[%s0 + $0x58] sm:$0xff]
  %v156 = vld [vmem:[%s0 + $0x60] sm:$0xff]
  %v157 = vld [vmem:[%s0 + $0x68] sm:$0xff]
  %v158 = vld [vmem:[%s0 + $0x70] sm:$0xff]
  %v159 = vld [vmem:[%s0 + $0x78] sm:$0xff]
  %v160 = vld [vmem:[%s0 + $0x80] sm:$0xff]
  %v161 = vld [vmem:[%s0 + $0x88] sm:$0xff]
  %v162 = vld [vmem:[%s0 + $0x90] sm:$0xff]
  %v163 = vld [vmem:[%s0 + $0x98] sm:$0xff]
  %v164 = vld [vmem:[%s0 + $0xa0] sm:$0xff]
  %v165 = vld [vmem:[%s0 + $0xa8] sm:$0xff]
  %v166 = vld [vmem:[%s0 + $0xb0] sm:$0xff]
  %v167 = vld [vmem:[%s0 + $0xb8] sm:$0xff]
  %v168 = vld [vmem:[%s0 + $0xc0] sm:$0xff]
  %v169 = vld [vmem:[%s0 + $0xc8] sm:$0xff]
  %v170 = vld [vmem:[%s0 + $0xd0] sm:$0xff]
  %v171 = vld [vmem:[%s0 + $0xd8] sm:$0xff]
  %v172 = vld [vmem:[%s0 + $0xe0] sm:$0xff]
  %v173 = vld [vmem:[%s0 + $0xe8] sm:$0xff]
  %v174 = vld [vmem:[%s0 + $0xf0] sm:$0xff]
  %v175 = vld [vmem:[%s0 + $0xf8] sm:$0xff]
  %177 = vset.pattern.permute.xlu0 0
  %178 = vperm.xlu0 %177, %v78
  %v179 = vpop.permute.xlu0 %178
  %182 = vset.pattern.permute.xlu0 0
  %183 = vperm.xlu0 %182, %v79
  %v184 = vpop.permute.xlu0 %183
  %187 = vset.pattern.permute.xlu0 0
  %188 = vperm.xlu0 %187, %v80
  %v189 = vpop.permute.xlu0 %188
  %192 = vset.pattern.permute.xlu0 0
  %193 = vperm.xlu0 %192, %v81
  %v194 = vpop.permute.xlu0 %193
  %197 = vset.pattern.permute.xlu0 0
  %198 = vperm.xlu0 %197, %v82
  %v199 = vpop.permute.xlu0 %198
  %202 = vset.pattern.permute.xlu0 0
  %203 = vperm.xlu0 %202, %v83
  %v204 = vpop.permute.xlu0 %203
  %v212 = vunpack.c.l.b16 %v72
  %v213 = vunpack.c.h.b16 %v72
  %v214 = vunpack.c.l.b16 %v73
  %v215 = vunpack.c.h.b16 %v73
  %v216 = vunpack.c.l.b16 %v74
  %v217 = vunpack.c.h.b16 %v74
  %v218 = vunpack.c.l.b16 %v75
  %v219 = vunpack.c.h.b16 %v75
  %v220 = vunpack.c.l.b16 %v76
  %v221 = vunpack.c.h.b16 %v76
  %v222 = vunpack.c.l.b16 %v77
  %v223 = vunpack.c.h.b16 %v77
  %v224 = vpack.c.b16 %v214, %v212
  %v225 = vpack.c.b16 %v215, %v213
  %v226 = vpack.c.b16 %v218, %v216
  %v227 = vpack.c.b16 %v219, %v217
  %v228 = vpack.c.b16 %v222, %v220
  %v229 = vpack.c.b16 %v223, %v221
  %v268 = vunpack.c.l.b16 %v144
  %v269 = vunpack.c.h.b16 %v144
  %v270 = vunpack.c.l.b16 %v145
  %v271 = vunpack.c.h.b16 %v145
  %v272 = vunpack.c.l.b16 %v146
  %v273 = vunpack.c.h.b16 %v146
  %v274 = vunpack.c.l.b16 %v147
  %v275 = vunpack.c.h.b16 %v147
  %v276 = vunpack.c.l.b16 %v148
  %v277 = vunpack.c.h.b16 %v148
  %v278 = vunpack.c.l.b16 %v149
  %v279 = vunpack.c.h.b16 %v149
  %v280 = vunpack.c.l.b16 %v150
  %v281 = vunpack.c.h.b16 %v150
  %v282 = vunpack.c.l.b16 %v151
  %v283 = vunpack.c.h.b16 %v151
  %v284 = vunpack.c.l.b16 %v152
  %v285 = vunpack.c.h.b16 %v152
  %v286 = vunpack.c.l.b16 %v153
  %v287 = vunpack.c.h.b16 %v153
  %v288 = vunpack.c.l.b16 %v154
  %v289 = vunpack.c.h.b16 %v154
  %v290 = vunpack.c.l.b16 %v155
  %v291 = vunpack.c.h.b16 %v155
  %v292 = vunpack.c.l.b16 %v156
  %v293 = vunpack.c.h.b16 %v156
  %v294 = vunpack.c.l.b16 %v157
  %v295 = vunpack.c.h.b16 %v157
  %v296 = vunpack.c.l.b16 %v158
  %v297 = vunpack.c.h.b16 %v158
  %v298 = vunpack.c.l.b16 %v159
  %v299 = vunpack.c.h.b16 %v159
  %v300 = vunpack.c.l.b16 %v160
  %v301 = vunpack.c.h.b16 %v160
  %v302 = vunpack.c.l.b16 %v161
  %v303 = vunpack.c.h.b16 %v161
  %v304 = vunpack.c.l.b16 %v162
  %v305 = vunpack.c.h.b16 %v162
  %v306 = vunpack.c.l.b16 %v163
  %v307 = vunpack.c.h.b16 %v163
  %v308 = vunpack.c.l.b16 %v164
  %v309 = vunpack.c.h.b16 %v164
  %v310 = vunpack.c.l.b16 %v165
  %v311 = vunpack.c.h.b16 %v165
  %v312 = vunpack.c.l.b16 %v166
  %v313 = vunpack.c.h.b16 %v166
  %v314 = vunpack.c.l.b16 %v167
  %v315 = vunpack.c.h.b16 %v167
  %v316 = vunpack.c.l.b16 %v168
  %v317 = vunpack.c.h.b16 %v168
  %v318 = vunpack.c.l.b16 %v169
  %v319 = vunpack.c.h.b16 %v169
  %v320 = vunpack.c.l.b16 %v170
  %v321 = vunpack.c.h.b16 %v170
  %v322 = vunpack.c.l.b16 %v171
  %v323 = vunpack.c.h.b16 %v171
  %v324 = vunpack.c.l.b16 %v172
  %v325 = vunpack.c.h.b16 %v172
  %v326 = vunpack.c.l.b16 %v173
  %v327 = vunpack.c.h.b16 %v173
  %v328 = vunpack.c.l.b16 %v174
  %v329 = vunpack.c.h.b16 %v174
  %v330 = vunpack.c.l.b16 %v175
  %v331 = vunpack.c.h.b16 %v175
  %v332 = vpack.c.b16 %v270, %v268
  %v333 = vpack.c.b16 %v271, %v269
  %v334 = vpack.c.b16 %v274, %v272
  %v335 = vpack.c.b16 %v275, %v273
  %v336 = vpack.c.b16 %v278, %v276
  %v337 = vpack.c.b16 %v279, %v277
  %v338 = vpack.c.b16 %v282, %v280
  %v339 = vpack.c.b16 %v283, %v281
  %v340 = vpack.c.b16 %v286, %v284
  %v341 = vpack.c.b16 %v287, %v285
  %v342 = vpack.c.b16 %v290, %v288
  %v343 = vpack.c.b16 %v291, %v289
  %v344 = vpack.c.b16 %v294, %v292
  %v345 = vpack.c.b16 %v295, %v293
  %v346 = vpack.c.b16 %v298, %v296
  %v347 = vpack.c.b16 %v299, %v297
  %v348 = vpack.c.b16 %v302, %v300
  %v349 = vpack.c.b16 %v303, %v301
  %v350 = vpack.c.b16 %v306, %v304
  %v351 = vpack.c.b16 %v307, %v305
  %v352 = vpack.c.b16 %v310, %v308
  %v353 = vpack.c.b16 %v311, %v309
  %v354 = vpack.c.b16 %v314, %v312
  %v355 = vpack.c.b16 %v315, %v313
  %v356 = vpack.c.b16 %v318, %v316
  %v357 = vpack.c.b16 %v319, %v317
  %v358 = vpack.c.b16 %v322, %v320
  %v359 = vpack.c.b16 %v323, %v321
  %v360 = vpack.c.b16 %v326, %v324
  %v361 = vpack.c.b16 %v327, %v325
  %v362 = vpack.c.b16 %v330, %v328
  %v363 = vpack.c.b16 %v331, %v329
  %396 = vmatprep.subr.bf16.mxu0 %v333
  %397 = vmatpush1.bf16.msra.mxu0 %v332
  %398 = vmatprep.subr.bf16.mxu0 %v335
  %399 = vmatpush1.bf16.msra.mxu0 %v334
  %400 = vmatprep.subr.bf16.mxu0 %v337
  %401 = vmatpush1.bf16.msra.mxu0 %v336
  %402 = vmatprep.subr.bf16.mxu0 %v339
  %403 = vmatpush1.bf16.msra.mxu0 %v338
  %404 = vmatprep.subr.bf16.mxu0 %v341
  %405 = vmatpush1.bf16.msra.mxu0 %v340
  %406 = vmatprep.subr.bf16.mxu0 %v343
  %407 = vmatpush1.bf16.msra.mxu0 %v342
  %408 = vmatprep.subr.bf16.mxu0 %v345
  %409 = vmatpush1.bf16.msra.mxu0 %v344
  %410 = vmatprep.subr.bf16.mxu0 %v347
  %411 = vmatpush1.bf16.msra.mxu0 %v346
  %412 = vmatprep.subr.bf16.mxu0 %v349
  %413 = vmatpush1.bf16.msra.mxu0 %v348
  %414 = vmatprep.subr.bf16.mxu0 %v351
  %415 = vmatpush1.bf16.msra.mxu0 %v350
  %416 = vmatprep.subr.bf16.mxu0 %v353
  %417 = vmatpush1.bf16.msra.mxu0 %v352
  %418 = vmatprep.subr.bf16.mxu0 %v355
  %419 = vmatpush1.bf16.msra.mxu0 %v354
  %420 = vmatprep.subr.bf16.mxu0 %v357
  %421 = vmatpush1.bf16.msra.mxu0 %v356
  %422 = vmatprep.subr.bf16.mxu0 %v359
  %423 = vmatpush1.bf16.msra.mxu0 %v358
  %424 = vmatprep.subr.bf16.mxu0 %v361
  %425 = vmatpush1.bf16.msra.mxu0 %v360
  %426 = vmatprep.subr.bf16.mxu0 %v363
  %427 = vmatpush1.bf16.msra.mxu0 %v362
  %428 = vmatprep.mubr.bf16.mxu0 %v225
  %429 = vmatmul.mubr.bf16.gmra.mrb[0].mxu0 %v224
  %v430 = vpop.f32.mrb[0].mxu0
  %v431 = vadd.f32 %v179, %v430
  %v432 = vpop.f32.mrb[0].mxu0
  %v433 = vadd.f32 %v179, %v432
  %v434 = vpop.f32.mrb[0].mxu0
  %v435 = vadd.f32 %v184, %v434
  %v436 = vpop.f32.mrb[0].mxu0
  %v437 = vadd.f32 %v184, %v436
  %438 = vmatprep.mubr.bf16.mxu0 %v227
  %439 = vmatmul.mubr.bf16.gmra.mrb[0].mxu0 %v226
  %v440 = vpop.f32.mrb[0].mxu0
  %v441 = vadd.f32 %v189, %v440
  %v442 = vpop.f32.mrb[0].mxu0
  %v443 = vadd.f32 %v189, %v442
  %v444 = vpop.f32.mrb[0].mxu0
  %v445 = vadd.f32 %v194, %v444
  %v446 = vpop.f32.mrb[0].mxu0
  %v447 = vadd.f32 %v194, %v446
  %448 = vmatprep.mubr.bf16.mxu0 %v229
  %449 = vmatmul.mubr.bf16.gmra.mrb[0].mxu0 %v228
  %v450 = vpop.f32.mrb[0].mxu0
  %v451 = vadd.f32 %v199, %v450
  %v452 = vpop.f32.mrb[0].mxu0
  %v453 = vadd.f32 %v199, %v452
  %v454 = vpop.f32.mrb[0].mxu0
  %v455 = vadd.f32 %v204, %v454
  %v456 = vpop.f32.mrb[0].mxu0
  %v457 = vadd.f32 %v204, %v456
  %458 = vdwg.mxu0
  %vm459 = vcmp.gt.f32.partialorder %v431, 0.0
  %vm460 = vcmp.gt.f32.partialorder %v433, 0.0
  %vm461 = vcmp.gt.f32.partialorder %v435, 0.0
  %vm462 = vcmp.gt.f32.partialorder %v437, 0.0
  %vm463 = vcmp.gt.f32.partialorder %v441, 0.0
  %vm464 = vcmp.gt.f32.partialorder %v443, 0.0
  %vm465 = vcmp.gt.f32.partialorder %v445, 0.0
  %vm466 = vcmp.gt.f32.partialorder %v447, 0.0
  %vm467 = vcmp.gt.f32.partialorder %v451, 0.0
  %vm468 = vcmp.gt.f32.partialorder %v453, 0.0
  %vm469 = vcmp.gt.f32.partialorder %v455, 0.0
  %vm470 = vcmp.gt.f32.partialorder %v457, 0.0
  %v471 = vmin.f32 %v431, 0.0
  %v472 = vmin.f32 %v433, 0.0
  %v473 = vmin.f32 %v435, 0.0
  %v474 = vmin.f32 %v437, 0.0
  %v475 = vmin.f32 %v441, 0.0
  %v476 = vmin.f32 %v443, 0.0
  %v477 = vmin.f32 %v445, 0.0
  %v478 = vmin.f32 %v447, 0.0
  %v479 = vmin.f32 %v451, 0.0
  %v480 = vmin.f32 %v453, 0.0
  %v481 = vmin.f32 %v455, 0.0
  %v482 = vmin.f32 %v457, 0.0
  %v483 = vmul.f32 %v471, 1.442695
  %v484 = vpow.pop %v483
  %v485 = vmul.f32 %v472, 1.442695
  %v486 = vpow.pop %v485
  %v487 = vmul.f32 %v473, 1.442695
  %v488 = vpow.pop %v487
  %v489 = vmul.f32 %v474, 1.442695
  %v490 = vpow.pop %v489
  %v491 = vmul.f32 %v475, 1.442695
  %v492 = vpow.pop %v491
  %v493 = vmul.f32 %v476, 1.442695
  %v494 = vpow.pop %v493
  %v495 = vmul.f32 %v477, 1.442695
  %v496 = vpow.pop %v495
  %v497 = vmul.f32 %v478, 1.442695
  %v498 = vpow.pop %v497
  %v499 = vmul.f32 %v479, 1.442695
  %v500 = vpow.pop %v499
  %v501 = vmul.f32 %v480, 1.442695
  %v502 = vpow.pop %v501
  %v503 = vmul.f32 %v481, 1.442695
  %v504 = vpow.pop %v503
  %v505 = vmul.f32 %v482, 1.442695
  %v506 = vpow.pop %v505
  %v507 = vsub.f32 %v484, 1.0
  %v508 = vsub.f32 %v486, 1.0
  %v509 = vsub.f32 %v488, 1.0
  %v510 = vsub.f32 %v490, 1.0
  %v511 = vsub.f32 %v492, 1.0
  %v512 = vsub.f32 %v494, 1.0
  %v513 = vsub.f32 %v496, 1.0
  %v514 = vsub.f32 %v498, 1.0
  %v515 = vsub.f32 %v500, 1.0
  %v516 = vsub.f32 %v502, 1.0
  %v517 = vsub.f32 %v504, 1.0
  %v518 = vsub.f32 %v506, 1.0
  %v519 = vsel %vm459, %v431, %v507
  %v520 = vsel %vm460, %v433, %v508
  %v521 = vsel %vm461, %v435, %v509
  %v522 = vsel %vm462, %v437, %v510
  %v523 = vsel %vm463, %v441, %v511
  %v524 = vsel %vm464, %v443, %v512
  %v525 = vsel %vm465, %v445, %v513
  %v526 = vsel %vm466, %v447, %v514
  %v527 = vsel %vm467, %v451, %v515
  %v528 = vsel %vm468, %v453, %v516
  %v529 = vsel %vm469, %v455, %v517
  %v530 = vsel %vm470, %v457, %v518
  %vm531 = vcmask 7168
  %v533 = vsel %vm531, %v520, 0
  %v536 = vsel %vm531, %v522, 0
  %v539 = vsel %vm531, %v524, 0
  %v542 = vsel %vm531, %v526, 0
  %v545 = vsel %vm531, %v528, 0
  %v548 = vsel %vm531, %v530, 0
  %vm550 = vcmask 1040384
  %v552 = vsel %vm550, %v138, 0
  %554 = vmatprep.subr.mxu0 0.0
  %555 = vmatpush1.msra.mxu0 %v122
  %556 = vmatprep.subr.mxu0 0.0
  %557 = vmatpush1.msra.mxu0 %v123
  %558 = vmatprep.subr.mxu0 0.0
  %559 = vmatpush1.msra.mxu0 %v124
  %560 = vmatprep.subr.mxu0 0.0
  %561 = vmatpush1.msra.mxu0 %v125
  %562 = vmatprep.subr.mxu0 0.0
  %563 = vmatpush1.msra.mxu0 %v126
  %564 = vmatprep.subr.mxu0 0.0
  %565 = vmatpush1.msra.mxu0 %v127
  %566 = vmatprep.subr.mxu0 0.0
  %567 = vmatpush1.msra.mxu0 %v128
  %568 = vmatprep.subr.mxu0 0.0
  %569 = vmatpush1.msra.mxu0 %v129
  %570 = vmatprep.subr.mxu0 0.0
  %571 = vmatpush1.msra.mxu0 %v130
  %572 = vmatprep.subr.mxu0 0.0
  %573 = vmatpush1.msra.mxu0 %v131
  %574 = vmatprep.subr.mxu0 0.0
  %575 = vmatpush1.msra.mxu0 %v132
  %576 = vmatprep.subr.mxu0 0.0
  %577 = vmatpush1.msra.mxu0 %v133
  %578 = vmatprep.subr.mxu0 0.0
  %579 = vmatpush1.msra.mxu0 %v134
  %580 = vmatprep.subr.mxu0 0.0
  %581 = vmatpush1.msra.mxu0 %v135
  %582 = vmatprep.subr.mxu0 0.0
  %583 = vmatpush1.msra.mxu0 %v136
  %584 = vmatprep.subr.mxu0 0.0
  %585 = vmatpush1.msra.mxu0 %v137
  %586 = vmatprep.subr.mxu0 0.0
  %587 = vmatpush1.msra.mxu0 %v552
  %588 = vmatprep.subr.mxu0 0.0
  %589 = vmatpush1.msra.mxu0 0.0
  %590 = vmatprep.subr.mxu0 0.0
  %591 = vmatpush1.msra.mxu0 0.0
  %592 = vmatprep.subr.mxu0 0.0
  %593 = vmatpush1.msra.mxu0 0.0
  %594 = vmatprep.subr.mxu0 0.0
  %595 = vmatpush1.msra.mxu0 0.0
  %596 = vmatprep.subr.mxu0 0.0
  %597 = vmatpush1.msra.mxu0 0.0
  %598 = vmatprep.subr.mxu0 0.0
  %599 = vmatpush1.msra.mxu0 0.0
  %600 = vmatprep.subr.mxu0 0.0
  %601 = vmatpush1.msra.mxu0 0.0
  %602 = vmatprep.subr.mxu0 0.0
  %603 = vmatpush1.msra.mxu0 0.0
  %604 = vmatprep.subr.mxu0 0.0
  %605 = vmatpush1.msra.mxu0 0.0
  %606 = vmatprep.subr.mxu0 0.0
  %607 = vmatpush1.msra.mxu0 0.0
  %608 = vmatprep.subr.mxu0 0.0
  %609 = vmatpush1.msra.mxu0 0.0
  %610 = vmatprep.subr.mxu0 0.0
  %611 = vmatpush1.msra.mxu0 0.0
  %612 = vmatprep.subr.mxu0 0.0
  %613 = vmatpush1.msra.mxu0 0.0
  %614 = vmatprep.subr.mxu0 0.0
  %615 = vmatpush1.msra.mxu0 0.0
  %616 = vmatprep.subr.mxu0 0.0
  %617 = vmatpush1.msra.mxu0 0.0
  %618 = vmatprep.mubr.f32.mxu0 %v533
  %619 = vmatmul.mubr.f32.gmra.mrb[0].mxu0 %v519
  %v620 = vpop.f32.mrb[0].mxu0
  %v621 = vadd.f32 0.0, %v620
  %v622 = vpop.f32.mrb[0].mxu0
  %623 = vmatprep.mubr.f32.mxu0 %v536
  %624 = vmatmul.mubr.f32.gmra.mrb[0].mxu0 %v521
  %v625 = vpop.f32.mrb[0].mxu0
  %v626 = vadd.f32 0.0, %v625
  %v627 = vpop.f32.mrb[0].mxu0
  %628 = vmatprep.mubr.f32.mxu0 %v539
  %629 = vmatmul.mubr.f32.gmra.mrb[0].mxu0 %v523
  %v630 = vpop.f32.mrb[0].mxu0
  %v631 = vadd.f32 0.0, %v630
  %v632 = vpop.f32.mrb[0].mxu0
  %633 = vmatprep.mubr.f32.mxu0 %v542
  %634 = vmatmul.mubr.f32.gmra.mrb[0].mxu0 %v525
  %v635 = vpop.f32.mrb[0].mxu0
  %v636 = vadd.f32 0.0, %v635
  %v637 = vpop.f32.mrb[0].mxu0
  %638 = vmatprep.mubr.f32.mxu0 %v545
  %639 = vmatmul.mubr.f32.gmra.mrb[0].mxu0 %v527
  %v640 = vpop.f32.mrb[0].mxu0
  %v641 = vadd.f32 0.0, %v640
  %v642 = vpop.f32.mrb[0].mxu0
  %643 = vmatprep.mubr.f32.mxu0 %v548
  %644 = vmatmul.mubr.f32.gmra.mrb[0].mxu0 %v529
  %v645 = vpop.f32.mrb[0].mxu0
  %v646 = vadd.f32 0.0, %v645
  %v647 = vpop.f32.mrb[0].mxu0
  %648 = vdwg.mxu0
  %655 = vrot.lane.b32.xlu0 %v621, 8
  %v656 = vpop.permute.xlu0 %655
  %657 = vrot.lane.b32.xlu0 %v626, 8
  %v658 = vpop.permute.xlu0 %657
  %659 = vrot.lane.b32.xlu0 %v631, 8
  %v660 = vpop.permute.xlu0 %659
  %661 = vrot.lane.b32.xlu0 %v636, 8
  %v662 = vpop.permute.xlu0 %661
  %663 = vrot.lane.b32.xlu0 %v641, 8
  %v664 = vpop.permute.xlu0 %663
  %665 = vrot.lane.b32.xlu0 %v646, 8
  %v666 = vpop.permute.xlu0 %665
  %vm673 = vcmask 64512
  %v674 = vsel %vm673, 0.0, %v656
  %v675 = vsel %vm673, 0.0, %v658
  %v676 = vsel %vm673, 0.0, %v660
  %v677 = vsel %vm673, 0.0, %v662
  %v678 = vsel %vm673, 0.0, %v664
  %v679 = vsel %vm673, 0.0, %v666
  %vm680 = vcmask 326656
  %v681 = vsel %vm680, %v674, 0.0
  %v682 = vsel %vm680, %v675, 0.0
  %v683 = vsel %vm680, %v676, 0.0
  %v684 = vsel %vm680, %v677, 0.0
  %v685 = vsel %vm680, %v678, 0.0
  %v686 = vsel %vm680, %v679, 0.0
  %688 = vset.pattern.permute.xlu0 0
  %689 = vperm.xlu0 %688, %v84
  %v690 = vpop.permute.xlu0 %689
  %693 = vset.pattern.permute.xlu0 0
  %694 = vperm.xlu0 %693, %v85
  %v695 = vpop.permute.xlu0 %694
  %698 = vset.pattern.permute.xlu0 0
  %699 = vperm.xlu0 %698, %v86
  %v700 = vpop.permute.xlu0 %699
  %703 = vset.pattern.permute.xlu0 0
  %704 = vperm.xlu0 %703, %v87
  %v705 = vpop.permute.xlu0 %704
  %708 = vset.pattern.permute.xlu0 0
  %709 = vperm.xlu0 %708, %v88
  %v710 = vpop.permute.xlu0 %709
  %713 = vset.pattern.permute.xlu0 0
  %714 = vperm.xlu0 %713, %v89
  %v715 = vpop.permute.xlu0 %714
  %v717 = vmul.f32 %v690, %v681
  %v718 = vmul.f32 %v695, %v682
  %v719 = vmul.f32 %v700, %v683
  %v720 = vmul.f32 %v705, %v684
  %v721 = vmul.f32 %v710, %v685
  %v722 = vmul.f32 %v715, %v686
  %v723 = vadd.f32 %v717, 0.0
  %v724 = vadd.f32 %v718, 0.0
  %v725 = vadd.f32 %v719, 0.0
  %v726 = vadd.f32 %v720, 0.0
  %v727 = vadd.f32 %v721, 0.0
  %v728 = vadd.f32 %v722, 0.0
  %729 = vset.pattern.permute.xlu0 1
  %730 = vperm.xlu0 %729, %v84
  %v731 = vpop.permute.xlu0 %730
  %733 = vset.pattern.permute.xlu0 1
  %734 = vperm.xlu0 %733, %v85
  %v735 = vpop.permute.xlu0 %734
  %737 = vset.pattern.permute.xlu0 1
  %738 = vperm.xlu0 %737, %v86
  %v739 = vpop.permute.xlu0 %738
  %741 = vset.pattern.permute.xlu0 1
  %742 = vperm.xlu0 %741, %v87
  %v743 = vpop.permute.xlu0 %742
  %745 = vset.pattern.permute.xlu0 1
  %746 = vperm.xlu0 %745, %v88
  %v747 = vpop.permute.xlu0 %746
  %749 = vset.pattern.permute.xlu0 1
  %750 = vperm.xlu0 %749, %v89
  %v751 = vpop.permute.xlu0 %750
  %v753 = vmul.f32 %v731, %v681
  %v754 = vmul.f32 %v735, %v682
  %v755 = vmul.f32 %v739, %v683
  %v756 = vmul.f32 %v743, %v684
  %v757 = vmul.f32 %v747, %v685
  %v758 = vmul.f32 %v751, %v686
  %765 = vrot.lane.b32.xlu0 %v753, 127
  %v766 = vpop.permute.xlu0 %765
  %767 = vrot.lane.b32.xlu0 %v754, 127
  %v768 = vpop.permute.xlu0 %767
  %769 = vrot.lane.b32.xlu0 %v755, 127
  %v770 = vpop.permute.xlu0 %769
  %771 = vrot.lane.b32.xlu0 %v756, 127
  %v772 = vpop.permute.xlu0 %771
  %773 = vrot.lane.b32.xlu0 %v757, 127
  %v774 = vpop.permute.xlu0 %773
  %775 = vrot.lane.b32.xlu0 %v758, 127
  %v776 = vpop.permute.xlu0 %775
  %v783 = vadd.f32 %v723, %v766
  %v784 = vadd.f32 %v724, %v768
  %v785 = vadd.f32 %v725, %v770
  %v786 = vadd.f32 %v726, %v772
  %v787 = vadd.f32 %v727, %v774
  %v788 = vadd.f32 %v728, %v776
  %789 = vset.pattern.permute.xlu0 2
  %790 = vperm.xlu0 %789, %v84
  %v791 = vpop.permute.xlu0 %790
  %793 = vset.pattern.permute.xlu0 2
  %794 = vperm.xlu0 %793, %v85
  %v795 = vpop.permute.xlu0 %794
  %797 = vset.pattern.permute.xlu0 2
  %798 = vperm.xlu0 %797, %v86
  %v799 = vpop.permute.xlu0 %798
  %801 = vset.pattern.permute.xlu0 2
  %802 = vperm.xlu0 %801, %v87
  %v803 = vpop.permute.xlu0 %802
  %805 = vset.pattern.permute.xlu0 2
  %806 = vperm.xlu0 %805, %v88
  %v807 = vpop.permute.xlu0 %806
  %809 = vset.pattern.permute.xlu0 2
  %810 = vperm.xlu0 %809, %v89
  %v811 = vpop.permute.xlu0 %810
  %v813 = vmul.f32 %v791, %v681
  %v814 = vmul.f32 %v795, %v682
  %v815 = vmul.f32 %v799, %v683
  %v816 = vmul.f32 %v803, %v684
  %v817 = vmul.f32 %v807, %v685
  %v818 = vmul.f32 %v811, %v686
  %825 = vrot.lane.b32.xlu0 %v813, 126
  %v826 = vpop.permute.xlu0 %825
  %827 = vrot.lane.b32.xlu0 %v814, 126
  %v828 = vpop.permute.xlu0 %827
  %829 = vrot.lane.b32.xlu0 %v815, 126
  %v830 = vpop.permute.xlu0 %829
  %831 = vrot.lane.b32.xlu0 %v816, 126
  %v832 = vpop.permute.xlu0 %831
  %833 = vrot.lane.b32.xlu0 %v817, 126
  %v834 = vpop.permute.xlu0 %833
  %835 = vrot.lane.b32.xlu0 %v818, 126
  %v836 = vpop.permute.xlu0 %835
  %v843 = vadd.f32 %v783, %v826
  %v844 = vadd.f32 %v784, %v828
  %v845 = vadd.f32 %v785, %v830
  %v846 = vadd.f32 %v786, %v832
  %v847 = vadd.f32 %v787, %v834
  %v848 = vadd.f32 %v788, %v836
  %849 = vset.pattern.permute.xlu0 3
  %850 = vperm.xlu0 %849, %v84
  %v851 = vpop.permute.xlu0 %850
  %853 = vset.pattern.permute.xlu0 3
  %854 = vperm.xlu0 %853, %v85
  %v855 = vpop.permute.xlu0 %854
  %857 = vset.pattern.permute.xlu0 3
  %858 = vperm.xlu0 %857, %v86
  %v859 = vpop.permute.xlu0 %858
  %861 = vset.pattern.permute.xlu0 3
  %862 = vperm.xlu0 %861, %v87
  %v863 = vpop.permute.xlu0 %862
  %865 = vset.pattern.permute.xlu0 3
  %866 = vperm.xlu0 %865, %v88
  %v867 = vpop.permute.xlu0 %866
  %869 = vset.pattern.permute.xlu0 3
  %870 = vperm.xlu0 %869, %v89
  %v871 = vpop.permute.xlu0 %870
  %v873 = vmul.f32 %v851, %v681
  %v874 = vmul.f32 %v855, %v682
  %v875 = vmul.f32 %v859, %v683
  %v876 = vmul.f32 %v863, %v684
  %v877 = vmul.f32 %v867, %v685
  %v878 = vmul.f32 %v871, %v686
  %885 = vrot.lane.b32.xlu0 %v873, 125
  %v886 = vpop.permute.xlu0 %885
  %887 = vrot.lane.b32.xlu0 %v874, 125
  %v888 = vpop.permute.xlu0 %887
  %889 = vrot.lane.b32.xlu0 %v875, 125
  %v890 = vpop.permute.xlu0 %889
  %891 = vrot.lane.b32.xlu0 %v876, 125
  %v892 = vpop.permute.xlu0 %891
  %893 = vrot.lane.b32.xlu0 %v877, 125
  %v894 = vpop.permute.xlu0 %893
  %895 = vrot.lane.b32.xlu0 %v878, 125
  %v896 = vpop.permute.xlu0 %895
  %v903 = vadd.f32 %v843, %v886
  %v904 = vadd.f32 %v844, %v888
  %v905 = vadd.f32 %v845, %v890
  %v906 = vadd.f32 %v846, %v892
  %v907 = vadd.f32 %v847, %v894
  %v908 = vadd.f32 %v848, %v896
  %909 = vset.pattern.permute.xlu0 4
  %910 = vperm.xlu0 %909, %v84
  %v911 = vpop.permute.xlu0 %910
  %913 = vset.pattern.permute.xlu0 4
  %914 = vperm.xlu0 %913, %v85
  %v915 = vpop.permute.xlu0 %914
  %917 = vset.pattern.permute.xlu0 4
  %918 = vperm.xlu0 %917, %v86
  %v919 = vpop.permute.xlu0 %918
  %921 = vset.pattern.permute.xlu0 4
  %922 = vperm.xlu0 %921, %v87
  %v923 = vpop.permute.xlu0 %922
  %925 = vset.pattern.permute.xlu0 4
  %926 = vperm.xlu0 %925, %v88
  %v927 = vpop.permute.xlu0 %926
  %929 = vset.pattern.permute.xlu0 4
  %930 = vperm.xlu0 %929, %v89
  %v931 = vpop.permute.xlu0 %930
  %v933 = vmul.f32 %v911, %v681
  %v934 = vmul.f32 %v915, %v682
  %v935 = vmul.f32 %v919, %v683
  %v936 = vmul.f32 %v923, %v684
  %v937 = vmul.f32 %v927, %v685
  %v938 = vmul.f32 %v931, %v686
  %945 = vrot.lane.b32.xlu0 %v933, 124
  %v946 = vpop.permute.xlu0 %945
  %947 = vrot.lane.b32.xlu0 %v934, 124
  %v948 = vpop.permute.xlu0 %947
  %949 = vrot.lane.b32.xlu0 %v935, 124
  %v950 = vpop.permute.xlu0 %949
  %951 = vrot.lane.b32.xlu0 %v936, 124
  %v952 = vpop.permute.xlu0 %951
  %953 = vrot.lane.b32.xlu0 %v937, 124
  %v954 = vpop.permute.xlu0 %953
  %955 = vrot.lane.b32.xlu0 %v938, 124
  %v956 = vpop.permute.xlu0 %955
  %v963 = vadd.f32 %v903, %v946
  %v964 = vadd.f32 %v904, %v948
  %v965 = vadd.f32 %v905, %v950
  %v966 = vadd.f32 %v906, %v952
  %v967 = vadd.f32 %v907, %v954
  %v968 = vadd.f32 %v908, %v956
  %969 = vset.pattern.permute.xlu0 5
  %970 = vperm.xlu0 %969, %v84
  %v971 = vpop.permute.xlu0 %970
  %973 = vset.pattern.permute.xlu0 5
  %974 = vperm.xlu0 %973, %v85
  %v975 = vpop.permute.xlu0 %974
  %977 = vset.pattern.permute.xlu0 5
  %978 = vperm.xlu0 %977, %v86
  %v979 = vpop.permute.xlu0 %978
  %981 = vset.pattern.permute.xlu0 5
  %982 = vperm.xlu0 %981, %v87
  %v983 = vpop.permute.xlu0 %982
  %985 = vset.pattern.permute.xlu0 5
  %986 = vperm.xlu0 %985, %v88
  %v987 = vpop.permute.xlu0 %986
  %989 = vset.pattern.permute.xlu0 5
  %990 = vperm.xlu0 %989, %v89
  %v991 = vpop.permute.xlu0 %990
  %v993 = vmul.f32 %v971, %v681
  %v994 = vmul.f32 %v975, %v682
  %v995 = vmul.f32 %v979, %v683
  %v996 = vmul.f32 %v983, %v684
  %v997 = vmul.f32 %v987, %v685
  %v998 = vmul.f32 %v991, %v686
  %1005 = vrot.lane.b32.xlu0 %v993, 123
  %v1006 = vpop.permute.xlu0 %1005
  %1007 = vrot.lane.b32.xlu0 %v994, 123
  %v1008 = vpop.permute.xlu0 %1007
  %1009 = vrot.lane.b32.xlu0 %v995, 123
  %v1010 = vpop.permute.xlu0 %1009
  %1011 = vrot.lane.b32.xlu0 %v996, 123
  %v1012 = vpop.permute.xlu0 %1011
  %1013 = vrot.lane.b32.xlu0 %v997, 123
  %v1014 = vpop.permute.xlu0 %1013
  %1015 = vrot.lane.b32.xlu0 %v998, 123
  %v1016 = vpop.permute.xlu0 %1015
  %v1023 = vadd.f32 %v963, %v1006
  %v1024 = vadd.f32 %v964, %v1008
  %v1025 = vadd.f32 %v965, %v1010
  %v1026 = vadd.f32 %v966, %v1012
  %v1027 = vadd.f32 %v967, %v1014
  %v1028 = vadd.f32 %v968, %v1016
  %1029 = vset.pattern.permute.xlu0 6
  %1030 = vperm.xlu0 %1029, %v84
  %v1031 = vpop.permute.xlu0 %1030
  %1033 = vset.pattern.permute.xlu0 6
  %1034 = vperm.xlu0 %1033, %v85
  %v1035 = vpop.permute.xlu0 %1034
  %1037 = vset.pattern.permute.xlu0 6
  %1038 = vperm.xlu0 %1037, %v86
  %v1039 = vpop.permute.xlu0 %1038
  %1041 = vset.pattern.permute.xlu0 6
  %1042 = vperm.xlu0 %1041, %v87
  %v1043 = vpop.permute.xlu0 %1042
  %1045 = vset.pattern.permute.xlu0 6
  %1046 = vperm.xlu0 %1045, %v88
  %v1047 = vpop.permute.xlu0 %1046
  %1049 = vset.pattern.permute.xlu0 6
  %1050 = vperm.xlu0 %1049, %v89
  %v1051 = vpop.permute.xlu0 %1050
  %v1053 = vmul.f32 %v1031, %v681
  %v1054 = vmul.f32 %v1035, %v682
  %v1055 = vmul.f32 %v1039, %v683
  %v1056 = vmul.f32 %v1043, %v684
  %v1057 = vmul.f32 %v1047, %v685
  %v1058 = vmul.f32 %v1051, %v686
  %1065 = vrot.lane.b32.xlu0 %v1053, 122
  %v1066 = vpop.permute.xlu0 %1065
  %1067 = vrot.lane.b32.xlu0 %v1054, 122
  %v1068 = vpop.permute.xlu0 %1067
  %1069 = vrot.lane.b32.xlu0 %v1055, 122
  %v1070 = vpop.permute.xlu0 %1069
  %1071 = vrot.lane.b32.xlu0 %v1056, 122
  %v1072 = vpop.permute.xlu0 %1071
  %1073 = vrot.lane.b32.xlu0 %v1057, 122
  %v1074 = vpop.permute.xlu0 %1073
  %1075 = vrot.lane.b32.xlu0 %v1058, 122
  %v1076 = vpop.permute.xlu0 %1075
  %v1083 = vadd.f32 %v1023, %v1066
  %v1084 = vadd.f32 %v1024, %v1068
  %v1085 = vadd.f32 %v1025, %v1070
  %v1086 = vadd.f32 %v1026, %v1072
  %v1087 = vadd.f32 %v1027, %v1074
  %v1088 = vadd.f32 %v1028, %v1076
  %1089 = vset.pattern.permute.xlu0 7
  %1090 = vperm.xlu0 %1089, %v84
  %v1091 = vpop.permute.xlu0 %1090
  %1093 = vset.pattern.permute.xlu0 7
  %1094 = vperm.xlu0 %1093, %v85
  %v1095 = vpop.permute.xlu0 %1094
  %1097 = vset.pattern.permute.xlu0 7
  %1098 = vperm.xlu0 %1097, %v86
  %v1099 = vpop.permute.xlu0 %1098
  %1101 = vset.pattern.permute.xlu0 7
  %1102 = vperm.xlu0 %1101, %v87
  %v1103 = vpop.permute.xlu0 %1102
  %1105 = vset.pattern.permute.xlu0 7
  %1106 = vperm.xlu0 %1105, %v88
  %v1107 = vpop.permute.xlu0 %1106
  %1109 = vset.pattern.permute.xlu0 7
  %1110 = vperm.xlu0 %1109, %v89
  %v1111 = vpop.permute.xlu0 %1110
  %v1113 = vmul.f32 %v1091, %v681
  %v1114 = vmul.f32 %v1095, %v682
  %v1115 = vmul.f32 %v1099, %v683
  %v1116 = vmul.f32 %v1103, %v684
  %v1117 = vmul.f32 %v1107, %v685
  %v1118 = vmul.f32 %v1111, %v686
  %1125 = vrot.lane.b32.xlu0 %v1113, 121
  %v1126 = vpop.permute.xlu0 %1125
  %1127 = vrot.lane.b32.xlu0 %v1114, 121
  %v1128 = vpop.permute.xlu0 %1127
  %1129 = vrot.lane.b32.xlu0 %v1115, 121
  %v1130 = vpop.permute.xlu0 %1129
  %1131 = vrot.lane.b32.xlu0 %v1116, 121
  %v1132 = vpop.permute.xlu0 %1131
  %1133 = vrot.lane.b32.xlu0 %v1117, 121
  %v1134 = vpop.permute.xlu0 %1133
  %1135 = vrot.lane.b32.xlu0 %v1118, 121
  %v1136 = vpop.permute.xlu0 %1135
  %v1143 = vadd.f32 %v1083, %v1126
  %v1144 = vadd.f32 %v1084, %v1128
  %v1145 = vadd.f32 %v1085, %v1130
  %v1146 = vadd.f32 %v1086, %v1132
  %v1147 = vadd.f32 %v1087, %v1134
  %v1148 = vadd.f32 %v1088, %v1136
  %1149 = vset.pattern.permute.xlu0 8
  %1150 = vperm.xlu0 %1149, %v84
  %v1151 = vpop.permute.xlu0 %1150
  %1153 = vset.pattern.permute.xlu0 8
  %1154 = vperm.xlu0 %1153, %v85
  %v1155 = vpop.permute.xlu0 %1154
  %1157 = vset.pattern.permute.xlu0 8
  %1158 = vperm.xlu0 %1157, %v86
  %v1159 = vpop.permute.xlu0 %1158
  %1161 = vset.pattern.permute.xlu0 8
  %1162 = vperm.xlu0 %1161, %v87
  %v1163 = vpop.permute.xlu0 %1162
  %1165 = vset.pattern.permute.xlu0 8
  %1166 = vperm.xlu0 %1165, %v88
  %v1167 = vpop.permute.xlu0 %1166
  %1169 = vset.pattern.permute.xlu0 8
  %1170 = vperm.xlu0 %1169, %v89
  %v1171 = vpop.permute.xlu0 %1170
  %v1173 = vmul.f32 %v1151, %v681
  %v1174 = vmul.f32 %v1155, %v682
  %v1175 = vmul.f32 %v1159, %v683
  %v1176 = vmul.f32 %v1163, %v684
  %v1177 = vmul.f32 %v1167, %v685
  %v1178 = vmul.f32 %v1171, %v686
  %1185 = vrot.lane.b32.xlu0 %v1173, 120
  %v1186 = vpop.permute.xlu0 %1185
  %1187 = vrot.lane.b32.xlu0 %v1174, 120
  %v1188 = vpop.permute.xlu0 %1187
  %1189 = vrot.lane.b32.xlu0 %v1175, 120
  %v1190 = vpop.permute.xlu0 %1189
  %1191 = vrot.lane.b32.xlu0 %v1176, 120
  %v1192 = vpop.permute.xlu0 %1191
  %1193 = vrot.lane.b32.xlu0 %v1177, 120
  %v1194 = vpop.permute.xlu0 %1193
  %1195 = vrot.lane.b32.xlu0 %v1178, 120
  %v1196 = vpop.permute.xlu0 %1195
  %v1203 = vadd.f32 %v1143, %v1186
  %v1204 = vadd.f32 %v1144, %v1188
  %v1205 = vadd.f32 %v1145, %v1190
  %v1206 = vadd.f32 %v1146, %v1192
  %v1207 = vadd.f32 %v1147, %v1194
  %v1208 = vadd.f32 %v1148, %v1196
  %1209 = vset.pattern.permute.xlu0 9
  %1210 = vperm.xlu0 %1209, %v84
  %v1211 = vpop.permute.xlu0 %1210
  %1213 = vset.pattern.permute.xlu0 9
  %1214 = vperm.xlu0 %1213, %v85
  %v1215 = vpop.permute.xlu0 %1214
  %1217 = vset.pattern.permute.xlu0 9
  %1218 = vperm.xlu0 %1217, %v86
  %v1219 = vpop.permute.xlu0 %1218
  %1221 = vset.pattern.permute.xlu0 9
  %1222 = vperm.xlu0 %1221, %v87
  %v1223 = vpop.permute.xlu0 %1222
  %1225 = vset.pattern.permute.xlu0 9
  %1226 = vperm.xlu0 %1225, %v88
  %v1227 = vpop.permute.xlu0 %1226
  %1229 = vset.pattern.permute.xlu0 9
  %1230 = vperm.xlu0 %1229, %v89
  %v1231 = vpop.permute.xlu0 %1230
  %v1233 = vmul.f32 %v1211, %v681
  %v1234 = vmul.f32 %v1215, %v682
  %v1235 = vmul.f32 %v1219, %v683
  %v1236 = vmul.f32 %v1223, %v684
  %v1237 = vmul.f32 %v1227, %v685
  %v1238 = vmul.f32 %v1231, %v686
  %1245 = vrot.lane.b32.xlu0 %v1233, 119
  %v1246 = vpop.permute.xlu0 %1245
  %1247 = vrot.lane.b32.xlu0 %v1234, 119
  %v1248 = vpop.permute.xlu0 %1247
  %1249 = vrot.lane.b32.xlu0 %v1235, 119
  %v1250 = vpop.permute.xlu0 %1249
  %1251 = vrot.lane.b32.xlu0 %v1236, 119
  %v1252 = vpop.permute.xlu0 %1251
  %1253 = vrot.lane.b32.xlu0 %v1237, 119
  %v1254 = vpop.permute.xlu0 %1253
  %1255 = vrot.lane.b32.xlu0 %v1238, 119
  %v1256 = vpop.permute.xlu0 %1255
  %v1263 = vadd.f32 %v1203, %v1246
  %v1264 = vadd.f32 %v1204, %v1248
  %v1265 = vadd.f32 %v1205, %v1250
  %v1266 = vadd.f32 %v1206, %v1252
  %v1267 = vadd.f32 %v1207, %v1254
  %v1268 = vadd.f32 %v1208, %v1256
  %1269 = vset.pattern.permute.xlu0 10
  %1270 = vperm.xlu0 %1269, %v84
  %v1271 = vpop.permute.xlu0 %1270
  %1273 = vset.pattern.permute.xlu0 10
  %1274 = vperm.xlu0 %1273, %v85
  %v1275 = vpop.permute.xlu0 %1274
  %1277 = vset.pattern.permute.xlu0 10
  %1278 = vperm.xlu0 %1277, %v86
  %v1279 = vpop.permute.xlu0 %1278
  %1281 = vset.pattern.permute.xlu0 10
  %1282 = vperm.xlu0 %1281, %v87
  %v1283 = vpop.permute.xlu0 %1282
  %1285 = vset.pattern.permute.xlu0 10
  %1286 = vperm.xlu0 %1285, %v88
  %v1287 = vpop.permute.xlu0 %1286
  %1289 = vset.pattern.permute.xlu0 10
  %1290 = vperm.xlu0 %1289, %v89
  %v1291 = vpop.permute.xlu0 %1290
  %v1293 = vmul.f32 %v1271, %v681
  %v1294 = vmul.f32 %v1275, %v682
  %v1295 = vmul.f32 %v1279, %v683
  %v1296 = vmul.f32 %v1283, %v684
  %v1297 = vmul.f32 %v1287, %v685
  %v1298 = vmul.f32 %v1291, %v686
  %1305 = vrot.lane.b32.xlu0 %v1293, 118
  %v1306 = vpop.permute.xlu0 %1305
  %1307 = vrot.lane.b32.xlu0 %v1294, 118
  %v1308 = vpop.permute.xlu0 %1307
  %1309 = vrot.lane.b32.xlu0 %v1295, 118
  %v1310 = vpop.permute.xlu0 %1309
  %1311 = vrot.lane.b32.xlu0 %v1296, 118
  %v1312 = vpop.permute.xlu0 %1311
  %1313 = vrot.lane.b32.xlu0 %v1297, 118
  %v1314 = vpop.permute.xlu0 %1313
  %1315 = vrot.lane.b32.xlu0 %v1298, 118
  %v1316 = vpop.permute.xlu0 %1315
  %v1323 = vadd.f32 %v1263, %v1306
  %v1324 = vadd.f32 %v1264, %v1308
  %v1325 = vadd.f32 %v1265, %v1310
  %v1326 = vadd.f32 %v1266, %v1312
  %v1327 = vadd.f32 %v1267, %v1314
  %v1328 = vadd.f32 %v1268, %v1316
  %1329 = vset.pattern.permute.xlu0 11
  %1330 = vperm.xlu0 %1329, %v84
  %v1331 = vpop.permute.xlu0 %1330
  %1333 = vset.pattern.permute.xlu0 11
  %1334 = vperm.xlu0 %1333, %v85
  %v1335 = vpop.permute.xlu0 %1334
  %1337 = vset.pattern.permute.xlu0 11
  %1338 = vperm.xlu0 %1337, %v86
  %v1339 = vpop.permute.xlu0 %1338
  %1341 = vset.pattern.permute.xlu0 11
  %1342 = vperm.xlu0 %1341, %v87
  %v1343 = vpop.permute.xlu0 %1342
  %1345 = vset.pattern.permute.xlu0 11
  %1346 = vperm.xlu0 %1345, %v88
  %v1347 = vpop.permute.xlu0 %1346
  %1349 = vset.pattern.permute.xlu0 11
  %1350 = vperm.xlu0 %1349, %v89
  %v1351 = vpop.permute.xlu0 %1350
  %v1353 = vmul.f32 %v1331, %v681
  %v1354 = vmul.f32 %v1335, %v682
  %v1355 = vmul.f32 %v1339, %v683
  %v1356 = vmul.f32 %v1343, %v684
  %v1357 = vmul.f32 %v1347, %v685
  %v1358 = vmul.f32 %v1351, %v686
  %1365 = vrot.lane.b32.xlu0 %v1353, 117
  %v1366 = vpop.permute.xlu0 %1365
  %1367 = vrot.lane.b32.xlu0 %v1354, 117
  %v1368 = vpop.permute.xlu0 %1367
  %1369 = vrot.lane.b32.xlu0 %v1355, 117
  %v1370 = vpop.permute.xlu0 %1369
  %1371 = vrot.lane.b32.xlu0 %v1356, 117
  %v1372 = vpop.permute.xlu0 %1371
  %1373 = vrot.lane.b32.xlu0 %v1357, 117
  %v1374 = vpop.permute.xlu0 %1373
  %1375 = vrot.lane.b32.xlu0 %v1358, 117
  %v1376 = vpop.permute.xlu0 %1375
  %v1383 = vadd.f32 %v1323, %v1366
  %v1384 = vadd.f32 %v1324, %v1368
  %v1385 = vadd.f32 %v1325, %v1370
  %v1386 = vadd.f32 %v1326, %v1372
  %v1387 = vadd.f32 %v1327, %v1374
  %v1388 = vadd.f32 %v1328, %v1376
  %1389 = vset.pattern.permute.xlu0 12
  %1390 = vperm.xlu0 %1389, %v84
  %v1391 = vpop.permute.xlu0 %1390
  %1393 = vset.pattern.permute.xlu0 12
  %1394 = vperm.xlu0 %1393, %v85
  %v1395 = vpop.permute.xlu0 %1394
  %1397 = vset.pattern.permute.xlu0 12
  %1398 = vperm.xlu0 %1397, %v86
  %v1399 = vpop.permute.xlu0 %1398
  %1401 = vset.pattern.permute.xlu0 12
  %1402 = vperm.xlu0 %1401, %v87
  %v1403 = vpop.permute.xlu0 %1402
  %1405 = vset.pattern.permute.xlu0 12
  %1406 = vperm.xlu0 %1405, %v88
  %v1407 = vpop.permute.xlu0 %1406
  %1409 = vset.pattern.permute.xlu0 12
  %1410 = vperm.xlu0 %1409, %v89
  %v1411 = vpop.permute.xlu0 %1410
  %v1413 = vmul.f32 %v1391, %v681
  %v1414 = vmul.f32 %v1395, %v682
  %v1415 = vmul.f32 %v1399, %v683
  %v1416 = vmul.f32 %v1403, %v684
  %v1417 = vmul.f32 %v1407, %v685
  %v1418 = vmul.f32 %v1411, %v686
  %1425 = vrot.lane.b32.xlu0 %v1413, 116
  %v1426 = vpop.permute.xlu0 %1425
  %1427 = vrot.lane.b32.xlu0 %v1414, 116
  %v1428 = vpop.permute.xlu0 %1427
  %1429 = vrot.lane.b32.xlu0 %v1415, 116
  %v1430 = vpop.permute.xlu0 %1429
  %1431 = vrot.lane.b32.xlu0 %v1416, 116
  %v1432 = vpop.permute.xlu0 %1431
  %1433 = vrot.lane.b32.xlu0 %v1417, 116
  %v1434 = vpop.permute.xlu0 %1433
  %1435 = vrot.lane.b32.xlu0 %v1418, 116
  %v1436 = vpop.permute.xlu0 %1435
  %v1443 = vadd.f32 %v1383, %v1426
  %v1444 = vadd.f32 %v1384, %v1428
  %v1445 = vadd.f32 %v1385, %v1430
  %v1446 = vadd.f32 %v1386, %v1432
  %v1447 = vadd.f32 %v1387, %v1434
  %v1448 = vadd.f32 %v1388, %v1436
  %1449 = vset.pattern.permute.xlu0 13
  %1450 = vperm.xlu0 %1449, %v84
  %v1451 = vpop.permute.xlu0 %1450
  %1453 = vset.pattern.permute.xlu0 13
  %1454 = vperm.xlu0 %1453, %v85
  %v1455 = vpop.permute.xlu0 %1454
  %1457 = vset.pattern.permute.xlu0 13
  %1458 = vperm.xlu0 %1457, %v86
  %v1459 = vpop.permute.xlu0 %1458
  %1461 = vset.pattern.permute.xlu0 13
  %1462 = vperm.xlu0 %1461, %v87
  %v1463 = vpop.permute.xlu0 %1462
  %1465 = vset.pattern.permute.xlu0 13
  %1466 = vperm.xlu0 %1465, %v88
  %v1467 = vpop.permute.xlu0 %1466
  %1469 = vset.pattern.permute.xlu0 13
  %1470 = vperm.xlu0 %1469, %v89
  %v1471 = vpop.permute.xlu0 %1470
  %v1473 = vmul.f32 %v1451, %v681
  %v1474 = vmul.f32 %v1455, %v682
  %v1475 = vmul.f32 %v1459, %v683
  %v1476 = vmul.f32 %v1463, %v684
  %v1477 = vmul.f32 %v1467, %v685
  %v1478 = vmul.f32 %v1471, %v686
  %1485 = vrot.lane.b32.xlu0 %v1473, 115
  %v1486 = vpop.permute.xlu0 %1485
  %1487 = vrot.lane.b32.xlu0 %v1474, 115
  %v1488 = vpop.permute.xlu0 %1487
  %1489 = vrot.lane.b32.xlu0 %v1475, 115
  %v1490 = vpop.permute.xlu0 %1489
  %1491 = vrot.lane.b32.xlu0 %v1476, 115
  %v1492 = vpop.permute.xlu0 %1491
  %1493 = vrot.lane.b32.xlu0 %v1477, 115
  %v1494 = vpop.permute.xlu0 %1493
  %1495 = vrot.lane.b32.xlu0 %v1478, 115
  %v1496 = vpop.permute.xlu0 %1495
  %v1503 = vadd.f32 %v1443, %v1486
  %v1504 = vadd.f32 %v1444, %v1488
  %v1505 = vadd.f32 %v1445, %v1490
  %v1506 = vadd.f32 %v1446, %v1492
  %v1507 = vadd.f32 %v1447, %v1494
  %v1508 = vadd.f32 %v1448, %v1496
  %1509 = vset.pattern.permute.xlu0 14
  %1510 = vperm.xlu0 %1509, %v84
  %v1511 = vpop.permute.xlu0 %1510
  %1513 = vset.pattern.permute.xlu0 14
  %1514 = vperm.xlu0 %1513, %v85
  %v1515 = vpop.permute.xlu0 %1514
  %1517 = vset.pattern.permute.xlu0 14
  %1518 = vperm.xlu0 %1517, %v86
  %v1519 = vpop.permute.xlu0 %1518
  %1521 = vset.pattern.permute.xlu0 14
  %1522 = vperm.xlu0 %1521, %v87
  %v1523 = vpop.permute.xlu0 %1522
  %1525 = vset.pattern.permute.xlu0 14
  %1526 = vperm.xlu0 %1525, %v88
  %v1527 = vpop.permute.xlu0 %1526
  %1529 = vset.pattern.permute.xlu0 14
  %1530 = vperm.xlu0 %1529, %v89
  %v1531 = vpop.permute.xlu0 %1530
  %v1533 = vmul.f32 %v1511, %v681
  %v1534 = vmul.f32 %v1515, %v682
  %v1535 = vmul.f32 %v1519, %v683
  %v1536 = vmul.f32 %v1523, %v684
  %v1537 = vmul.f32 %v1527, %v685
  %v1538 = vmul.f32 %v1531, %v686
  %1545 = vrot.lane.b32.xlu0 %v1533, 114
  %v1546 = vpop.permute.xlu0 %1545
  %1547 = vrot.lane.b32.xlu0 %v1534, 114
  %v1548 = vpop.permute.xlu0 %1547
  %1549 = vrot.lane.b32.xlu0 %v1535, 114
  %v1550 = vpop.permute.xlu0 %1549
  %1551 = vrot.lane.b32.xlu0 %v1536, 114
  %v1552 = vpop.permute.xlu0 %1551
  %1553 = vrot.lane.b32.xlu0 %v1537, 114
  %v1554 = vpop.permute.xlu0 %1553
  %1555 = vrot.lane.b32.xlu0 %v1538, 114
  %v1556 = vpop.permute.xlu0 %1555
  %v1563 = vadd.f32 %v1503, %v1546
  %v1564 = vadd.f32 %v1504, %v1548
  %v1565 = vadd.f32 %v1505, %v1550
  %v1566 = vadd.f32 %v1506, %v1552
  %v1567 = vadd.f32 %v1507, %v1554
  %v1568 = vadd.f32 %v1508, %v1556
  %1569 = vset.pattern.permute.xlu0 15
  %1570 = vperm.xlu0 %1569, %v84
  %v1571 = vpop.permute.xlu0 %1570
  %1573 = vset.pattern.permute.xlu0 15
  %1574 = vperm.xlu0 %1573, %v85
  %v1575 = vpop.permute.xlu0 %1574
  %1577 = vset.pattern.permute.xlu0 15
  %1578 = vperm.xlu0 %1577, %v86
  %v1579 = vpop.permute.xlu0 %1578
  %1581 = vset.pattern.permute.xlu0 15
  %1582 = vperm.xlu0 %1581, %v87
  %v1583 = vpop.permute.xlu0 %1582
  %1585 = vset.pattern.permute.xlu0 15
  %1586 = vperm.xlu0 %1585, %v88
  %v1587 = vpop.permute.xlu0 %1586
  %1589 = vset.pattern.permute.xlu0 15
  %1590 = vperm.xlu0 %1589, %v89
  %v1591 = vpop.permute.xlu0 %1590
  %v1593 = vmul.f32 %v1571, %v681
  %v1594 = vmul.f32 %v1575, %v682
  %v1595 = vmul.f32 %v1579, %v683
  %v1596 = vmul.f32 %v1583, %v684
  %v1597 = vmul.f32 %v1587, %v685
  %v1598 = vmul.f32 %v1591, %v686
  %1605 = vrot.lane.b32.xlu0 %v1593, 113
  %v1606 = vpop.permute.xlu0 %1605
  %1607 = vrot.lane.b32.xlu0 %v1594, 113
  %v1608 = vpop.permute.xlu0 %1607
  %1609 = vrot.lane.b32.xlu0 %v1595, 113
  %v1610 = vpop.permute.xlu0 %1609
  %1611 = vrot.lane.b32.xlu0 %v1596, 113
  %v1612 = vpop.permute.xlu0 %1611
  %1613 = vrot.lane.b32.xlu0 %v1597, 113
  %v1614 = vpop.permute.xlu0 %1613
  %1615 = vrot.lane.b32.xlu0 %v1598, 113
  %v1616 = vpop.permute.xlu0 %1615
  %v1623 = vadd.f32 %v1563, %v1606
  %v1624 = vadd.f32 %v1564, %v1608
  %v1625 = vadd.f32 %v1565, %v1610
  %v1626 = vadd.f32 %v1566, %v1612
  %v1627 = vadd.f32 %v1567, %v1614
  %v1628 = vadd.f32 %v1568, %v1616
  %v1629 = vpack.c.bf16 %v1624, %v1623
  %v1630 = vpack.c.bf16 %v1626, %v1625
  %v1631 = vpack.c.bf16 %v1628, %v1627
  %1633 = vset.pattern.permute.xlu0 0
  %1634 = vperm.xlu0 %1633, %v96
  %v1635 = vpop.permute.xlu0 %1634
  %1638 = vset.pattern.permute.xlu0 0
  %1639 = vperm.xlu0 %1638, %v97
  %v1640 = vpop.permute.xlu0 %1639
  %1643 = vset.pattern.permute.xlu0 0
  %1644 = vperm.xlu0 %1643, %v98
  %v1645 = vpop.permute.xlu0 %1644
  %1648 = vset.pattern.permute.xlu0 0
  %1649 = vperm.xlu0 %1648, %v99
  %v1650 = vpop.permute.xlu0 %1649
  %1653 = vset.pattern.permute.xlu0 0
  %1654 = vperm.xlu0 %1653, %v100
  %v1655 = vpop.permute.xlu0 %1654
  %1658 = vset.pattern.permute.xlu0 0
  %1659 = vperm.xlu0 %1658, %v101
  %v1660 = vpop.permute.xlu0 %1659
  %v1668 = vunpack.c.l.b16 %v90
  %v1669 = vunpack.c.l.b16 %v91
  %v1670 = vunpack.c.l.b16 %v92
  %v1671 = vunpack.c.l.b16 %v93
  %v1672 = vunpack.c.l.b16 %v94
  %v1673 = vunpack.c.l.b16 %v95
  %v1674 = vpack.c.b16 %v1669, %v1668
  %v1675 = vpack.c.b16 %v1671, %v1670
  %v1676 = vpack.c.b16 %v1673, %v1672
  %vm1677 = vcmask 392192
  %v1679 = vsel %vm1677, %v1674, 0
  %v1682 = vsel %vm1677, %v1675, 0
  %v1685 = vsel %vm1677, %v1676, 0
  %1687 = vmatprep.subr.bf16.mxu0 0
  %1688 = vmatpush1.bf16.msra.mxu0 %v1629
  %1689 = vmatprep.subr.bf16.mxu0 0
  %1690 = vmatpush1.bf16.msra.mxu0 %v1630
  %1691 = vmatprep.subr.bf16.mxu0 0
  %1692 = vmatpush1.bf16.msra.mxu0 %v1631
  %1693 = vmatprep.subr.bf16.mxu0 0
  %1694 = vmatpush1.bf16.msra.mxu0 0
  %1695 = vmatprep.subr.bf16.mxu0 0
  %1696 = vmatpush1.bf16.msra.mxu0 0
  %1697 = vmatprep.subr.bf16.mxu0 0
  %1698 = vmatpush1.bf16.msra.mxu0 0
  %1699 = vmatprep.subr.bf16.mxu0 0
  %1700 = vmatpush1.bf16.msra.mxu0 0
  %1701 = vmatprep.subr.bf16.mxu0 0
  %1702 = vmatpush1.bf16.msra.mxu0 0
  %1703 = vmatprep.subr.bf16.mxu0 0
  %1704 = vmatpush1.bf16.msra.mxu0 0
  %1705 = vmatprep.subr.bf16.mxu0 0
  %1706 = vmatpush1.bf16.msra.mxu0 0
  %1707 = vmatprep.subr.bf16.mxu0 0
  %1708 = vmatpush1.bf16.msra.mxu0 0
  %1709 = vmatprep.subr.bf16.mxu0 0
  %1710 = vmatpush1.bf16.msra.mxu0 0
  %1711 = vmatprep.subr.bf16.mxu0 0
  %1712 = vmatpush1.bf16.msra.mxu0 0
  %1713 = vmatprep.subr.bf16.mxu0 0
  %1714 = vmatpush1.bf16.msra.mxu0 0
  %1715 = vmatprep.subr.bf16.mxu0 0
  %1716 = vmatpush1.bf16.msra.mxu0 0
  %1717 = vmatprep.subr.bf16.mxu0 0
  %1718 = vmatpush1.bf16.msra.mxu0 0
  %1719 = vmatprep.mubr.bf16.mxu0 0
  %1720 = vmatmul.mubr.bf16.gmra.mrb[0].mxu0 %v1679
  %v1721 = vpop.f32.mrb[0].mxu0
  %v1722 = vadd.f32 %v1635, %v1721
  %v1723 = vpop.f32.mrb[0].mxu0
  %v1724 = vpop.f32.mrb[0].mxu0
  %v1725 = vadd.f32 %v1640, %v1724
  %v1726 = vpop.f32.mrb[0].mxu0
  %1727 = vmatprep.mubr.bf16.mxu0 0
  %1728 = vmatmul.mubr.bf16.gmra.mrb[0].mxu0 %v1682
  %v1729 = vpop.f32.mrb[0].mxu0
  %v1730 = vadd.f32 %v1645, %v1729
  %v1731 = vpop.f32.mrb[0].mxu0
  %v1732 = vpop.f32.mrb[0].mxu0
  %v1733 = vadd.f32 %v1650, %v1732
  %v1734 = vpop.f32.mrb[0].mxu0
  %1735 = vmatprep.mubr.bf16.mxu0 0
  %1736 = vmatmul.mubr.bf16.gmra.mrb[0].mxu0 %v1685
  %v1737 = vpop.f32.mrb[0].mxu0
  %v1738 = vadd.f32 %v1655, %v1737
  %v1739 = vpop.f32.mrb[0].mxu0
  %v1740 = vpop.f32.mrb[0].mxu0
  %v1741 = vadd.f32 %v1660, %v1740
  %v1742 = vpop.f32.mrb[0].mxu0
  %1743 = vdwg.mxu0
  %vm1744 = vcmp.gt.f32.partialorder %v1722, 0.0
  %vm1745 = vcmp.gt.f32.partialorder %v1725, 0.0
  %vm1746 = vcmp.gt.f32.partialorder %v1730, 0.0
  %vm1747 = vcmp.gt.f32.partialorder %v1733, 0.0
  %vm1748 = vcmp.gt.f32.partialorder %v1738, 0.0
  %vm1749 = vcmp.gt.f32.partialorder %v1741, 0.0
  %v1750 = vmin.f32 %v1722, 0.0
  %v1751 = vmin.f32 %v1725, 0.0
  %v1752 = vmin.f32 %v1730, 0.0
  %v1753 = vmin.f32 %v1733, 0.0
  %v1754 = vmin.f32 %v1738, 0.0
  %v1755 = vmin.f32 %v1741, 0.0
  %v1756 = vmul.f32 %v1750, 1.442695
  %v1757 = vpow.pop %v1756
  %v1758 = vmul.f32 %v1751, 1.442695
  %v1759 = vpow.pop %v1758
  %v1760 = vmul.f32 %v1752, 1.442695
  %v1761 = vpow.pop %v1760
  %v1762 = vmul.f32 %v1753, 1.442695
  %v1763 = vpow.pop %v1762
  %v1764 = vmul.f32 %v1754, 1.442695
  %v1765 = vpow.pop %v1764
  %v1766 = vmul.f32 %v1755, 1.442695
  %v1767 = vpow.pop %v1766
  %v1768 = vsub.f32 %v1757, 1.0
  %v1769 = vsub.f32 %v1759, 1.0
  %v1770 = vsub.f32 %v1761, 1.0
  %v1771 = vsub.f32 %v1763, 1.0
  %v1772 = vsub.f32 %v1765, 1.0
  %v1773 = vsub.f32 %v1767, 1.0
  %v1774 = vsel %vm1744, %v1722, %v1768
  %v1775 = vsel %vm1745, %v1725, %v1769
  %v1776 = vsel %vm1746, %v1730, %v1770
  %v1777 = vsel %vm1747, %v1733, %v1771
  %v1778 = vsel %vm1748, %v1738, %v1772
  %v1779 = vsel %vm1749, %v1741, %v1773
  %vm1780 = vcmask 269312
  %v1782 = vsel %vm1780, %v1774, 0
  %v1785 = vsel %vm1780, %v1775, 0
  %v1788 = vsel %vm1780, %v1776, 0
  %v1791 = vsel %vm1780, %v1777, 0
  %v1794 = vsel %vm1780, %v1778, 0
  %v1797 = vsel %vm1780, %v1779, 0
  %v1800 = vsel %vm550, %v143, 0
  %1802 = vmatprep.subr.mxu0 0.0
  %1803 = vmatpush1.msra.mxu0 %v139
  %1804 = vmatprep.subr.mxu0 0.0
  %1805 = vmatpush1.msra.mxu0 %v140
  %1806 = vmatprep.subr.mxu0 0.0
  %1807 = vmatpush1.msra.mxu0 %v141
  %1808 = vmatprep.subr.mxu0 0.0
  %1809 = vmatpush1.msra.mxu0 %v142
  %1810 = vmatprep.subr.mxu0 0.0
  %1811 = vmatpush1.msra.mxu0 %v1800
  %1812 = vmatprep.subr.mxu0 0.0
  %1813 = vmatpush1.msra.mxu0 0.0
  %1814 = vmatprep.subr.mxu0 0.0
  %1815 = vmatpush1.msra.mxu0 0.0
  %1816 = vmatprep.subr.mxu0 0.0
  %1817 = vmatpush1.msra.mxu0 0.0
  %1818 = vmatprep.subr.mxu0 0.0
  %1819 = vmatpush1.msra.mxu0 0.0
  %1820 = vmatprep.subr.mxu0 0.0
  %1821 = vmatpush1.msra.mxu0 0.0
  %1822 = vmatprep.subr.mxu0 0.0
  %1823 = vmatpush1.msra.mxu0 0.0
  %1824 = vmatprep.subr.mxu0 0.0
  %1825 = vmatpush1.msra.mxu0 0.0
  %1826 = vmatprep.subr.mxu0 0.0
  %1827 = vmatpush1.msra.mxu0 0.0
  %1828 = vmatprep.subr.mxu0 0.0
  %1829 = vmatpush1.msra.mxu0 0.0
  %1830 = vmatprep.subr.mxu0 0.0
  %1831 = vmatpush1.msra.mxu0 0.0
  %1832 = vmatprep.subr.mxu0 0.0
  %1833 = vmatpush1.msra.mxu0 0.0
  %1834 = vmatprep.subr.mxu0 0.0
  %1835 = vmatpush1.msra.mxu0 0.0
  %1836 = vmatprep.subr.mxu0 0.0
  %1837 = vmatpush1.msra.mxu0 0.0
  %1838 = vmatprep.subr.mxu0 0.0
  %1839 = vmatpush1.msra.mxu0 0.0
  %1840 = vmatprep.subr.mxu0 0.0
  %1841 = vmatpush1.msra.mxu0 0.0
  %1842 = vmatprep.subr.mxu0 0.0
  %1843 = vmatpush1.msra.mxu0 0.0
  %1844 = vmatprep.subr.mxu0 0.0
  %1845 = vmatpush1.msra.mxu0 0.0
  %1846 = vmatprep.subr.mxu0 0.0
  %1847 = vmatpush1.msra.mxu0 0.0
  %1848 = vmatprep.subr.mxu0 0.0
  %1849 = vmatpush1.msra.mxu0 0.0
  %1850 = vmatprep.subr.mxu0 0.0
  %1851 = vmatpush1.msra.mxu0 0.0
  %1852 = vmatprep.subr.mxu0 0.0
  %1853 = vmatpush1.msra.mxu0 0.0
  %1854 = vmatprep.subr.mxu0 0.0
  %1855 = vmatpush1.msra.mxu0 0.0
  %1856 = vmatprep.subr.mxu0 0.0
  %1857 = vmatpush1.msra.mxu0 0.0
  %1858 = vmatprep.subr.mxu0 0.0
  %1859 = vmatpush1.msra.mxu0 0.0
  %1860 = vmatprep.subr.mxu0 0.0
  %1861 = vmatpush1.msra.mxu0 0.0
  %1862 = vmatprep.subr.mxu0 0.0
  %1863 = vmatpush1.msra.mxu0 0.0
  %1864 = vmatprep.subr.mxu0 0.0
  %1865 = vmatpush1.msra.mxu0 0.0
  %1866 = vmatprep.mubr.f32.mxu0 0.0
  %1867 = vmatmul.mubr.f32.gmra.mrb[0].mxu0 %v1782
  %v1868 = vpop.f32.mrb[0].mxu0
  %v1869 = vadd.f32 0.0, %v1868
  %v1870 = vpop.f32.mrb[0].mxu0
  %1871 = vmatprep.mubr.f32.mxu0 0.0
  %1872 = vmatmul.mubr.f32.gmra.mrb[0].mxu0 %v1785
  %v1873 = vpop.f32.mrb[0].mxu0
  %v1874 = vadd.f32 0.0, %v1873
  %v1875 = vpop.f32.mrb[0].mxu0
  %1876 = vmatprep.mubr.f32.mxu0 0.0
  %1877 = vmatmul.mubr.f32.gmra.mrb[0].mxu0 %v1788
  %v1878 = vpop.f32.mrb[0].mxu0
  %v1879 = vadd.f32 0.0, %v1878
  %v1880 = vpop.f32.mrb[0].mxu0
  %1881 = vmatprep.mubr.f32.mxu0 0.0
  %1882 = vmatmul.mubr.f32.gmra.mrb[0].mxu0 %v1791
  %v1883 = vpop.f32.mrb[0].mxu0
  %v1884 = vadd.f32 0.0, %v1883
  %v1885 = vpop.f32.mrb[0].mxu0
  %1886 = vmatprep.mubr.f32.mxu0 0.0
  %1887 = vmatmul.mubr.f32.gmra.mrb[0].mxu0 %v1794
  %v1888 = vpop.f32.mrb[0].mxu0
  %v1889 = vadd.f32 0.0, %v1888
  %v1890 = vpop.f32.mrb[0].mxu0
  %1891 = vmatprep.mubr.f32.mxu0 0.0
  %1892 = vmatmul.mubr.f32.gmra.mrb[0].mxu0 %v1797
  %v1893 = vpop.f32.mrb[0].mxu0
  %v1894 = vadd.f32 0.0, %v1893
  %v1895 = vpop.f32.mrb[0].mxu0
  %1896 = vdwg.mxu0
  %v1897 = vld [vmem:[%s1] sm:$0xf]
  %v1898 = vld [vmem:[%s1 + $0x4] sm:$0xf]
  %v1899 = vld [vmem:[%s1 + $0x8] sm:$0xf]
  %v1900 = vld [vmem:[%s1 + $0xc] sm:$0xf]
  %v1901 = vld [vmem:[%s1 + $0x10] sm:$0xf]
  %v1902 = vld [vmem:[%s1 + $0x14] sm:$0xf]
  %v1903 = vld [vmem:[%s1 + $0x18] sm:$0xf]
  %v1904 = vld [vmem:[%s1 + $0x1c] sm:$0xf]
  %v1905 = vld [vmem:[%s1 + $0x20] sm:$0xf]
  %v1906 = vld [vmem:[%s1 + $0x24] sm:$0xf]
  %v1907 = vld [vmem:[%s1 + $0x28] sm:$0xf]
  %v1908 = vld [vmem:[%s1 + $0x2c] sm:$0xf]
  %v1909 = vld [vmem:[%s1 + $0x30] sm:$0x3]
  %1911 = vset.pattern.permute.xlu0 0
  %1912 = vperm.xlu0 %1911, %v112
  %v1913 = vpop.permute.xlu0 %1912
  %1916 = vset.pattern.permute.xlu0 0
  %1917 = vperm.xlu0 %1916, %v113
  %v1918 = vpop.permute.xlu0 %1917
  %1921 = vset.pattern.permute.xlu0 0
  %1922 = vperm.xlu0 %1921, %v114
  %v1923 = vpop.permute.xlu0 %1922
  %1926 = vset.pattern.permute.xlu0 0
  %1927 = vperm.xlu0 %1926, %v115
  %v1928 = vpop.permute.xlu0 %1927
  %1931 = vset.pattern.permute.xlu0 0
  %1932 = vperm.xlu0 %1931, %v116
  %v1933 = vpop.permute.xlu0 %1932
  %1936 = vset.pattern.permute.xlu0 0
  %1937 = vperm.xlu0 %1936, %v117
  %v1938 = vpop.permute.xlu0 %1937
  %1941 = vset.pattern.permute.xlu0 0
  %1942 = vperm.xlu0 %1941, %v118
  %v1943 = vpop.permute.xlu0 %1942
  %1946 = vset.pattern.permute.xlu0 0
  %1947 = vperm.xlu0 %1946, %v119
  %v1948 = vpop.permute.xlu0 %1947
  %1951 = vset.pattern.permute.xlu0 0
  %1952 = vperm.xlu0 %1951, %v120
  %v1953 = vpop.permute.xlu0 %1952
  %1956 = vset.pattern.permute.xlu0 0
  %1957 = vperm.xlu0 %1956, %v121
  %v1958 = vpop.permute.xlu0 %1957
  %v1970 = vunpack.c.l.b16 %v102
  %v1971 = vunpack.c.l.b16 %v103
  %v1972 = vunpack.c.l.b16 %v104
  %v1973 = vunpack.c.l.b16 %v105
  %v1974 = vunpack.c.l.b16 %v106
  %v1975 = vunpack.c.l.b16 %v107
  %v1976 = vunpack.c.l.b16 %v108
  %v1977 = vunpack.c.l.b16 %v109
  %v1978 = vunpack.c.l.b16 %v110
  %v1979 = vunpack.c.l.b16 %v111
  %v1980 = vpack.c.b16 %v1971, %v1970
  %v1981 = vpack.c.b16 %v1973, %v1972
  %v1982 = vpack.c.b16 %v1975, %v1974
  %v1983 = vpack.c.b16 %v1977, %v1976
  %v1984 = vpack.c.b16 %v1979, %v1978
  %v1998 = vunpack.c.l.b16 %v1897
  %v1999 = vunpack.c.l.b16 %v1898
  %v2000 = vunpack.c.l.b16 %v1899
  %v2001 = vunpack.c.l.b16 %v1900
  %v2002 = vunpack.c.l.b16 %v1901
  %v2003 = vunpack.c.l.b16 %v1902
  %v2004 = vunpack.c.l.b16 %v1903
  %v2005 = vunpack.c.l.b16 %v1904
  %v2006 = vunpack.c.l.b16 %v1905
  %v2007 = vunpack.c.l.b16 %v1906
  %v2008 = vunpack.c.l.b16 %v1907
  %v2009 = vunpack.c.l.b16 %v1908
  %v2010 = vunpack.c.l.b16 %v1909
  %v2011 = vpack.c.b16 %v1999, %v1998
  %v2012 = vpack.c.b16 %v2001, %v2000
  %v2013 = vpack.c.b16 %v2003, %v2002
  %v2014 = vpack.c.b16 %v2005, %v2004
  %v2015 = vpack.c.b16 %v2007, %v2006
  %v2016 = vpack.c.b16 %v2009, %v2008
  %v2017 = vpack.c.b16 %v2010, %v2010
  %vm2024 = vcmask 818176
  %v2026 = vsel %vm2024, %v1980, 0
  %v2029 = vsel %vm2024, %v1981, 0
  %v2032 = vsel %vm2024, %v1982, 0
  %v2035 = vsel %vm2024, %v1983, 0
  %v2038 = vsel %vm2024, %v1984, 0
  %vm2040 = vcmask 1041408
  %v2042 = vsel %vm2040, %v2017, 0
  %2044 = vmatprep.subr.bf16.mxu0 0
  %2045 = vmatpush1.bf16.msra.mxu0 %v2011
  %2046 = vmatprep.subr.bf16.mxu0 0
  %2047 = vmatpush1.bf16.msra.mxu0 %v2012
  %2048 = vmatprep.subr.bf16.mxu0 0
  %2049 = vmatpush1.bf16.msra.mxu0 %v2013
  %2050 = vmatprep.subr.bf16.mxu0 0
  %2051 = vmatpush1.bf16.msra.mxu0 %v2014
  %2052 = vmatprep.subr.bf16.mxu0 0
  %2053 = vmatpush1.bf16.msra.mxu0 %v2015
  %2054 = vmatprep.subr.bf16.mxu0 0
  %2055 = vmatpush1.bf16.msra.mxu0 %v2016
  %2056 = vmatprep.subr.bf16.mxu0 0
  %2057 = vmatpush1.bf16.msra.mxu0 %v2042
  %2058 = vmatprep.subr.bf16.mxu0 0
  %2059 = vmatpush1.bf16.msra.mxu0 0
  %2060 = vmatprep.subr.bf16.mxu0 0
  %2061 = vmatpush1.bf16.msra.mxu0 0
  %2062 = vmatprep.subr.bf16.mxu0 0
  %2063 = vmatpush1.bf16.msra.mxu0 0
  %2064 = vmatprep.subr.bf16.mxu0 0
  %2065 = vmatpush1.bf16.msra.mxu0 0
  %2066 = vmatprep.subr.bf16.mxu0 0
  %2067 = vmatpush1.bf16.msra.mxu0 0
  %2068 = vmatprep.subr.bf16.mxu0 0
  %2069 = vmatpush1.bf16.msra.mxu0 0
  %2070 = vmatprep.subr.bf16.mxu0 0
  %2071 = vmatpush1.bf16.msra.mxu0 0
  %2072 = vmatprep.subr.bf16.mxu0 0
  %2073 = vmatpush1.bf16.msra.mxu0 0
  %2074 = vmatprep.subr.bf16.mxu0 0
  %2075 = vmatpush1.bf16.msra.mxu0 0
  %2076 = vmatprep.mubr.bf16.mxu0 0
  %2077 = vmatmul.mubr.bf16.gmra.mrb[0].mxu0 %v2026
  %v2078 = vpop.f32.mrb[0].mxu0
  %v2079 = vadd.f32 %v1913, %v2078
  %v2080 = vpop.f32.mrb[0].mxu0
  %v2081 = vpop.f32.mrb[0].mxu0
  %v2082 = vadd.f32 %v1918, %v2081
  %v2083 = vpop.f32.mrb[0].mxu0
  %2084 = vmatprep.mubr.bf16.mxu0 0
  %2085 = vmatmul.mubr.bf16.gmra.mrb[0].mxu0 %v2029
  %v2086 = vpop.f32.mrb[0].mxu0
  %v2087 = vadd.f32 %v1923, %v2086
  %v2088 = vpop.f32.mrb[0].mxu0
  %v2089 = vpop.f32.mrb[0].mxu0
  %v2090 = vadd.f32 %v1928, %v2089
  %v2091 = vpop.f32.mrb[0].mxu0
  %2092 = vmatprep.mubr.bf16.mxu0 0
  %2093 = vmatmul.mubr.bf16.gmra.mrb[0].mxu0 %v2032
  %v2094 = vpop.f32.mrb[0].mxu0
  %v2095 = vadd.f32 %v1933, %v2094
  %v2096 = vpop.f32.mrb[0].mxu0
  %v2097 = vpop.f32.mrb[0].mxu0
  %v2098 = vadd.f32 %v1938, %v2097
  %v2099 = vpop.f32.mrb[0].mxu0
  %2100 = vmatprep.mubr.bf16.mxu0 0
  %2101 = vmatmul.mubr.bf16.gmra.mrb[0].mxu0 %v2035
  %v2102 = vpop.f32.mrb[0].mxu0
  %v2103 = vadd.f32 %v1943, %v2102
  %v2104 = vpop.f32.mrb[0].mxu0
  %v2105 = vpop.f32.mrb[0].mxu0
  %v2106 = vadd.f32 %v1948, %v2105
  %v2107 = vpop.f32.mrb[0].mxu0
  %2108 = vmatprep.mubr.bf16.mxu0 0
  %2109 = vmatmul.mubr.bf16.gmra.mrb[0].mxu0 %v2038
  %v2110 = vpop.f32.mrb[0].mxu0
  %v2111 = vadd.f32 %v1953, %v2110
  %v2112 = vpop.f32.mrb[0].mxu0
  %v2113 = vpop.f32.mrb[0].mxu0
  %v2114 = vadd.f32 %v1958, %v2113
  %v2115 = vpop.f32.mrb[0].mxu0
  %2116 = vdwg.mxu0
  %v2117 = vmul.f32 %v2079, %v2079
  %v2118 = vmul.f32 %v2082, %v2082
  %v2119 = vmul.f32 %v2087, %v2087
  %v2120 = vmul.f32 %v2090, %v2090
  %v2121 = vmul.f32 %v2095, %v2095
  %v2122 = vmul.f32 %v2098, %v2098
  %v2123 = vmul.f32 %v2103, %v2103
  %v2124 = vmul.f32 %v2106, %v2106
  %v2125 = vmul.f32 %v2111, %v2111
  %v2126 = vmul.f32 %v2114, %v2114
  %vm2127 = vcmask 613376
  %v2128 = vsel %vm2127, %v2117, 0.0
  %2129 = vadd.xlane.f32.xlu0 %v2128
  %v2130 = vpop.xlane.xlu0 %2129
  %v2131 = vsel %vm2127, %v2118, 0.0
  %2132 = vadd.xlane.f32.xlu0 %v2131
  %v2133 = vpop.xlane.xlu0 %2132
  %v2134 = vsel %vm2127, %v2119, 0.0
  %2135 = vadd.xlane.f32.xlu0 %v2134
  %v2136 = vpop.xlane.xlu0 %2135
  %v2137 = vsel %vm2127, %v2120, 0.0
  %2138 = vadd.xlane.f32.xlu0 %v2137
  %v2139 = vpop.xlane.xlu0 %2138
  %v2140 = vsel %vm2127, %v2121, 0.0
  %2141 = vadd.xlane.f32.xlu0 %v2140
  %v2142 = vpop.xlane.xlu0 %2141
  %v2143 = vsel %vm2127, %v2122, 0.0
  %2144 = vadd.xlane.f32.xlu0 %v2143
  %v2145 = vpop.xlane.xlu0 %2144
  %v2146 = vsel %vm2127, %v2123, 0.0
  %2147 = vadd.xlane.f32.xlu0 %v2146
  %v2148 = vpop.xlane.xlu0 %2147
  %v2149 = vsel %vm2127, %v2124, 0.0
  %2150 = vadd.xlane.f32.xlu0 %v2149
  %v2151 = vpop.xlane.xlu0 %2150
  %v2152 = vsel %vm2127, %v2125, 0.0
  %2153 = vadd.xlane.f32.xlu0 %v2152
  %v2154 = vpop.xlane.xlu0 %2153
  %v2155 = vsel %vm2127, %v2126, 0.0
  %2156 = vadd.xlane.f32.xlu0 %v2155
  %v2157 = vpop.xlane.xlu0 %2156
  %v2158 = vrcp.pop 75.0
  %v2159 = vmul.f32 %v2130, %v2158
  %v2160 = vmul.f32 %v2133, %v2158
  %v2161 = vmul.f32 %v2136, %v2158
  %v2162 = vmul.f32 %v2139, %v2158
  %v2163 = vmul.f32 %v2142, %v2158
  %v2164 = vmul.f32 %v2145, %v2158
  %v2165 = vmul.f32 %v2148, %v2158
  %v2166 = vmul.f32 %v2151, %v2158
  %v2167 = vmul.f32 %v2154, %v2158
  %v2168 = vmul.f32 %v2157, %v2158
  %2179 = vrot.lane.b32.xlu0 %v2117, 113
  %v2180 = vpop.permute.xlu0 %2179
  %2181 = vrot.lane.b32.xlu0 %v2118, 113
  %v2182 = vpop.permute.xlu0 %2181
  %2183 = vrot.lane.b32.xlu0 %v2119, 113
  %v2184 = vpop.permute.xlu0 %2183
  %2185 = vrot.lane.b32.xlu0 %v2120, 113
  %v2186 = vpop.permute.xlu0 %2185
  %2187 = vrot.lane.b32.xlu0 %v2121, 113
  %v2188 = vpop.permute.xlu0 %2187
  %2189 = vrot.lane.b32.xlu0 %v2122, 113
  %v2190 = vpop.permute.xlu0 %2189
  %2191 = vrot.lane.b32.xlu0 %v2123, 113
  %v2192 = vpop.permute.xlu0 %2191
  %2193 = vrot.lane.b32.xlu0 %v2124, 113
  %v2194 = vpop.permute.xlu0 %2193
  %2195 = vrot.lane.b32.xlu0 %v2125, 113
  %v2196 = vpop.permute.xlu0 %2195
  %2197 = vrot.lane.b32.xlu0 %v2126, 113
  %v2198 = vpop.permute.xlu0 %2197
  %v2209 = vsel %vm2127, %v2180, 0.0
  %2210 = vadd.xlane.f32.xlu0 %v2209
  %v2211 = vpop.xlane.xlu0 %2210
  %v2212 = vsel %vm2127, %v2182, 0.0
  %2213 = vadd.xlane.f32.xlu0 %v2212
  %v2214 = vpop.xlane.xlu0 %2213
  %v2215 = vsel %vm2127, %v2184, 0.0
  %2216 = vadd.xlane.f32.xlu0 %v2215
  %v2217 = vpop.xlane.xlu0 %2216
  %v2218 = vsel %vm2127, %v2186, 0.0
  %2219 = vadd.xlane.f32.xlu0 %v2218
  %v2220 = vpop.xlane.xlu0 %2219
  %v2221 = vsel %vm2127, %v2188, 0.0
  %2222 = vadd.xlane.f32.xlu0 %v2221
  %v2223 = vpop.xlane.xlu0 %2222
  %v2224 = vsel %vm2127, %v2190, 0.0
  %2225 = vadd.xlane.f32.xlu0 %v2224
  %v2226 = vpop.xlane.xlu0 %2225
  %v2227 = vsel %vm2127, %v2192, 0.0
  %2228 = vadd.xlane.f32.xlu0 %v2227
  %v2229 = vpop.xlane.xlu0 %2228
  %v2230 = vsel %vm2127, %v2194, 0.0
  %2231 = vadd.xlane.f32.xlu0 %v2230
  %v2232 = vpop.xlane.xlu0 %2231
  %v2233 = vsel %vm2127, %v2196, 0.0
  %2234 = vadd.xlane.f32.xlu0 %v2233
  %v2235 = vpop.xlane.xlu0 %2234
  %v2236 = vsel %vm2127, %v2198, 0.0
  %2237 = vadd.xlane.f32.xlu0 %v2236
  %v2238 = vpop.xlane.xlu0 %2237
  %v2239 = vmul.f32 %v2211, %v2158
  %v2240 = vmul.f32 %v2214, %v2158
  %v2241 = vmul.f32 %v2217, %v2158
  %v2242 = vmul.f32 %v2220, %v2158
  %v2243 = vmul.f32 %v2223, %v2158
  %v2244 = vmul.f32 %v2226, %v2158
  %v2245 = vmul.f32 %v2229, %v2158
  %v2246 = vmul.f32 %v2232, %v2158
  %v2247 = vmul.f32 %v2235, %v2158
  %v2248 = vmul.f32 %v2238, %v2158
  %v2249 = vsel %vm531, %v2159, %v2239
  %v2250 = vsel %vm531, %v2160, %v2240
  %v2251 = vsel %vm531, %v2161, %v2241
  %v2252 = vsel %vm531, %v2162, %v2242
  %v2253 = vsel %vm531, %v2163, %v2243
  %v2254 = vsel %vm531, %v2164, %v2244
  %v2255 = vsel %vm531, %v2165, %v2245
  %v2256 = vsel %vm531, %v2166, %v2246
  %v2257 = vsel %vm531, %v2167, %v2247
  %v2258 = vsel %vm531, %v2168, %v2248
  %v2259 = vmax.f32 %v2249, 1e-06
  %v2260 = vmax.f32 %v2250, 1e-06
  %v2261 = vmax.f32 %v2251, 1e-06
  %v2262 = vmax.f32 %v2252, 1e-06
  %v2263 = vmax.f32 %v2253, 1e-06
  %v2264 = vmax.f32 %v2254, 1e-06
  %v2265 = vmax.f32 %v2255, 1e-06
  %v2266 = vmax.f32 %v2256, 1e-06
  %v2267 = vmax.f32 %v2257, 1e-06
  %v2268 = vmax.f32 %v2258, 1e-06
  %v2269 = vlog2.pop %v2259
  %v2270 = vmul.f32 %v2269, 0.6931472
  %v2271 = vlog2.pop %v2260
  %v2272 = vmul.f32 %v2271, 0.6931472
  %v2273 = vlog2.pop %v2261
  %v2274 = vmul.f32 %v2273, 0.6931472
  %v2275 = vlog2.pop %v2262
  %v2276 = vmul.f32 %v2275, 0.6931472
  %v2277 = vlog2.pop %v2263
  %v2278 = vmul.f32 %v2277, 0.6931472
  %v2279 = vlog2.pop %v2264
  %v2280 = vmul.f32 %v2279, 0.6931472
  %v2281 = vlog2.pop %v2265
  %v2282 = vmul.f32 %v2281, 0.6931472
  %v2283 = vlog2.pop %v2266
  %v2284 = vmul.f32 %v2283, 0.6931472
  %v2285 = vlog2.pop %v2267
  %v2286 = vmul.f32 %v2285, 0.6931472
  %v2287 = vlog2.pop %v2268
  %v2288 = vmul.f32 %v2287, 0.6931472
  %v2289 = vld [vmem:[%s11] sm:$0xff]
  %v2290 = vld [vmem:[%s11 + $0x8] sm:$0xff]
  %v2291 = vld [vmem:[%s11 + $0x10] sm:$0xff]
  %v2292 = vld [vmem:[%s11 + $0x18] sm:$0xff]
  %v2293 = vld [vmem:[%s11 + $0x20] sm:$0xff]
  %v2294 = vld [vmem:[%s11 + $0x28] sm:$0xff]
  %v2295 = vld [vmem:[%s11 + $0x30] sm:$0xff]
  %v2296 = vld [vmem:[%s11 + $0x38] sm:$0xff]
  %v2297 = vld [vmem:[%s12] sm:$0xf]
  %v2298 = vmul.f32 %v2289, %v1869
  %v2299 = vmul.f32 %v2290, %v1874
  %v2300 = vmul.f32 %v2291, %v1869
  %v2301 = vmul.f32 %v2292, %v1874
  %v2302 = vmul.f32 %v2293, %v1869
  %v2303 = vmul.f32 %v2294, %v1874
  %v2304 = vmul.f32 %v2295, %v1869
  %v2305 = vmul.f32 %v2296, %v1874
  %vm2306 = vcmask 31744
  %v2307 = vsel %vm2306, %v2298, 0.0
  %2308 = vadd.xlane.f32.xlu0 %v2307
  %v2309 = vpop.xlane.xlu0 %2308
  %v2310 = vsel %vm2306, %v2299, 0.0
  %2311 = vadd.xlane.f32.xlu0 %v2310
  %v2312 = vpop.xlane.xlu0 %2311
  %v2313 = vsel %vm2306, %v2300, 0.0
  %2314 = vadd.xlane.f32.xlu0 %v2313
  %v2315 = vpop.xlane.xlu0 %2314
  %v2316 = vsel %vm2306, %v2301, 0.0
  %2317 = vadd.xlane.f32.xlu0 %v2316
  %v2318 = vpop.xlane.xlu0 %2317
  %v2319 = vsel %vm2306, %v2302, 0.0
  %2320 = vadd.xlane.f32.xlu0 %v2319
  %v2321 = vpop.xlane.xlu0 %2320
  %v2322 = vsel %vm2306, %v2303, 0.0
  %2323 = vadd.xlane.f32.xlu0 %v2322
  %v2324 = vpop.xlane.xlu0 %2323
  %v2325 = vsel %vm2306, %v2304, 0.0
  %2326 = vadd.xlane.f32.xlu0 %v2325
  %v2327 = vpop.xlane.xlu0 %2326
  %v2328 = vsel %vm2306, %v2305, 0.0
  %2329 = vadd.xlane.f32.xlu0 %v2328
  %v2330 = vpop.xlane.xlu0 %2329
  %v2339 = vlaneseq
  %v2340 = vand.u32 %v2339, 127
  %v2341 = vlaneseq
  %v2342 = vshrl.u32 %v2341, 7
  %v2343 = vsub.s32 %v2340, %v2342
  %v2344 = vrot.slane %v2309, %v2343
  %v2345 = vadd.s32 %v2340, 4294967288
  %v2346 = vlaneseq
  %v2347 = vshrl.u32 %v2346, 7
  %v2348 = vsub.s32 %v2345, %v2347
  %v2349 = vrot.slane %v2312, %v2348
  %vm2350 = vcmask 130112
  %v2351 = vsel %vm2350, %v2349, %v2344
  %v2352 = vlaneseq
  %v2353 = vshrl.u32 %v2352, 7
  %v2354 = vsub.s32 %v2340, %v2353
  %v2355 = vrot.slane %v2315, %v2354
  %v2356 = vlaneseq
  %v2357 = vshrl.u32 %v2356, 7
  %v2358 = vsub.s32 %v2345, %v2357
  %v2359 = vrot.slane %v2318, %v2358
  %v2360 = vsel %vm2350, %v2359, %v2355
  %v2361 = vlaneseq
  %v2362 = vshrl.u32 %v2361, 7
  %v2363 = vsub.s32 %v2340, %v2362
  %v2364 = vrot.slane %v2321, %v2363
  %v2365 = vlaneseq
  %v2366 = vshrl.u32 %v2365, 7
  %v2367 = vsub.s32 %v2345, %v2366
  %v2368 = vrot.slane %v2324, %v2367
  %v2369 = vsel %vm2350, %v2368, %v2364
  %v2370 = vlaneseq
  %v2371 = vshrl.u32 %v2370, 7
  %v2372 = vsub.s32 %v2340, %v2371
  %v2373 = vrot.slane %v2327, %v2372
  %v2374 = vlaneseq
  %v2375 = vshrl.u32 %v2374, 7
  %v2376 = vsub.s32 %v2345, %v2375
  %v2377 = vrot.slane %v2330, %v2376
  %v2378 = vsel %vm2350, %v2377, %v2373
  %vm2379 = vcmask 1041409
  %v2380 = vsel %vm2379, %v2360, %v2351
  %vm2381 = vcmask 1042434
  %v2382 = vsel %vm2381, %v2369, %v2380
  %vm2383 = vcmask 1043459
  %v2384 = vsel %vm2383, %v2378, %v2382
  %vm2386 = vcmask 125952
  %v2387 = vsel %vm2386, %v2384, 0.0
  %2388 = vadd.xlane.f32.xlu0 %v2387
  %v2389 = vpop.xlane.xlu0 %2388
  %v2390 = vadd.f32 %v2389, %v2297
  %vm2391 = vcmask 3072
  %v2392 = vsel %vm2391, %v2390, -inf
  %v2393 = vrot.slane %v2392, 4
  %v2394 = vmax.f32 %v2392, %v2393
  %v2395 = vrot.slane %v2394, 2
  %v2396 = vmax.f32 %v2394, %v2395
  %v2397 = vrot.slane %v2396, 1
  %v2398 = vmax.f32 %v2396, %v2397
  %v2399 = vsub.f32 %v2390, %v2398
  %v2400 = vmul.f32 %v2399, 1.442695
  %v2401 = vpow.pop %v2400
  %v2402 = vsel %vm2391, %v2401, 0.0
  %v2403 = vrot.slane %v2402, 4
  %v2404 = vadd.f32 %v2402, %v2403
  %v2405 = vrot.slane %v2404, 2
  %v2406 = vadd.f32 %v2404, %v2405
  %v2407 = vrot.slane %v2406, 1
  %v2408 = vadd.f32 %v2406, %v2407
  %v2409 = vlog2.pop %v2408
  %v2410 = vmul.f32 %v2409, 0.6931472
  %v2411 = vsub.f32 %v2399, %v2410
  %v2412 = vld [vmem:[%s13] sm:$0xff]
  %v2413 = vld [vmem:[%s13 + $0x8] sm:$0xff]
  %v2414 = vld [vmem:[%s13 + $0x10] sm:$0xff]
  %v2415 = vld [vmem:[%s13 + $0x18] sm:$0xff]
  %v2416 = vld [vmem:[%s13 + $0x20] sm:$0xff]
  %v2417 = vld [vmem:[%s13 + $0x28] sm:$0xff]
  %v2418 = vld [vmem:[%s13 + $0x30] sm:$0xff]
  %v2419 = vld [vmem:[%s13 + $0x38] sm:$0xff]
  %v2420 = vld [vmem:[%s14] sm:$0xf]
  %v2421 = vmul.f32 %v2412, %v1879
  %v2422 = vmul.f32 %v2413, %v1884
  %v2423 = vmul.f32 %v2414, %v1879
  %v2424 = vmul.f32 %v2415, %v1884
  %v2425 = vmul.f32 %v2416, %v1879
  %v2426 = vmul.f32 %v2417, %v1884
  %v2427 = vmul.f32 %v2418, %v1879
  %v2428 = vmul.f32 %v2419, %v1884
  %v2429 = vsel %vm2306, %v2421, 0.0
  %2430 = vadd.xlane.f32.xlu0 %v2429
  %v2431 = vpop.xlane.xlu0 %2430
  %v2432 = vsel %vm2306, %v2422, 0.0
  %2433 = vadd.xlane.f32.xlu0 %v2432
  %v2434 = vpop.xlane.xlu0 %2433
  %v2435 = vsel %vm2306, %v2423, 0.0
  %2436 = vadd.xlane.f32.xlu0 %v2435
  %v2437 = vpop.xlane.xlu0 %2436
  %v2438 = vsel %vm2306, %v2424, 0.0
  %2439 = vadd.xlane.f32.xlu0 %v2438
  %v2440 = vpop.xlane.xlu0 %2439
  %v2441 = vsel %vm2306, %v2425, 0.0
  %2442 = vadd.xlane.f32.xlu0 %v2441
  %v2443 = vpop.xlane.xlu0 %2442
  %v2444 = vsel %vm2306, %v2426, 0.0
  %2445 = vadd.xlane.f32.xlu0 %v2444
  %v2446 = vpop.xlane.xlu0 %2445
  %v2447 = vsel %vm2306, %v2427, 0.0
  %2448 = vadd.xlane.f32.xlu0 %v2447
  %v2449 = vpop.xlane.xlu0 %2448
  %v2450 = vsel %vm2306, %v2428, 0.0
  %2451 = vadd.xlane.f32.xlu0 %v2450
  %v2452 = vpop.xlane.xlu0 %2451
  %v2461 = vlaneseq
  %v2462 = vshrl.u32 %v2461, 7
  %v2463 = vsub.s32 %v2340, %v2462
  %v2464 = vrot.slane %v2431, %v2463
  %v2465 = vlaneseq
  %v2466 = vshrl.u32 %v2465, 7
  %v2467 = vsub.s32 %v2345, %v2466
  %v2468 = vrot.slane %v2434, %v2467
  %v2469 = vsel %vm2350, %v2468, %v2464
  %v2470 = vlaneseq
  %v2471 = vshrl.u32 %v2470, 7
  %v2472 = vsub.s32 %v2340, %v2471
  %v2473 = vrot.slane %v2437, %v2472
  %v2474 = vlaneseq
  %v2475 = vshrl.u32 %v2474, 7
  %v2476 = vsub.s32 %v2345, %v2475
  %v2477 = vrot.slane %v2440, %v2476
  %v2478 = vsel %vm2350, %v2477, %v2473
  %v2479 = vlaneseq
  %v2480 = vshrl.u32 %v2479, 7
  %v2481 = vsub.s32 %v2340, %v2480
  %v2482 = vrot.slane %v2443, %v2481
  %v2483 = vlaneseq
  %v2484 = vshrl.u32 %v2483, 7
  %v2485 = vsub.s32 %v2345, %v2484
  %v2486 = vrot.slane %v2446, %v2485
  %v2487 = vsel %vm2350, %v2486, %v2482
  %v2488 = vlaneseq
  %v2489 = vshrl.u32 %v2488, 7
  %v2490 = vsub.s32 %v2340, %v2489
  %v2491 = vrot.slane %v2449, %v2490
  %v2492 = vlaneseq
  %v2493 = vshrl.u32 %v2492, 7
  %v2494 = vsub.s32 %v2345, %v2493
  %v2495 = vrot.slane %v2452, %v2494
  %v2496 = vsel %vm2350, %v2495, %v2491
  %v2497 = vsel %vm2379, %v2478, %v2469
  %v2498 = vsel %vm2381, %v2487, %v2497
  %v2499 = vsel %vm2383, %v2496, %v2498
  %v2501 = vsel %vm2386, %v2499, 0.0
  %2502 = vadd.xlane.f32.xlu0 %v2501
  %v2503 = vpop.xlane.xlu0 %2502
  %v2504 = vadd.f32 %v2503, %v2420
  %v2505 = vsel %vm2391, %v2504, -inf
  %v2506 = vrot.slane %v2505, 4
  %v2507 = vmax.f32 %v2505, %v2506
  %v2508 = vrot.slane %v2507, 2
  %v2509 = vmax.f32 %v2507, %v2508
  %v2510 = vrot.slane %v2509, 1
  %v2511 = vmax.f32 %v2509, %v2510
  %v2512 = vsub.f32 %v2504, %v2511
  %v2513 = vmul.f32 %v2512, 1.442695
  %v2514 = vpow.pop %v2513
  %v2515 = vsel %vm2391, %v2514, 0.0
  %v2516 = vrot.slane %v2515, 4
  %v2517 = vadd.f32 %v2515, %v2516
  %v2518 = vrot.slane %v2517, 2
  %v2519 = vadd.f32 %v2517, %v2518
  %v2520 = vrot.slane %v2519, 1
  %v2521 = vadd.f32 %v2519, %v2520
  %v2522 = vlog2.pop %v2521
  %v2523 = vmul.f32 %v2522, 0.6931472
  %v2524 = vsub.f32 %v2512, %v2523
  %v2525 = vld [vmem:[%s15] sm:$0xff]
  %v2526 = vld [vmem:[%s15 + $0x8] sm:$0xff]
  %v2527 = vld [vmem:[%s15 + $0x10] sm:$0xff]
  %v2528 = vld [vmem:[%s15 + $0x18] sm:$0xff]
  %v2529 = vld [vmem:[%s15 + $0x20] sm:$0xff]
  %v2530 = vld [vmem:[%s15 + $0x28] sm:$0xff]
  %v2531 = vld [vmem:[%s15 + $0x30] sm:$0xff]
  %v2532 = vld [vmem:[%s15 + $0x38] sm:$0xff]
  %v2533 = vld [vmem:[%s16] sm:$0xf]
  %v2534 = vmul.f32 %v2525, %v1889
  %v2535 = vmul.f32 %v2526, %v1894
  %v2536 = vmul.f32 %v2527, %v1889
  %v2537 = vmul.f32 %v2528, %v1894
  %v2538 = vmul.f32 %v2529, %v1889
  %v2539 = vmul.f32 %v2530, %v1894
  %v2540 = vmul.f32 %v2531, %v1889
  %v2541 = vmul.f32 %v2532, %v1894
  %v2542 = vsel %vm2306, %v2534, 0.0
  %2543 = vadd.xlane.f32.xlu0 %v2542
  %v2544 = vpop.xlane.xlu0 %2543
  %v2545 = vsel %vm2306, %v2535, 0.0
  %2546 = vadd.xlane.f32.xlu0 %v2545
  %v2547 = vpop.xlane.xlu0 %2546
  %v2548 = vsel %vm2306, %v2536, 0.0
  %2549 = vadd.xlane.f32.xlu0 %v2548
  %v2550 = vpop.xlane.xlu0 %2549
  %v2551 = vsel %vm2306, %v2537, 0.0
  %2552 = vadd.xlane.f32.xlu0 %v2551
  %v2553 = vpop.xlane.xlu0 %2552
  %v2554 = vsel %vm2306, %v2538, 0.0
  %2555 = vadd.xlane.f32.xlu0 %v2554
  %v2556 = vpop.xlane.xlu0 %2555
  %v2557 = vsel %vm2306, %v2539, 0.0
  %2558 = vadd.xlane.f32.xlu0 %v2557
  %v2559 = vpop.xlane.xlu0 %2558
  %v2560 = vsel %vm2306, %v2540, 0.0
  %2561 = vadd.xlane.f32.xlu0 %v2560
  %v2562 = vpop.xlane.xlu0 %2561
  %v2563 = vsel %vm2306, %v2541, 0.0
  %2564 = vadd.xlane.f32.xlu0 %v2563
  %v2565 = vpop.xlane.xlu0 %2564
  %v2574 = vlaneseq
  %v2575 = vshrl.u32 %v2574, 7
  %v2576 = vsub.s32 %v2340, %v2575
  %v2577 = vrot.slane %v2544, %v2576
  %v2578 = vlaneseq
  %v2579 = vshrl.u32 %v2578, 7
  %v2580 = vsub.s32 %v2345, %v2579
  %v2581 = vrot.slane %v2547, %v2580
  %v2582 = vsel %vm2350, %v2581, %v2577
  %v2583 = vlaneseq
  %v2584 = vshrl.u32 %v2583, 7
  %v2585 = vsub.s32 %v2340, %v2584
  %v2586 = vrot.slane %v2550, %v2585
  %v2587 = vlaneseq
  %v2588 = vshrl.u32 %v2587, 7
  %v2589 = vsub.s32 %v2345, %v2588
  %v2590 = vrot.slane %v2553, %v2589
  %v2591 = vsel %vm2350, %v2590, %v2586
  %v2592 = vlaneseq
  %v2593 = vshrl.u32 %v2592, 7
  %v2594 = vsub.s32 %v2340, %v2593
  %v2595 = vrot.slane %v2556, %v2594
  %v2596 = vlaneseq
  %v2597 = vshrl.u32 %v2596, 7
  %v2598 = vsub.s32 %v2345, %v2597
  %v2599 = vrot.slane %v2559, %v2598
  %v2600 = vsel %vm2350, %v2599, %v2595
  %v2601 = vlaneseq
  %v2602 = vshrl.u32 %v2601, 7
  %v2603 = vsub.s32 %v2340, %v2602
  %v2604 = vrot.slane %v2562, %v2603
  %v2605 = vlaneseq
  %v2606 = vshrl.u32 %v2605, 7
  %v2607 = vsub.s32 %v2345, %v2606
  %v2608 = vrot.slane %v2565, %v2607
  %v2609 = vsel %vm2350, %v2608, %v2604
  %v2610 = vsel %vm2379, %v2591, %v2582
  %v2611 = vsel %vm2381, %v2600, %v2610
  %v2612 = vsel %vm2383, %v2609, %v2611
  %v2614 = vsel %vm2386, %v2612, 0.0
  %2615 = vadd.xlane.f32.xlu0 %v2614
  %v2616 = vpop.xlane.xlu0 %2615
  %v2617 = vadd.f32 %v2616, %v2533
  %v2618 = vsel %vm2391, %v2617, -inf
  %v2619 = vrot.slane %v2618, 4
  %v2620 = vmax.f32 %v2618, %v2619
  %v2621 = vrot.slane %v2620, 2
  %v2622 = vmax.f32 %v2620, %v2621
  %v2623 = vrot.slane %v2622, 1
  %v2624 = vmax.f32 %v2622, %v2623
  %v2625 = vsub.f32 %v2617, %v2624
  %v2626 = vmul.f32 %v2625, 1.442695
  %v2627 = vpow.pop %v2626
  %v2628 = vsel %vm2391, %v2627, 0.0
  %v2629 = vrot.slane %v2628, 4
  %v2630 = vadd.f32 %v2628, %v2629
  %v2631 = vrot.slane %v2630, 2
  %v2632 = vadd.f32 %v2630, %v2631
  %v2633 = vrot.slane %v2632, 1
  %v2634 = vadd.f32 %v2632, %v2633
  %v2635 = vlog2.pop %v2634
  %v2636 = vmul.f32 %v2635, 0.6931472
  %v2637 = vsub.f32 %v2625, %v2636
  %v2638 = vld [vmem:[%s17] sm:$0xff]
  %v2639 = vld [vmem:[%s17 + $0x8] sm:$0xff]
  %v2640 = vld [vmem:[%s17 + $0x10] sm:$0xff]
  %v2641 = vld [vmem:[%s17 + $0x18] sm:$0xff]
  %v2642 = vld [vmem:[%s17 + $0x20] sm:$0xff]
  %v2643 = vld [vmem:[%s17 + $0x28] sm:$0xff]
  %v2644 = vld [vmem:[%s17 + $0x30] sm:$0xff]
  %v2645 = vld [vmem:[%s17 + $0x38] sm:$0xff]
  %v2646 = vld [vmem:[%s17 + $0x40] sm:$0xff]
  %v2647 = vld [vmem:[%s17 + $0x48] sm:$0xff]
  %v2648 = vld [vmem:[%s17 + $0x50] sm:$0xff]
  %v2649 = vld [vmem:[%s17 + $0x58] sm:$0xff]
  %v2650 = vld [vmem:[%s17 + $0x60] sm:$0xff]
  %v2651 = vld [vmem:[%s17 + $0x68] sm:$0xff]
  %v2652 = vld [vmem:[%s17 + $0x70] sm:$0xff]
  %v2653 = vld [vmem:[%s17 + $0x78] sm:$0xff]
  %v2654 = vld [vmem:[%s17 + $0x80] sm:$0xff]
  %v2655 = vld [vmem:[%s17 + $0x88] sm:$0xff]
  %v2656 = vld [vmem:[%s17 + $0x90] sm:$0xff]
  %v2657 = vld [vmem:[%s17 + $0x98] sm:$0xff]
  %v2658 = vld [vmem:[%s18] sm:$0xf]
  %v2659 = vmul.f32 %v2638, %v2270
  %v2660 = vmul.f32 %v2639, %v2272
  %v2661 = vmul.f32 %v2640, %v2274
  %v2662 = vmul.f32 %v2641, %v2276
  %v2663 = vmul.f32 %v2642, %v2278
  %v2664 = vmul.f32 %v2643, %v2270
  %v2665 = vmul.f32 %v2644, %v2272
  %v2666 = vmul.f32 %v2645, %v2274
  %v2667 = vmul.f32 %v2646, %v2276
  %v2668 = vmul.f32 %v2647, %v2278
  %v2669 = vmul.f32 %v2648, %v2270
  %v2670 = vmul.f32 %v2649, %v2272
  %v2671 = vmul.f32 %v2650, %v2274
  %v2672 = vmul.f32 %v2651, %v2276
  %v2673 = vmul.f32 %v2652, %v2278
  %v2674 = vmul.f32 %v2653, %v2270
  %v2675 = vmul.f32 %v2654, %v2272
  %v2676 = vmul.f32 %v2655, %v2274
  %v2677 = vmul.f32 %v2656, %v2276
  %v2678 = vmul.f32 %v2657, %v2278
  %vm2679 = vcmask 15360
  %v2680 = vsel %vm2679, %v2659, 0.0
  %2681 = vadd.xlane.f32.xlu0 %v2680
  %v2682 = vpop.xlane.xlu0 %2681
  %v2683 = vsel %vm2679, %v2660, 0.0
  %2684 = vadd.xlane.f32.xlu0 %v2683
  %v2685 = vpop.xlane.xlu0 %2684
  %v2686 = vsel %vm2679, %v2661, 0.0
  %2687 = vadd.xlane.f32.xlu0 %v2686
  %v2688 = vpop.xlane.xlu0 %2687
  %v2689 = vsel %vm2679, %v2662, 0.0
  %2690 = vadd.xlane.f32.xlu0 %v2689
  %v2691 = vpop.xlane.xlu0 %2690
  %v2692 = vsel %vm2679, %v2663, 0.0
  %2693 = vadd.xlane.f32.xlu0 %v2692
  %v2694 = vpop.xlane.xlu0 %2693
  %v2695 = vsel %vm2679, %v2664, 0.0
  %2696 = vadd.xlane.f32.xlu0 %v2695
  %v2697 = vpop.xlane.xlu0 %2696
  %v2698 = vsel %vm2679, %v2665, 0.0
  %2699 = vadd.xlane.f32.xlu0 %v2698
  %v2700 = vpop.xlane.xlu0 %2699
  %v2701 = vsel %vm2679, %v2666, 0.0
  %2702 = vadd.xlane.f32.xlu0 %v2701
  %v2703 = vpop.xlane.xlu0 %2702
  %v2704 = vsel %vm2679, %v2667, 0.0
  %2705 = vadd.xlane.f32.xlu0 %v2704
  %v2706 = vpop.xlane.xlu0 %2705
  %v2707 = vsel %vm2679, %v2668, 0.0
  %2708 = vadd.xlane.f32.xlu0 %v2707
  %v2709 = vpop.xlane.xlu0 %2708
  %v2710 = vsel %vm2679, %v2669, 0.0
  %2711 = vadd.xlane.f32.xlu0 %v2710
  %v2712 = vpop.xlane.xlu0 %2711
  %v2713 = vsel %vm2679, %v2670, 0.0
  %2714 = vadd.xlane.f32.xlu0 %v2713
  %v2715 = vpop.xlane.xlu0 %2714
  %v2716 = vsel %vm2679, %v2671, 0.0
  %2717 = vadd.xlane.f32.xlu0 %v2716
  %v2718 = vpop.xlane.xlu0 %2717
  %v2719 = vsel %vm2679, %v2672, 0.0
  %2720 = vadd.xlane.f32.xlu0 %v2719
  %v2721 = vpop.xlane.xlu0 %2720
  %v2722 = vsel %vm2679, %v2673, 0.0
  %2723 = vadd.xlane.f32.xlu0 %v2722
  %v2724 = vpop.xlane.xlu0 %2723
  %v2725 = vsel %vm2679, %v2674, 0.0
  %2726 = vadd.xlane.f32.xlu0 %v2725
  %v2727 = vpop.xlane.xlu0 %2726
  %v2728 = vsel %vm2679, %v2675, 0.0
  %2729 = vadd.xlane.f32.xlu0 %v2728
  %v2730 = vpop.xlane.xlu0 %2729
  %v2731 = vsel %vm2679, %v2676, 0.0
  %2732 = vadd.xlane.f32.xlu0 %v2731
  %v2733 = vpop.xlane.xlu0 %2732
  %v2734 = vsel %vm2679, %v2677, 0.0
  %2735 = vadd.xlane.f32.xlu0 %v2734
  %v2736 = vpop.xlane.xlu0 %2735
  %v2737 = vsel %vm2679, %v2678, 0.0
  %2738 = vadd.xlane.f32.xlu0 %v2737
  %v2739 = vpop.xlane.xlu0 %2738
  %v2760 = vlaneseq
  %v2761 = vshrl.u32 %v2760, 7
  %v2762 = vsub.s32 %v2340, %v2761
  %v2763 = vrot.slane %v2682, %v2762
  %v2764 = vlaneseq
  %v2765 = vshrl.u32 %v2764, 7
  %v2766 = vsub.s32 %v2345, %v2765
  %v2767 = vrot.slane %v2685, %v2766
  %v2768 = vsel %vm2350, %v2767, %v2763
  %v2769 = vadd.s32 %v2340, 4294967280
  %v2770 = vlaneseq
  %v2771 = vshrl.u32 %v2770, 7
  %v2772 = vsub.s32 %v2769, %v2771
  %v2773 = vrot.slane %v2688, %v2772
  %vm2774 = vcmask 195712
  %v2775 = vsel %vm2774, %v2773, %v2768
  %v2776 = vadd.s32 %v2340, 4294967272
  %v2777 = vlaneseq
  %v2778 = vshrl.u32 %v2777, 7
  %v2779 = vsub.s32 %v2776, %v2778
  %v2780 = vrot.slane %v2691, %v2779
  %vm2781 = vcmask 261312
  %v2782 = vsel %vm2781, %v2780, %v2775
  %v2783 = vadd.s32 %v2340, 4294967264
  %v2784 = vlaneseq
  %v2785 = vshrl.u32 %v2784, 7
  %v2786 = vsub.s32 %v2783, %v2785
  %v2787 = vrot.slane %v2694, %v2786
  %vm2788 = vcmask 326912
  %v2789 = vsel %vm2788, %v2787, %v2782
  %v2790 = vlaneseq
  %v2791 = vshrl.u32 %v2790, 7
  %v2792 = vsub.s32 %v2340, %v2791
  %v2793 = vrot.slane %v2697, %v2792
  %v2794 = vlaneseq
  %v2795 = vshrl.u32 %v2794, 7
  %v2796 = vsub.s32 %v2345, %v2795
  %v2797 = vrot.slane %v2700, %v2796
  %v2798 = vsel %vm2350, %v2797, %v2793
  %v2799 = vlaneseq
  %v2800 = vshrl.u32 %v2799, 7
  %v2801 = vsub.s32 %v2769, %v2800
  %v2802 = vrot.slane %v2703, %v2801
  %v2803 = vsel %vm2774, %v2802, %v2798
  %v2804 = vlaneseq
  %v2805 = vshrl.u32 %v2804, 7
  %v2806 = vsub.s32 %v2776, %v2805
  %v2807 = vrot.slane %v2706, %v2806
  %v2808 = vsel %vm2781, %v2807, %v2803
  %v2809 = vlaneseq
  %v2810 = vshrl.u32 %v2809, 7
  %v2811 = vsub.s32 %v2783, %v2810
  %v2812 = vrot.slane %v2709, %v2811
  %v2813 = vsel %vm2788, %v2812, %v2808
  %v2814 = vlaneseq
  %v2815 = vshrl.u32 %v2814, 7
  %v2816 = vsub.s32 %v2340, %v2815
  %v2817 = vrot.slane %v2712, %v2816
  %v2818 = vlaneseq
  %v2819 = vshrl.u32 %v2818, 7
  %v2820 = vsub.s32 %v2345, %v2819
  %v2821 = vrot.slane %v2715, %v2820
  %v2822 = vsel %vm2350, %v2821, %v2817
  %v2823 = vlaneseq
  %v2824 = vshrl.u32 %v2823, 7
  %v2825 = vsub.s32 %v2769, %v2824
  %v2826 = vrot.slane %v2718, %v2825
  %v2827 = vsel %vm2774, %v2826, %v2822
  %v2828 = vlaneseq
  %v2829 = vshrl.u32 %v2828, 7
  %v2830 = vsub.s32 %v2776, %v2829
  %v2831 = vrot.slane %v2721, %v2830
  %v2832 = vsel %vm2781, %v2831, %v2827
  %v2833 = vlaneseq
  %v2834 = vshrl.u32 %v2833, 7
  %v2835 = vsub.s32 %v2783, %v2834
  %v2836 = vrot.slane %v2724, %v2835
  %v2837 = vsel %vm2788, %v2836, %v2832
  %v2838 = vlaneseq
  %v2839 = vshrl.u32 %v2838, 7
  %v2840 = vsub.s32 %v2340, %v2839
  %v2841 = vrot.slane %v2727, %v2840
  %v2842 = vlaneseq
  %v2843 = vshrl.u32 %v2842, 7
  %v2844 = vsub.s32 %v2345, %v2843
  %v2845 = vrot.slane %v2730, %v2844
  %v2846 = vsel %vm2350, %v2845, %v2841
  %v2847 = vlaneseq
  %v2848 = vshrl.u32 %v2847, 7
  %v2849 = vsub.s32 %v2769, %v2848
  %v2850 = vrot.slane %v2733, %v2849
  %v2851 = vsel %vm2774, %v2850, %v2846
  %v2852 = vlaneseq
  %v2853 = vshrl.u32 %v2852, 7
  %v2854 = vsub.s32 %v2776, %v2853
  %v2855 = vrot.slane %v2736, %v2854
  %v2856 = vsel %vm2781, %v2855, %v2851
  %v2857 = vlaneseq
  %v2858 = vshrl.u32 %v2857, 7
  %v2859 = vsub.s32 %v2783, %v2858
  %v2860 = vrot.slane %v2739, %v2859
  %v2861 = vsel %vm2788, %v2860, %v2856
  %v2862 = vsel %vm2379, %v2813, %v2789
  %v2863 = vsel %vm2381, %v2837, %v2862
  %v2864 = vsel %vm2383, %v2861, %v2863
  %vm2866 = vcmask 322560
  %v2867 = vsel %vm2866, %v2864, 0.0
  %2868 = vadd.xlane.f32.xlu0 %v2867
  %v2869 = vpop.xlane.xlu0 %2868
  %v2870 = vadd.f32 %v2869, %v2658
  %v2871 = vsel %vm2391, %v2870, -inf
  %v2872 = vrot.slane %v2871, 4
  %v2873 = vmax.f32 %v2871, %v2872
  %v2874 = vrot.slane %v2873, 2
  %v2875 = vmax.f32 %v2873, %v2874
  %v2876 = vrot.slane %v2875, 1
  %v2877 = vmax.f32 %v2875, %v2876
  %v2878 = vsub.f32 %v2870, %v2877
  %v2879 = vmul.f32 %v2878, 1.442695
  %v2880 = vpow.pop %v2879
  %v2881 = vsel %vm2391, %v2880, 0.0
  %v2882 = vrot.slane %v2881, 4
  %v2883 = vadd.f32 %v2881, %v2882
  %v2884 = vrot.slane %v2883, 2
  %v2885 = vadd.f32 %v2883, %v2884
  %v2886 = vrot.slane %v2885, 1
  %v2887 = vadd.f32 %v2885, %v2886
  %v2888 = vlog2.pop %v2887
  %v2889 = vmul.f32 %v2888, 0.6931472
  %v2890 = vsub.f32 %v2878, %v2889
  %v2891 = vld [vmem:[%s19] sm:$0xff]
  %v2892 = vld [vmem:[%s19 + $0x8] sm:$0xff]
  %v2893 = vld [vmem:[%s19 + $0x10] sm:$0xff]
  %v2894 = vld [vmem:[%s19 + $0x18] sm:$0xff]
  %v2895 = vld [vmem:[%s19 + $0x20] sm:$0xff]
  %v2896 = vld [vmem:[%s19 + $0x28] sm:$0xff]
  %v2897 = vld [vmem:[%s19 + $0x30] sm:$0xff]
  %v2898 = vld [vmem:[%s19 + $0x38] sm:$0xff]
  %v2899 = vld [vmem:[%s19 + $0x40] sm:$0xff]
  %v2900 = vld [vmem:[%s19 + $0x48] sm:$0xff]
  %v2901 = vld [vmem:[%s19 + $0x50] sm:$0xff]
  %v2902 = vld [vmem:[%s19 + $0x58] sm:$0xff]
  %v2903 = vld [vmem:[%s19 + $0x60] sm:$0xff]
  %v2904 = vld [vmem:[%s19 + $0x68] sm:$0xff]
  %v2905 = vld [vmem:[%s19 + $0x70] sm:$0xff]
  %v2906 = vld [vmem:[%s19 + $0x78] sm:$0xff]
  %v2907 = vld [vmem:[%s19 + $0x80] sm:$0xff]
  %v2908 = vld [vmem:[%s19 + $0x88] sm:$0xff]
  %v2909 = vld [vmem:[%s19 + $0x90] sm:$0xff]
  %v2910 = vld [vmem:[%s19 + $0x98] sm:$0xff]
  %v2911 = vld [vmem:[%s20] sm:$0xf]
  %v2912 = vmul.f32 %v2891, %v2280
  %v2913 = vmul.f32 %v2892, %v2282
  %v2914 = vmul.f32 %v2893, %v2284
  %v2915 = vmul.f32 %v2894, %v2286
  %v2916 = vmul.f32 %v2895, %v2288
  %v2917 = vmul.f32 %v2896, %v2280
  %v2918 = vmul.f32 %v2897, %v2282
  %v2919 = vmul.f32 %v2898, %v2284
  %v2920 = vmul.f32 %v2899, %v2286
  %v2921 = vmul.f32 %v2900, %v2288
  %v2922 = vmul.f32 %v2901, %v2280
  %v2923 = vmul.f32 %v2902, %v2282
  %v2924 = vmul.f32 %v2903, %v2284
  %v2925 = vmul.f32 %v2904, %v2286
  %v2926 = vmul.f32 %v2905, %v2288
  %v2927 = vmul.f32 %v2906, %v2280
  %v2928 = vmul.f32 %v2907, %v2282
  %v2929 = vmul.f32 %v2908, %v2284
  %v2930 = vmul.f32 %v2909, %v2286
  %v2931 = vmul.f32 %v2910, %v2288
  %v2932 = vsel %vm2679, %v2912, 0.0
  %2933 = vadd.xlane.f32.xlu0 %v2932
  %v2934 = vpop.xlane.xlu0 %2933
  %v2935 = vsel %vm2679, %v2913, 0.0
  %2936 = vadd.xlane.f32.xlu0 %v2935
  %v2937 = vpop.xlane.xlu0 %2936
  %v2938 = vsel %vm2679, %v2914, 0.0
  %2939 = vadd.xlane.f32.xlu0 %v2938
  %v2940 = vpop.xlane.xlu0 %2939
  %v2941 = vsel %vm2679, %v2915, 0.0
  %2942 = vadd.xlane.f32.xlu0 %v2941
  %v2943 = vpop.xlane.xlu0 %2942
  %v2944 = vsel %vm2679, %v2916, 0.0
  %2945 = vadd.xlane.f32.xlu0 %v2944
  %v2946 = vpop.xlane.xlu0 %2945
  %v2947 = vsel %vm2679, %v2917, 0.0
  %2948 = vadd.xlane.f32.xlu0 %v2947
  %v2949 = vpop.xlane.xlu0 %2948
  %v2950 = vsel %vm2679, %v2918, 0.0
  %2951 = vadd.xlane.f32.xlu0 %v2950
  %v2952 = vpop.xlane.xlu0 %2951
  %v2953 = vsel %vm2679, %v2919, 0.0
  %2954 = vadd.xlane.f32.xlu0 %v2953
  %v2955 = vpop.xlane.xlu0 %2954
  %v2956 = vsel %vm2679, %v2920, 0.0
  %2957 = vadd.xlane.f32.xlu0 %v2956
  %v2958 = vpop.xlane.xlu0 %2957
  %v2959 = vsel %vm2679, %v2921, 0.0
  %2960 = vadd.xlane.f32.xlu0 %v2959
  %v2961 = vpop.xlane.xlu0 %2960
  %v2962 = vsel %vm2679, %v2922, 0.0
  %2963 = vadd.xlane.f32.xlu0 %v2962
  %v2964 = vpop.xlane.xlu0 %2963
  %v2965 = vsel %vm2679, %v2923, 0.0
  %2966 = vadd.xlane.f32.xlu0 %v2965
  %v2967 = vpop.xlane.xlu0 %2966
  %v2968 = vsel %vm2679, %v2924, 0.0
  %2969 = vadd.xlane.f32.xlu0 %v2968
  %v2970 = vpop.xlane.xlu0 %2969
  %v2971 = vsel %vm2679, %v2925, 0.0
  %2972 = vadd.xlane.f32.xlu0 %v2971
  %v2973 = vpop.xlane.xlu0 %2972
  %v2974 = vsel %vm2679, %v2926, 0.0
  %2975 = vadd.xlane.f32.xlu0 %v2974
  %v2976 = vpop.xlane.xlu0 %2975
  %v2977 = vsel %vm2679, %v2927, 0.0
  %2978 = vadd.xlane.f32.xlu0 %v2977
  %v2979 = vpop.xlane.xlu0 %2978
  %v2980 = vsel %vm2679, %v2928, 0.0
  %2981 = vadd.xlane.f32.xlu0 %v2980
  %v2982 = vpop.xlane.xlu0 %2981
  %v2983 = vsel %vm2679, %v2929, 0.0
  %2984 = vadd.xlane.f32.xlu0 %v2983
  %v2985 = vpop.xlane.xlu0 %2984
  %v2986 = vsel %vm2679, %v2930, 0.0
  %2987 = vadd.xlane.f32.xlu0 %v2986
  %v2988 = vpop.xlane.xlu0 %2987
  %v2989 = vsel %vm2679, %v2931, 0.0
  %2990 = vadd.xlane.f32.xlu0 %v2989
  %v2991 = vpop.xlane.xlu0 %2990
  %v3012 = vlaneseq
  %v3013 = vshrl.u32 %v3012, 7
  %v3014 = vsub.s32 %v2340, %v3013
  %v3015 = vrot.slane %v2934, %v3014
  %v3016 = vlaneseq
  %v3017 = vshrl.u32 %v3016, 7
  %v3018 = vsub.s32 %v2345, %v3017
  %v3019 = vrot.slane %v2937, %v3018
  %v3020 = vsel %vm2350, %v3019, %v3015
  %v3021 = vlaneseq
  %v3022 = vshrl.u32 %v3021, 7
  %v3023 = vsub.s32 %v2769, %v3022
  %v3024 = vrot.slane %v2940, %v3023
  %v3025 = vsel %vm2774, %v3024, %v3020
  %v3026 = vlaneseq
  %v3027 = vshrl.u32 %v3026, 7
  %v3028 = vsub.s32 %v2776, %v3027
  %v3029 = vrot.slane %v2943, %v3028
  %v3030 = vsel %vm2781, %v3029, %v3025
  %v3031 = vlaneseq
  %v3032 = vshrl.u32 %v3031, 7
  %v3033 = vsub.s32 %v2783, %v3032
  %v3034 = vrot.slane %v2946, %v3033
  %v3035 = vsel %vm2788, %v3034, %v3030
  %v3036 = vlaneseq
  %v3037 = vshrl.u32 %v3036, 7
  %v3038 = vsub.s32 %v2340, %v3037
  %v3039 = vrot.slane %v2949, %v3038
  %v3040 = vlaneseq
  %v3041 = vshrl.u32 %v3040, 7
  %v3042 = vsub.s32 %v2345, %v3041
  %v3043 = vrot.slane %v2952, %v3042
  %v3044 = vsel %vm2350, %v3043, %v3039
  %v3045 = vlaneseq
  %v3046 = vshrl.u32 %v3045, 7
  %v3047 = vsub.s32 %v2769, %v3046
  %v3048 = vrot.slane %v2955, %v3047
  %v3049 = vsel %vm2774, %v3048, %v3044
  %v3050 = vlaneseq
  %v3051 = vshrl.u32 %v3050, 7
  %v3052 = vsub.s32 %v2776, %v3051
  %v3053 = vrot.slane %v2958, %v3052
  %v3054 = vsel %vm2781, %v3053, %v3049
  %v3055 = vlaneseq
  %v3056 = vshrl.u32 %v3055, 7
  %v3057 = vsub.s32 %v2783, %v3056
  %v3058 = vrot.slane %v2961, %v3057
  %v3059 = vsel %vm2788, %v3058, %v3054
  %v3060 = vlaneseq
  %v3061 = vshrl.u32 %v3060, 7
  %v3062 = vsub.s32 %v2340, %v3061
  %v3063 = vrot.slane %v2964, %v3062
  %v3064 = vlaneseq
  %v3065 = vshrl.u32 %v3064, 7
  %v3066 = vsub.s32 %v2345, %v3065
  %v3067 = vrot.slane %v2967, %v3066
  %v3068 = vsel %vm2350, %v3067, %v3063
  %v3069 = vlaneseq
  %v3070 = vshrl.u32 %v3069, 7
  %v3071 = vsub.s32 %v2769, %v3070
  %v3072 = vrot.slane %v2970, %v3071
  %v3073 = vsel %vm2774, %v3072, %v3068
  %v3074 = vlaneseq
  %v3075 = vshrl.u32 %v3074, 7
  %v3076 = vsub.s32 %v2776, %v3075
  %v3077 = vrot.slane %v2973, %v3076
  %v3078 = vsel %vm2781, %v3077, %v3073
  %v3079 = vlaneseq
  %v3080 = vshrl.u32 %v3079, 7
  %v3081 = vsub.s32 %v2783, %v3080
  %v3082 = vrot.slane %v2976, %v3081
  %v3083 = vsel %vm2788, %v3082, %v3078
  %v3084 = vlaneseq
  %v3085 = vshrl.u32 %v3084, 7
  %v3086 = vsub.s32 %v2340, %v3085
  %v3087 = vrot.slane %v2979, %v3086
  %v3088 = vlaneseq
  %v3089 = vshrl.u32 %v3088, 7
  %v3090 = vsub.s32 %v2345, %v3089
  %v3091 = vrot.slane %v2982, %v3090
  %v3092 = vsel %vm2350, %v3091, %v3087
  %v3093 = vlaneseq
  %v3094 = vshrl.u32 %v3093, 7
  %v3095 = vsub.s32 %v2769, %v3094
  %v3096 = vrot.slane %v2985, %v3095
  %v3097 = vsel %vm2774, %v3096, %v3092
  %v3098 = vlaneseq
  %v3099 = vshrl.u32 %v3098, 7
  %v3100 = vsub.s32 %v2776, %v3099
  %v3101 = vrot.slane %v2988, %v3100
  %v3102 = vsel %vm2781, %v3101, %v3097
  %v3103 = vlaneseq
  %v3104 = vshrl.u32 %v3103, 7
  %v3105 = vsub.s32 %v2783, %v3104
  %v3106 = vrot.slane %v2991, %v3105
  %v3107 = vsel %vm2788, %v3106, %v3102
  %v3108 = vsel %vm2379, %v3059, %v3035
  %v3109 = vsel %vm2381, %v3083, %v3108
  %v3110 = vsel %vm2383, %v3107, %v3109
  %v3112 = vsel %vm2866, %v3110, 0.0
  %3113 = vadd.xlane.f32.xlu0 %v3112
  %v3114 = vpop.xlane.xlu0 %3113
  %v3115 = vadd.f32 %v3114, %v2911
  %v3116 = vsel %vm2391, %v3115, -inf
  %v3117 = vrot.slane %v3116, 4
  %v3118 = vmax.f32 %v3116, %v3117
  %v3119 = vrot.slane %v3118, 2
  %v3120 = vmax.f32 %v3118, %v3119
  %v3121 = vrot.slane %v3120, 1
  %v3122 = vmax.f32 %v3120, %v3121
  %v3123 = vsub.f32 %v3115, %v3122
  %v3124 = vmul.f32 %v3123, 1.442695
  %v3125 = vpow.pop %v3124
  %v3126 = vsel %vm2391, %v3125, 0.0
  %v3127 = vrot.slane %v3126, 4
  %v3128 = vadd.f32 %v3126, %v3127
  %v3129 = vrot.slane %v3128, 2
  %v3130 = vadd.f32 %v3128, %v3129
  %v3131 = vrot.slane %v3130, 1
  %v3132 = vadd.f32 %v3130, %v3131
  %v3133 = vlog2.pop %v3132
  %v3134 = vmul.f32 %v3133, 0.6931472
  %v3135 = vsub.f32 %v3123, %v3134
  %v3136 = vsel %vm2391, %v2411, -inf
  %v3137 = vrot.slane %v3136, 4
  %v3138 = vmax.f32 %v3136, %v3137
  %v3139 = vrot.slane %v3138, 2
  %v3140 = vmax.f32 %v3138, %v3139
  %v3141 = vrot.slane %v3140, 1
  %v3142 = vmax.f32 %v3140, %v3141
  %v3143 = vsub.f32 %v2411, %v3142
  %v3144 = vmul.f32 %v3143, 1.442695
  %v3145 = vpow.pop %v3144
  %v3146 = vsel %vm2391, %v3145, 0.0
  %v3147 = vrot.slane %v3146, 4
  %v3148 = vadd.f32 %v3146, %v3147
  %v3149 = vrot.slane %v3148, 2
  %v3150 = vadd.f32 %v3148, %v3149
  %v3151 = vrot.slane %v3150, 1
  %v3152 = vadd.f32 %v3150, %v3151
  %v3153 = vrcp.pop %v3152
  %v3154 = vmul.f32 %v3145, %v3153
  %3156 = vrot.lane.b32.xlu0 %v2890, 1
  %v3157 = vpop.permute.xlu0 %3156
  %3160 = vrot.lane.b32.xlu0 %v2637, 2
  %v3161 = vpop.permute.xlu0 %3160
  %3164 = vrot.lane.b32.xlu0 %v3135, 3
  %v3165 = vpop.permute.xlu0 %3164
  %v3167 = vsel %vm531, %v2524, %v3157
  %v3168 = vsel %vm2679, %v3167, %v3161
  %vm3169 = vcmask 23552
  %v3170 = vsel %vm3169, %v3168, %v3165
  %v3172 = vsel %vm2306, %v3170, 0
  %vm3174 = vcmask 1043456
  %v3176 = vsel %vm3174, %v3154, 0
  %3178 = vmatprep.subr.mxu0 0.0
  %3179 = vmatpush1.msra.mxu0 %v3176
  %3180 = vmatprep.subr.mxu0 0.0
  %3181 = vmatpush1.msra.mxu0 0.0
  %3182 = vmatprep.subr.mxu0 0.0
  %3183 = vmatpush1.msra.mxu0 0.0
  %3184 = vmatprep.subr.mxu0 0.0
  %3185 = vmatpush1.msra.mxu0 0.0
  %3186 = vmatprep.subr.mxu0 0.0
  %3187 = vmatpush1.msra.mxu0 0.0
  %3188 = vmatprep.subr.mxu0 0.0
  %3189 = vmatpush1.msra.mxu0 0.0
  %3190 = vmatprep.subr.mxu0 0.0
  %3191 = vmatpush1.msra.mxu0 0.0
  %3192 = vmatprep.subr.mxu0 0.0
  %3193 = vmatpush1.msra.mxu0 0.0
  %3194 = vmatprep.subr.mxu0 0.0
  %3195 = vmatpush1.msra.mxu0 0.0
  %3196 = vmatprep.subr.mxu0 0.0
  %3197 = vmatpush1.msra.mxu0 0.0
  %3198 = vmatprep.subr.mxu0 0.0
  %3199 = vmatpush1.msra.mxu0 0.0
  %3200 = vmatprep.subr.mxu0 0.0
  %3201 = vmatpush1.msra.mxu0 0.0
  %3202 = vmatprep.subr.mxu0 0.0
  %3203 = vmatpush1.msra.mxu0 0.0
  %3204 = vmatprep.subr.mxu0 0.0
  %3205 = vmatpush1.msra.mxu0 0.0
  %3206 = vmatprep.subr.mxu0 0.0
  %3207 = vmatpush1.msra.mxu0 0.0
  %3208 = vmatprep.subr.mxu0 0.0
  %3209 = vmatpush1.msra.mxu0 0.0
  %3210 = vmatprep.subr.mxu0 0.0
  %3211 = vmatpush1.msra.mxu0 0.0
  %3212 = vmatprep.subr.mxu0 0.0
  %3213 = vmatpush1.msra.mxu0 0.0
  %3214 = vmatprep.subr.mxu0 0.0
  %3215 = vmatpush1.msra.mxu0 0.0
  %3216 = vmatprep.subr.mxu0 0.0
  %3217 = vmatpush1.msra.mxu0 0.0
  %3218 = vmatprep.subr.mxu0 0.0
  %3219 = vmatpush1.msra.mxu0 0.0
  %3220 = vmatprep.subr.mxu0 0.0
  %3221 = vmatpush1.msra.mxu0 0.0
  %3222 = vmatprep.subr.mxu0 0.0
  %3223 = vmatpush1.msra.mxu0 0.0
  %3224 = vmatprep.subr.mxu0 0.0
  %3225 = vmatpush1.msra.mxu0 0.0
  %3226 = vmatprep.subr.mxu0 0.0
  %3227 = vmatpush1.msra.mxu0 0.0
  %3228 = vmatprep.subr.mxu0 0.0
  %3229 = vmatpush1.msra.mxu0 0.0
  %3230 = vmatprep.subr.mxu0 0.0
  %3231 = vmatpush1.msra.mxu0 0.0
  %3232 = vmatprep.subr.mxu0 0.0
  %3233 = vmatpush1.msra.mxu0 0.0
  %3234 = vmatprep.subr.mxu0 0.0
  %3235 = vmatpush1.msra.mxu0 0.0
  %3236 = vmatprep.subr.mxu0 0.0
  %3237 = vmatpush1.msra.mxu0 0.0
  %3238 = vmatprep.subr.mxu0 0.0
  %3239 = vmatpush1.msra.mxu0 0.0
  %3240 = vmatprep.subr.mxu0 0.0
  %3241 = vmatpush1.msra.mxu0 0.0
  %3242 = vmatprep.mubr.f32.mxu0 0.0
  %3243 = vmatmul.mubr.f32.gmra.mrb[0].mxu0 %v3172
  %v3244 = vpop.f32.mrb[0].mxu0
  %v3245 = vadd.f32 0.0, %v3244
  %v3246 = vpop.f32.mrb[0].mxu0
  %3247 = vdwg.mxu0
  %s3248 = scalar_lea.vmem %s0, 256
  %v3249 = vld [vmem:[%s3248] sm:$0xff]
  %v3250 = vld [vmem:[%s3248 + $0x8] sm:$0xff]
  %v3251 = vld [vmem:[%s3248 + $0x10] sm:$0xff]
  %v3252 = vld [vmem:[%s3248 + $0x18] sm:$0xff]
  %v3253 = vld [vmem:[%s3248 + $0x20] sm:$0xff]
  %v3254 = vld [vmem:[%s3248 + $0x28] sm:$0xff]
  %v3255 = vld [vmem:[%s3248 + $0x30] sm:$0xff]
  %v3256 = vld [vmem:[%s3248 + $0x38] sm:$0xff]
  %v3257 = vld [vmem:[%s3248 + $0x40] sm:$0xff]
  %v3258 = vld [vmem:[%s3248 + $0x48] sm:$0xff]
  %v3259 = vld [vmem:[%s3248 + $0x50] sm:$0xff]
  %v3260 = vld [vmem:[%s3248 + $0x58] sm:$0xff]
  %v3261 = vld [vmem:[%s3248 + $0x60] sm:$0xff]
  %v3262 = vld [vmem:[%s3248 + $0x68] sm:$0xff]
  %v3263 = vld [vmem:[%s3248 + $0x70] sm:$0xff]
  %v3264 = vld [vmem:[%s3248 + $0x78] sm:$0xff]
  %v3265 = vld [vmem:[%s3248 + $0x80] sm:$0xff]
  %v3266 = vld [vmem:[%s3248 + $0x88] sm:$0xff]
  %v3267 = vld [vmem:[%s3248 + $0x90] sm:$0xff]
  %v3268 = vld [vmem:[%s3248 + $0x98] sm:$0xff]
  %v3269 = vld [vmem:[%s3248 + $0xa0] sm:$0xff]
  %v3270 = vld [vmem:[%s3248 + $0xa8] sm:$0xff]
  %v3271 = vld [vmem:[%s3248 + $0xb0] sm:$0xff]
  %v3272 = vld [vmem:[%s3248 + $0xb8] sm:$0xff]
  %v3273 = vld [vmem:[%s3248 + $0xc0] sm:$0xff]
  %v3274 = vld [vmem:[%s3248 + $0xc8] sm:$0xff]
  %v3275 = vld [vmem:[%s3248 + $0xd0] sm:$0xff]
  %v3276 = vld [vmem:[%s3248 + $0xd8] sm:$0xff]
  %v3277 = vld [vmem:[%s3248 + $0xe0] sm:$0xff]
  %v3278 = vld [vmem:[%s3248 + $0xe8] sm:$0xff]
  %v3279 = vld [vmem:[%s3248 + $0xf0] sm:$0xff]
  %v3280 = vld [vmem:[%s3248 + $0xf8] sm:$0xff]
  %v3313 = vunpack.c.l.b16 %v3249
  %v3314 = vunpack.c.h.b16 %v3249
  %v3315 = vunpack.c.l.b16 %v3250
  %v3316 = vunpack.c.h.b16 %v3250
  %v3317 = vunpack.c.l.b16 %v3251
  %v3318 = vunpack.c.h.b16 %v3251
  %v3319 = vunpack.c.l.b16 %v3252
  %v3320 = vunpack.c.h.b16 %v3252
  %v3321 = vunpack.c.l.b16 %v3253
  %v3322 = vunpack.c.h.b16 %v3253
  %v3323 = vunpack.c.l.b16 %v3254
  %v3324 = vunpack.c.h.b16 %v3254
  %v3325 = vunpack.c.l.b16 %v3255
  %v3326 = vunpack.c.h.b16 %v3255
  %v3327 = vunpack.c.l.b16 %v3256
  %v3328 = vunpack.c.h.b16 %v3256
  %v3329 = vunpack.c.l.b16 %v3257
  %v3330 = vunpack.c.h.b16 %v3257
  %v3331 = vunpack.c.l.b16 %v3258
  %v3332 = vunpack.c.h.b16 %v3258
  %v3333 = vunpack.c.l.b16 %v3259
  %v3334 = vunpack.c.h.b16 %v3259
  %v3335 = vunpack.c.l.b16 %v3260
  %v3336 = vunpack.c.h.b16 %v3260
  %v3337 = vunpack.c.l.b16 %v3261
  %v3338 = vunpack.c.h.b16 %v3261
  %v3339 = vunpack.c.l.b16 %v3262
  %v3340 = vunpack.c.h.b16 %v3262
  %v3341 = vunpack.c.l.b16 %v3263
  %v3342 = vunpack.c.h.b16 %v3263
  %v3343 = vunpack.c.l.b16 %v3264
  %v3344 = vunpack.c.h.b16 %v3264
  %v3345 = vunpack.c.l.b16 %v3265
  %v3346 = vunpack.c.h.b16 %v3265
  %v3347 = vunpack.c.l.b16 %v3266
  %v3348 = vunpack.c.h.b16 %v3266
  %v3349 = vunpack.c.l.b16 %v3267
  %v3350 = vunpack.c.h.b16 %v3267
  %v3351 = vunpack.c.l.b16 %v3268
  %v3352 = vunpack.c.h.b16 %v3268
  %v3353 = vunpack.c.l.b16 %v3269
  %v3354 = vunpack.c.h.b16 %v3269
  %v3355 = vunpack.c.l.b16 %v3270
  %v3356 = vunpack.c.h.b16 %v3270
  %v3357 = vunpack.c.l.b16 %v3271
  %v3358 = vunpack.c.h.b16 %v3271
  %v3359 = vunpack.c.l.b16 %v3272
  %v3360 = vunpack.c.h.b16 %v3272
  %v3361 = vunpack.c.l.b16 %v3273
  %v3362 = vunpack.c.h.b16 %v3273
  %v3363 = vunpack.c.l.b16 %v3274
  %v3364 = vunpack.c.h.b16 %v3274
  %v3365 = vunpack.c.l.b16 %v3275
  %v3366 = vunpack.c.h.b16 %v3275
  %v3367 = vunpack.c.l.b16 %v3276
  %v3368 = vunpack.c.h.b16 %v3276
  %v3369 = vunpack.c.l.b16 %v3277
  %v3370 = vunpack.c.h.b16 %v3277
  %v3371 = vunpack.c.l.b16 %v3278
  %v3372 = vunpack.c.h.b16 %v3278
  %v3373 = vunpack.c.l.b16 %v3279
  %v3374 = vunpack.c.h.b16 %v3279
  %v3375 = vunpack.c.l.b16 %v3280
  %v3376 = vunpack.c.h.b16 %v3280
  %v3377 = vpack.c.b16 %v3315, %v3313
  %v3378 = vpack.c.b16 %v3316, %v3314
  %v3379 = vpack.c.b16 %v3319, %v3317
  %v3380 = vpack.c.b16 %v3320, %v3318
  %v3381 = vpack.c.b16 %v3323, %v3321
  %v3382 = vpack.c.b16 %v3324, %v3322
  %v3383 = vpack.c.b16 %v3327, %v3325
  %v3384 = vpack.c.b16 %v3328, %v3326
  %v3385 = vpack.c.b16 %v3331, %v3329
  %v3386 = vpack.c.b16 %v3332, %v3330
  %v3387 = vpack.c.b16 %v3335, %v3333
  %v3388 = vpack.c.b16 %v3336, %v3334
  %v3389 = vpack.c.b16 %v3339, %v3337
  %v3390 = vpack.c.b16 %v3340, %v3338
  %v3391 = vpack.c.b16 %v3343, %v3341
  %v3392 = vpack.c.b16 %v3344, %v3342
  %v3393 = vpack.c.b16 %v3347, %v3345
  %v3394 = vpack.c.b16 %v3348, %v3346
  %v3395 = vpack.c.b16 %v3351, %v3349
  %v3396 = vpack.c.b16 %v3352, %v3350
  %v3397 = vpack.c.b16 %v3355, %v3353
  %v3398 = vpack.c.b16 %v3356, %v3354
  %v3399 = vpack.c.b16 %v3359, %v3357
  %v3400 = vpack.c.b16 %v3360, %v3358
  %v3401 = vpack.c.b16 %v3363, %v3361
  %v3402 = vpack.c.b16 %v3364, %v3362
  %v3403 = vpack.c.b16 %v3367, %v3365
  %v3404 = vpack.c.b16 %v3368, %v3366
  %v3405 = vpack.c.b16 %v3371, %v3369
  %v3406 = vpack.c.b16 %v3372, %v3370
  %v3407 = vpack.c.b16 %v3375, %v3373
  %v3408 = vpack.c.b16 %v3376, %v3374
  %3441 = vmatprep.subr.bf16.mxu0 %v3378
  %3442 = vmatpush1.bf16.msra.mxu0 %v3377
  %3443 = vmatprep.subr.bf16.mxu0 %v3380
  %3444 = vmatpush1.bf16.msra.mxu0 %v3379
  %3445 = vmatprep.subr.bf16.mxu0 %v3382
  %3446 = vmatpush1.bf16.msra.mxu0 %v3381
  %3447 = vmatprep.subr.bf16.mxu0 %v3384
  %3448 = vmatpush1.bf16.msra.mxu0 %v3383
  %3449 = vmatprep.subr.bf16.mxu0 %v3386
  %3450 = vmatpush1.bf16.msra.mxu0 %v3385
  %3451 = vmatprep.subr.bf16.mxu0 %v3388
  %3452 = vmatpush1.bf16.msra.mxu0 %v3387
  %3453 = vmatprep.subr.bf16.mxu0 %v3390
  %3454 = vmatpush1.bf16.msra.mxu0 %v3389
  %3455 = vmatprep.subr.bf16.mxu0 %v3392
  %3456 = vmatpush1.bf16.msra.mxu0 %v3391
  %3457 = vmatprep.subr.bf16.mxu0 %v3394
  %3458 = vmatpush1.bf16.msra.mxu0 %v3393
  %3459 = vmatprep.subr.bf16.mxu0 %v3396
  %3460 = vmatpush1.bf16.msra.mxu0 %v3395
  %3461 = vmatprep.subr.bf16.mxu0 %v3398
  %3462 = vmatpush1.bf16.msra.mxu0 %v3397
  %3463 = vmatprep.subr.bf16.mxu0 %v3400
  %3464 = vmatpush1.bf16.msra.mxu0 %v3399
  %3465 = vmatprep.subr.bf16.mxu0 %v3402
  %3466 = vmatpush1.bf16.msra.mxu0 %v3401
  %3467 = vmatprep.subr.bf16.mxu0 %v3404
  %3468 = vmatpush1.bf16.msra.mxu0 %v3403
  %3469 = vmatprep.subr.bf16.mxu0 %v3406
  %3470 = vmatpush1.bf16.msra.mxu0 %v3405
  %3471 = vmatprep.subr.bf16.mxu0 %v3408
  %3472 = vmatpush1.bf16.msra.mxu0 %v3407
  %3473 = vmatprep.mubr.bf16.mxu0 %v225
  %3474 = vmatmul.mubr.bf16.gmra.mrb[0].mxu0 %v224
  %v3475 = vpop.f32.mrb[0].mxu0
  %v3476 = vadd.f32 %v179, %v3475
  %v3477 = vpop.f32.mrb[0].mxu0
  %v3478 = vadd.f32 %v179, %v3477
  %v3479 = vpop.f32.mrb[0].mxu0
  %v3480 = vadd.f32 %v184, %v3479
  %v3481 = vpop.f32.mrb[0].mxu0
  %v3482 = vadd.f32 %v184, %v3481
  %3483 = vmatprep.mubr.bf16.mxu0 %v227
  %3484 = vmatmul.mubr.bf16.gmra.mrb[0].mxu0 %v226
  %v3485 = vpop.f32.mrb[0].mxu0
  %v3486 = vadd.f32 %v189, %v3485
  %v3487 = vpop.f32.mrb[0].mxu0
  %v3488 = vadd.f32 %v189, %v3487
  %v3489 = vpop.f32.mrb[0].mxu0
  %v3490 = vadd.f32 %v194, %v3489
  %v3491 = vpop.f32.mrb[0].mxu0
  %v3492 = vadd.f32 %v194, %v3491
  %3493 = vmatprep.mubr.bf16.mxu0 %v229
  %3494 = vmatmul.mubr.bf16.gmra.mrb[0].mxu0 %v228
  %v3495 = vpop.f32.mrb[0].mxu0
  %v3496 = vadd.f32 %v199, %v3495
  %v3497 = vpop.f32.mrb[0].mxu0
  %v3498 = vadd.f32 %v199, %v3497
  %v3499 = vpop.f32.mrb[0].mxu0
  %v3500 = vadd.f32 %v204, %v3499
  %v3501 = vpop.f32.mrb[0].mxu0
  %v3502 = vadd.f32 %v204, %v3501
  %3503 = vdwg.mxu0
  %vm3504 = vcmp.gt.f32.partialorder %v3476, 0.0
  %vm3505 = vcmp.gt.f32.partialorder %v3478, 0.0
  %vm3506 = vcmp.gt.f32.partialorder %v3480, 0.0
  %vm3507 = vcmp.gt.f32.partialorder %v3482, 0.0
  %vm3508 = vcmp.gt.f32.partialorder %v3486, 0.0
  %vm3509 = vcmp.gt.f32.partialorder %v3488, 0.0
  %vm3510 = vcmp.gt.f32.partialorder %v3490, 0.0
  %vm3511 = vcmp.gt.f32.partialorder %v3492, 0.0
  %vm3512 = vcmp.gt.f32.partialorder %v3496, 0.0
  %vm3513 = vcmp.gt.f32.partialorder %v3498, 0.0
  %vm3514 = vcmp.gt.f32.partialorder %v3500, 0.0
  %vm3515 = vcmp.gt.f32.partialorder %v3502, 0.0
  %v3516 = vmin.f32 %v3476, 0.0
  %v3517 = vmin.f32 %v3478, 0.0
  %v3518 = vmin.f32 %v3480, 0.0
  %v3519 = vmin.f32 %v3482, 0.0
  %v3520 = vmin.f32 %v3486, 0.0
  %v3521 = vmin.f32 %v3488, 0.0
  %v3522 = vmin.f32 %v3490, 0.0
  %v3523 = vmin.f32 %v3492, 0.0
  %v3524 = vmin.f32 %v3496, 0.0
  %v3525 = vmin.f32 %v3498, 0.0
  %v3526 = vmin.f32 %v3500, 0.0
  %v3527 = vmin.f32 %v3502, 0.0
  %v3528 = vmul.f32 %v3516, 1.442695
  %v3529 = vpow.pop %v3528
  %v3530 = vmul.f32 %v3517, 1.442695
  %v3531 = vpow.pop %v3530
  %v3532 = vmul.f32 %v3518, 1.442695
  %v3533 = vpow.pop %v3532
  %v3534 = vmul.f32 %v3519, 1.442695
  %v3535 = vpow.pop %v3534
  %v3536 = vmul.f32 %v3520, 1.442695
  %v3537 = vpow.pop %v3536
  %v3538 = vmul.f32 %v3521, 1.442695
  %v3539 = vpow.pop %v3538
  %v3540 = vmul.f32 %v3522, 1.442695
  %v3541 = vpow.pop %v3540
  %v3542 = vmul.f32 %v3523, 1.442695
  %v3543 = vpow.pop %v3542
  %v3544 = vmul.f32 %v3524, 1.442695
  %v3545 = vpow.pop %v3544
  %v3546 = vmul.f32 %v3525, 1.442695
  %v3547 = vpow.pop %v3546
  %v3548 = vmul.f32 %v3526, 1.442695
  %v3549 = vpow.pop %v3548
  %v3550 = vmul.f32 %v3527, 1.442695
  %v3551 = vpow.pop %v3550
  %v3552 = vsub.f32 %v3529, 1.0
  %v3553 = vsub.f32 %v3531, 1.0
  %v3554 = vsub.f32 %v3533, 1.0
  %v3555 = vsub.f32 %v3535, 1.0
  %v3556 = vsub.f32 %v3537, 1.0
  %v3557 = vsub.f32 %v3539, 1.0
  %v3558 = vsub.f32 %v3541, 1.0
  %v3559 = vsub.f32 %v3543, 1.0
  %v3560 = vsub.f32 %v3545, 1.0
  %v3561 = vsub.f32 %v3547, 1.0
  %v3562 = vsub.f32 %v3549, 1.0
  %v3563 = vsub.f32 %v3551, 1.0
  %v3564 = vsel %vm3504, %v3476, %v3552
  %v3565 = vsel %vm3505, %v3478, %v3553
  %v3566 = vsel %vm3506, %v3480, %v3554
  %v3567 = vsel %vm3507, %v3482, %v3555
  %v3568 = vsel %vm3508, %v3486, %v3556
  %v3569 = vsel %vm3509, %v3488, %v3557
  %v3570 = vsel %vm3510, %v3490, %v3558
  %v3571 = vsel %vm3511, %v3492, %v3559
  %v3572 = vsel %vm3512, %v3496, %v3560
  %v3573 = vsel %vm3513, %v3498, %v3561
  %v3574 = vsel %vm3514, %v3500, %v3562
  %v3575 = vsel %vm3515, %v3502, %v3563
  %v3577 = vsel %vm531, %v3565, 0
  %v3580 = vsel %vm531, %v3567, 0
  %v3583 = vsel %vm531, %v3569, 0
  %v3586 = vsel %vm531, %v3571, 0
  %v3589 = vsel %vm531, %v3573, 0
  %v3592 = vsel %vm531, %v3575, 0
  %3594 = vmatprep.subr.mxu0 0.0
  %3595 = vmatpush1.msra.mxu0 %v122
  %3596 = vmatprep.subr.mxu0 0.0
  %3597 = vmatpush1.msra.mxu0 %v123
  %3598 = vmatprep.subr.mxu0 0.0
  %3599 = vmatpush1.msra.mxu0 %v124
  %3600 = vmatprep.subr.mxu0 0.0
  %3601 = vmatpush1.msra.mxu0 %v125
  %3602 = vmatprep.subr.mxu0 0.0
  %3603 = vmatpush1.msra.mxu0 %v126
  %3604 = vmatprep.subr.mxu0 0.0
  %3605 = vmatpush1.msra.mxu0 %v127
  %3606 = vmatprep.subr.mxu0 0.0
  %3607 = vmatpush1.msra.mxu0 %v128
  %3608 = vmatprep.subr.mxu0 0.0
  %3609 = vmatpush1.msra.mxu0 %v129
  %3610 = vmatprep.subr.mxu0 0.0
  %3611 = vmatpush1.msra.mxu0 %v130
  %3612 = vmatprep.subr.mxu0 0.0
  %3613 = vmatpush1.msra.mxu0 %v131
  %3614 = vmatprep.subr.mxu0 0.0
  %3615 = vmatpush1.msra.mxu0 %v132
  %3616 = vmatprep.subr.mxu0 0.0
  %3617 = vmatpush1.msra.mxu0 %v133
  %3618 = vmatprep.subr.mxu0 0.0
  %3619 = vmatpush1.msra.mxu0 %v134
  %3620 = vmatprep.subr.mxu0 0.0
  %3621 = vmatpush1.msra.mxu0 %v135
  %3622 = vmatprep.subr.mxu0 0.0
  %3623 = vmatpush1.msra.mxu0 %v136
  %3624 = vmatprep.subr.mxu0 0.0
  %3625 = vmatpush1.msra.mxu0 %v137
  %3626 = vmatprep.subr.mxu0 0.0
  %3627 = vmatpush1.msra.mxu0 %v552
  %3628 = vmatprep.subr.mxu0 0.0
  %3629 = vmatpush1.msra.mxu0 0.0
  %3630 = vmatprep.subr.mxu0 0.0
  %3631 = vmatpush1.msra.mxu0 0.0
  %3632 = vmatprep.subr.mxu0 0.0
  %3633 = vmatpush1.msra.mxu0 0.0
  %3634 = vmatprep.subr.mxu0 0.0
  %3635 = vmatpush1.msra.mxu0 0.0
  %3636 = vmatprep.subr.mxu0 0.0
  %3637 = vmatpush1.msra.mxu0 0.0
  %3638 = vmatprep.subr.mxu0 0.0
  %3639 = vmatpush1.msra.mxu0 0.0
  %3640 = vmatprep.subr.mxu0 0.0
  %3641 = vmatpush1.msra.mxu0 0.0
  %3642 = vmatprep.subr.mxu0 0.0
  %3643 = vmatpush1.msra.mxu0 0.0
  %3644 = vmatprep.subr.mxu0 0.0
  %3645 = vmatpush1.msra.mxu0 0.0
  %3646 = vmatprep.subr.mxu0 0.0
  %3647 = vmatpush1.msra.mxu0 0.0
  %3648 = vmatprep.subr.mxu0 0.0
  %3649 = vmatpush1.msra.mxu0 0.0
  %3650 = vmatprep.subr.mxu0 0.0
  %3651 = vmatpush1.msra.mxu0 0.0
  %3652 = vmatprep.subr.mxu0 0.0
  %3653 = vmatpush1.msra.mxu0 0.0
  %3654 = vmatprep.subr.mxu0 0.0
  %3655 = vmatpush1.msra.mxu0 0.0
  %3656 = vmatprep.subr.mxu0 0.0
  %3657 = vmatpush1.msra.mxu0 0.0
  %3658 = vmatprep.mubr.f32.mxu0 %v3577
  %3659 = vmatmul.mubr.f32.gmra.mrb[0].mxu0 %v3564
  %v3660 = vpop.f32.mrb[0].mxu0
  %v3661 = vadd.f32 0.0, %v3660
  %v3662 = vpop.f32.mrb[0].mxu0
  %3663 = vmatprep.mubr.f32.mxu0 %v3580
  %3664 = vmatmul.mubr.f32.gmra.mrb[0].mxu0 %v3566
  %v3665 = vpop.f32.mrb[0].mxu0
  %v3666 = vadd.f32 0.0, %v3665
  %v3667 = vpop.f32.mrb[0].mxu0
  %3668 = vmatprep.mubr.f32.mxu0 %v3583
  %3669 = vmatmul.mubr.f32.gmra.mrb[0].mxu0 %v3568
  %v3670 = vpop.f32.mrb[0].mxu0
  %v3671 = vadd.f32 0.0, %v3670
  %v3672 = vpop.f32.mrb[0].mxu0
  %3673 = vmatprep.mubr.f32.mxu0 %v3586
  %3674 = vmatmul.mubr.f32.gmra.mrb[0].mxu0 %v3570
  %v3675 = vpop.f32.mrb[0].mxu0
  %v3676 = vadd.f32 0.0, %v3675
  %v3677 = vpop.f32.mrb[0].mxu0
  %3678 = vmatprep.mubr.f32.mxu0 %v3589
  %3679 = vmatmul.mubr.f32.gmra.mrb[0].mxu0 %v3572
  %v3680 = vpop.f32.mrb[0].mxu0
  %v3681 = vadd.f32 0.0, %v3680
  %v3682 = vpop.f32.mrb[0].mxu0
  %3683 = vmatprep.mubr.f32.mxu0 %v3592
  %3684 = vmatmul.mubr.f32.gmra.mrb[0].mxu0 %v3574
  %v3685 = vpop.f32.mrb[0].mxu0
  %v3686 = vadd.f32 0.0, %v3685
  %v3687 = vpop.f32.mrb[0].mxu0
  %3688 = vdwg.mxu0
  %3695 = vrot.lane.b32.xlu0 %v3661, 8
  %v3696 = vpop.permute.xlu0 %3695
  %3697 = vrot.lane.b32.xlu0 %v3666, 8
  %v3698 = vpop.permute.xlu0 %3697
  %3699 = vrot.lane.b32.xlu0 %v3671, 8
  %v3700 = vpop.permute.xlu0 %3699
  %3701 = vrot.lane.b32.xlu0 %v3676, 8
  %v3702 = vpop.permute.xlu0 %3701
  %3703 = vrot.lane.b32.xlu0 %v3681, 8
  %v3704 = vpop.permute.xlu0 %3703
  %3705 = vrot.lane.b32.xlu0 %v3686, 8
  %v3706 = vpop.permute.xlu0 %3705
  %v3713 = vsel %vm673, 0.0, %v3696
  %v3714 = vsel %vm673, 0.0, %v3698
  %v3715 = vsel %vm673, 0.0, %v3700
  %v3716 = vsel %vm673, 0.0, %v3702
  %v3717 = vsel %vm673, 0.0, %v3704
  %v3718 = vsel %vm673, 0.0, %v3706
  %v3719 = vsel %vm680, %v3713, 0.0
  %v3720 = vsel %vm680, %v3714, 0.0
  %v3721 = vsel %vm680, %v3715, 0.0
  %v3722 = vsel %vm680, %v3716, 0.0
  %v3723 = vsel %vm680, %v3717, 0.0
  %v3724 = vsel %vm680, %v3718, 0.0
  %v3725 = vmul.f32 %v690, %v3719
  %v3726 = vmul.f32 %v695, %v3720
  %v3727 = vmul.f32 %v700, %v3721
  %v3728 = vmul.f32 %v705, %v3722
  %v3729 = vmul.f32 %v710, %v3723
  %v3730 = vmul.f32 %v715, %v3724
  %v3731 = vadd.f32 %v3725, 0.0
  %v3732 = vadd.f32 %v3726, 0.0
  %v3733 = vadd.f32 %v3727, 0.0
  %v3734 = vadd.f32 %v3728, 0.0
  %v3735 = vadd.f32 %v3729, 0.0
  %v3736 = vadd.f32 %v3730, 0.0
  %v3737 = vmul.f32 %v731, %v3719
  %v3738 = vmul.f32 %v735, %v3720
  %v3739 = vmul.f32 %v739, %v3721
  %v3740 = vmul.f32 %v743, %v3722
  %v3741 = vmul.f32 %v747, %v3723
  %v3742 = vmul.f32 %v751, %v3724
  %3749 = vrot.lane.b32.xlu0 %v3737, 127
  %v3750 = vpop.permute.xlu0 %3749
  %3751 = vrot.lane.b32.xlu0 %v3738, 127
  %v3752 = vpop.permute.xlu0 %3751
  %3753 = vrot.lane.b32.xlu0 %v3739, 127
  %v3754 = vpop.permute.xlu0 %3753
  %3755 = vrot.lane.b32.xlu0 %v3740, 127
  %v3756 = vpop.permute.xlu0 %3755
  %3757 = vrot.lane.b32.xlu0 %v3741, 127
  %v3758 = vpop.permute.xlu0 %3757
  %3759 = vrot.lane.b32.xlu0 %v3742, 127
  %v3760 = vpop.permute.xlu0 %3759
  %v3767 = vadd.f32 %v3731, %v3750
  %v3768 = vadd.f32 %v3732, %v3752
  %v3769 = vadd.f32 %v3733, %v3754
  %v3770 = vadd.f32 %v3734, %v3756
  %v3771 = vadd.f32 %v3735, %v3758
  %v3772 = vadd.f32 %v3736, %v3760
  %v3773 = vmul.f32 %v791, %v3719
  %v3774 = vmul.f32 %v795, %v3720
  %v3775 = vmul.f32 %v799, %v3721
  %v3776 = vmul.f32 %v803, %v3722
  %v3777 = vmul.f32 %v807, %v3723
  %v3778 = vmul.f32 %v811, %v3724
  %3785 = vrot.lane.b32.xlu0 %v3773, 126
  %v3786 = vpop.permute.xlu0 %3785
  %3787 = vrot.lane.b32.xlu0 %v3774, 126
  %v3788 = vpop.permute.xlu0 %3787
  %3789 = vrot.lane.b32.xlu0 %v3775, 126
  %v3790 = vpop.permute.xlu0 %3789
  %3791 = vrot.lane.b32.xlu0 %v3776, 126
  %v3792 = vpop.permute.xlu0 %3791
  %3793 = vrot.lane.b32.xlu0 %v3777, 126
  %v3794 = vpop.permute.xlu0 %3793
  %3795 = vrot.lane.b32.xlu0 %v3778, 126
  %v3796 = vpop.permute.xlu0 %3795
  %v3803 = vadd.f32 %v3767, %v3786
  %v3804 = vadd.f32 %v3768, %v3788
  %v3805 = vadd.f32 %v3769, %v3790
  %v3806 = vadd.f32 %v3770, %v3792
  %v3807 = vadd.f32 %v3771, %v3794
  %v3808 = vadd.f32 %v3772, %v3796
  %v3809 = vmul.f32 %v851, %v3719
  %v3810 = vmul.f32 %v855, %v3720
  %v3811 = vmul.f32 %v859, %v3721
  %v3812 = vmul.f32 %v863, %v3722
  %v3813 = vmul.f32 %v867, %v3723
  %v3814 = vmul.f32 %v871, %v3724
  %3821 = vrot.lane.b32.xlu0 %v3809, 125
  %v3822 = vpop.permute.xlu0 %3821
  %3823 = vrot.lane.b32.xlu0 %v3810, 125
  %v3824 = vpop.permute.xlu0 %3823
  %3825 = vrot.lane.b32.xlu0 %v3811, 125
  %v3826 = vpop.permute.xlu0 %3825
  %3827 = vrot.lane.b32.xlu0 %v3812, 125
  %v3828 = vpop.permute.xlu0 %3827
  %3829 = vrot.lane.b32.xlu0 %v3813, 125
  %v3830 = vpop.permute.xlu0 %3829
  %3831 = vrot.lane.b32.xlu0 %v3814, 125
  %v3832 = vpop.permute.xlu0 %3831
  %v3839 = vadd.f32 %v3803, %v3822
  %v3840 = vadd.f32 %v3804, %v3824
  %v3841 = vadd.f32 %v3805, %v3826
  %v3842 = vadd.f32 %v3806, %v3828
  %v3843 = vadd.f32 %v3807, %v3830
  %v3844 = vadd.f32 %v3808, %v3832
  %v3845 = vmul.f32 %v911, %v3719
  %v3846 = vmul.f32 %v915, %v3720
  %v3847 = vmul.f32 %v919, %v3721
  %v3848 = vmul.f32 %v923, %v3722
  %v3849 = vmul.f32 %v927, %v3723
  %v3850 = vmul.f32 %v931, %v3724
  %3857 = vrot.lane.b32.xlu0 %v3845, 124
  %v3858 = vpop.permute.xlu0 %3857
  %3859 = vrot.lane.b32.xlu0 %v3846, 124
  %v3860 = vpop.permute.xlu0 %3859
  %3861 = vrot.lane.b32.xlu0 %v3847, 124
  %v3862 = vpop.permute.xlu0 %3861
  %3863 = vrot.lane.b32.xlu0 %v3848, 124
  %v3864 = vpop.permute.xlu0 %3863
  %3865 = vrot.lane.b32.xlu0 %v3849, 124
  %v3866 = vpop.permute.xlu0 %3865
  %3867 = vrot.lane.b32.xlu0 %v3850, 124
  %v3868 = vpop.permute.xlu0 %3867
  %v3875 = vadd.f32 %v3839, %v3858
  %v3876 = vadd.f32 %v3840, %v3860
  %v3877 = vadd.f32 %v3841, %v3862
  %v3878 = vadd.f32 %v3842, %v3864
  %v3879 = vadd.f32 %v3843, %v3866
  %v3880 = vadd.f32 %v3844, %v3868
  %v3881 = vmul.f32 %v971, %v3719
  %v3882 = vmul.f32 %v975, %v3720
  %v3883 = vmul.f32 %v979, %v3721
  %v3884 = vmul.f32 %v983, %v3722
  %v3885 = vmul.f32 %v987, %v3723
  %v3886 = vmul.f32 %v991, %v3724
  %3893 = vrot.lane.b32.xlu0 %v3881, 123
  %v3894 = vpop.permute.xlu0 %3893
  %3895 = vrot.lane.b32.xlu0 %v3882, 123
  %v3896 = vpop.permute.xlu0 %3895
  %3897 = vrot.lane.b32.xlu0 %v3883, 123
  %v3898 = vpop.permute.xlu0 %3897
  %3899 = vrot.lane.b32.xlu0 %v3884, 123
  %v3900 = vpop.permute.xlu0 %3899
  %3901 = vrot.lane.b32.xlu0 %v3885, 123
  %v3902 = vpop.permute.xlu0 %3901
  %3903 = vrot.lane.b32.xlu0 %v3886, 123
  %v3904 = vpop.permute.xlu0 %3903
  %v3911 = vadd.f32 %v3875, %v3894
  %v3912 = vadd.f32 %v3876, %v3896
  %v3913 = vadd.f32 %v3877, %v3898
  %v3914 = vadd.f32 %v3878, %v3900
  %v3915 = vadd.f32 %v3879, %v3902
  %v3916 = vadd.f32 %v3880, %v3904
  %v3917 = vmul.f32 %v1031, %v3719
  %v3918 = vmul.f32 %v1035, %v3720
  %v3919 = vmul.f32 %v1039, %v3721
  %v3920 = vmul.f32 %v1043, %v3722
  %v3921 = vmul.f32 %v1047, %v3723
  %v3922 = vmul.f32 %v1051, %v3724
  %3929 = vrot.lane.b32.xlu0 %v3917, 122
  %v3930 = vpop.permute.xlu0 %3929
  %3931 = vrot.lane.b32.xlu0 %v3918, 122
  %v3932 = vpop.permute.xlu0 %3931
  %3933 = vrot.lane.b32.xlu0 %v3919, 122
  %v3934 = vpop.permute.xlu0 %3933
  %3935 = vrot.lane.b32.xlu0 %v3920, 122
  %v3936 = vpop.permute.xlu0 %3935
  %3937 = vrot.lane.b32.xlu0 %v3921, 122
  %v3938 = vpop.permute.xlu0 %3937
  %3939 = vrot.lane.b32.xlu0 %v3922, 122
  %v3940 = vpop.permute.xlu0 %3939
  %v3947 = vadd.f32 %v3911, %v3930
  %v3948 = vadd.f32 %v3912, %v3932
  %v3949 = vadd.f32 %v3913, %v3934
  %v3950 = vadd.f32 %v3914, %v3936
  %v3951 = vadd.f32 %v3915, %v3938
  %v3952 = vadd.f32 %v3916, %v3940
  %v3953 = vmul.f32 %v1091, %v3719
  %v3954 = vmul.f32 %v1095, %v3720
  %v3955 = vmul.f32 %v1099, %v3721
  %v3956 = vmul.f32 %v1103, %v3722
  %v3957 = vmul.f32 %v1107, %v3723
  %v3958 = vmul.f32 %v1111, %v3724
  %3965 = vrot.lane.b32.xlu0 %v3953, 121
  %v3966 = vpop.permute.xlu0 %3965
  %3967 = vrot.lane.b32.xlu0 %v3954, 121
  %v3968 = vpop.permute.xlu0 %3967
  %3969 = vrot.lane.b32.xlu0 %v3955, 121
  %v3970 = vpop.permute.xlu0 %3969
  %3971 = vrot.lane.b32.xlu0 %v3956, 121
  %v3972 = vpop.permute.xlu0 %3971
  %3973 = vrot.lane.b32.xlu0 %v3957, 121
  %v3974 = vpop.permute.xlu0 %3973
  %3975 = vrot.lane.b32.xlu0 %v3958, 121
  %v3976 = vpop.permute.xlu0 %3975
  %v3983 = vadd.f32 %v3947, %v3966
  %v3984 = vadd.f32 %v3948, %v3968
  %v3985 = vadd.f32 %v3949, %v3970
  %v3986 = vadd.f32 %v3950, %v3972
  %v3987 = vadd.f32 %v3951, %v3974
  %v3988 = vadd.f32 %v3952, %v3976
  %v3989 = vmul.f32 %v1151, %v3719
  %v3990 = vmul.f32 %v1155, %v3720
  %v3991 = vmul.f32 %v1159, %v3721
  %v3992 = vmul.f32 %v1163, %v3722
  %v3993 = vmul.f32 %v1167, %v3723
  %v3994 = vmul.f32 %v1171, %v3724
  %4001 = vrot.lane.b32.xlu0 %v3989, 120
  %v4002 = vpop.permute.xlu0 %4001
  %4003 = vrot.lane.b32.xlu0 %v3990, 120
  %v4004 = vpop.permute.xlu0 %4003
  %4005 = vrot.lane.b32.xlu0 %v3991, 120
  %v4006 = vpop.permute.xlu0 %4005
  %4007 = vrot.lane.b32.xlu0 %v3992, 120
  %v4008 = vpop.permute.xlu0 %4007
  %4009 = vrot.lane.b32.xlu0 %v3993, 120
  %v4010 = vpop.permute.xlu0 %4009
  %4011 = vrot.lane.b32.xlu0 %v3994, 120
  %v4012 = vpop.permute.xlu0 %4011
  %v4019 = vadd.f32 %v3983, %v4002
  %v4020 = vadd.f32 %v3984, %v4004
  %v4021 = vadd.f32 %v3985, %v4006
  %v4022 = vadd.f32 %v3986, %v4008
  %v4023 = vadd.f32 %v3987, %v4010
  %v4024 = vadd.f32 %v3988, %v4012
  %v4025 = vmul.f32 %v1211, %v3719
  %v4026 = vmul.f32 %v1215, %v3720
  %v4027 = vmul.f32 %v1219, %v3721
  %v4028 = vmul.f32 %v1223, %v3722
  %v4029 = vmul.f32 %v1227, %v3723
  %v4030 = vmul.f32 %v1231, %v3724
  %4037 = vrot.lane.b32.xlu0 %v4025, 119
  %v4038 = vpop.permute.xlu0 %4037
  %4039 = vrot.lane.b32.xlu0 %v4026, 119
  %v4040 = vpop.permute.xlu0 %4039
  %4041 = vrot.lane.b32.xlu0 %v4027, 119
  %v4042 = vpop.permute.xlu0 %4041
  %4043 = vrot.lane.b32.xlu0 %v4028, 119
  %v4044 = vpop.permute.xlu0 %4043
  %4045 = vrot.lane.b32.xlu0 %v4029, 119
  %v4046 = vpop.permute.xlu0 %4045
  %4047 = vrot.lane.b32.xlu0 %v4030, 119
  %v4048 = vpop.permute.xlu0 %4047
  %v4055 = vadd.f32 %v4019, %v4038
  %v4056 = vadd.f32 %v4020, %v4040
  %v4057 = vadd.f32 %v4021, %v4042
  %v4058 = vadd.f32 %v4022, %v4044
  %v4059 = vadd.f32 %v4023, %v4046
  %v4060 = vadd.f32 %v4024, %v4048
  %v4061 = vmul.f32 %v1271, %v3719
  %v4062 = vmul.f32 %v1275, %v3720
  %v4063 = vmul.f32 %v1279, %v3721
  %v4064 = vmul.f32 %v1283, %v3722
  %v4065 = vmul.f32 %v1287, %v3723
  %v4066 = vmul.f32 %v1291, %v3724
  %4073 = vrot.lane.b32.xlu0 %v4061, 118
  %v4074 = vpop.permute.xlu0 %4073
  %4075 = vrot.lane.b32.xlu0 %v4062, 118
  %v4076 = vpop.permute.xlu0 %4075
  %4077 = vrot.lane.b32.xlu0 %v4063, 118
  %v4078 = vpop.permute.xlu0 %4077
  %4079 = vrot.lane.b32.xlu0 %v4064, 118
  %v4080 = vpop.permute.xlu0 %4079
  %4081 = vrot.lane.b32.xlu0 %v4065, 118
  %v4082 = vpop.permute.xlu0 %4081
  %4083 = vrot.lane.b32.xlu0 %v4066, 118
  %v4084 = vpop.permute.xlu0 %4083
  %v4091 = vadd.f32 %v4055, %v4074
  %v4092 = vadd.f32 %v4056, %v4076
  %v4093 = vadd.f32 %v4057, %v4078
  %v4094 = vadd.f32 %v4058, %v4080
  %v4095 = vadd.f32 %v4059, %v4082
  %v4096 = vadd.f32 %v4060, %v4084
  %v4097 = vmul.f32 %v1331, %v3719
  %v4098 = vmul.f32 %v1335, %v3720
  %v4099 = vmul.f32 %v1339, %v3721
  %v4100 = vmul.f32 %v1343, %v3722
  %v4101 = vmul.f32 %v1347, %v3723
  %v4102 = vmul.f32 %v1351, %v3724
  %4109 = vrot.lane.b32.xlu0 %v4097, 117
  %v4110 = vpop.permute.xlu0 %4109
  %4111 = vrot.lane.b32.xlu0 %v4098, 117
  %v4112 = vpop.permute.xlu0 %4111
  %4113 = vrot.lane.b32.xlu0 %v4099, 117
  %v4114 = vpop.permute.xlu0 %4113
  %4115 = vrot.lane.b32.xlu0 %v4100, 117
  %v4116 = vpop.permute.xlu0 %4115
  %4117 = vrot.lane.b32.xlu0 %v4101, 117
  %v4118 = vpop.permute.xlu0 %4117
  %4119 = vrot.lane.b32.xlu0 %v4102, 117
  %v4120 = vpop.permute.xlu0 %4119
  %v4127 = vadd.f32 %v4091, %v4110
  %v4128 = vadd.f32 %v4092, %v4112
  %v4129 = vadd.f32 %v4093, %v4114
  %v4130 = vadd.f32 %v4094, %v4116
  %v4131 = vadd.f32 %v4095, %v4118
  %v4132 = vadd.f32 %v4096, %v4120
  %v4133 = vmul.f32 %v1391, %v3719
  %v4134 = vmul.f32 %v1395, %v3720
  %v4135 = vmul.f32 %v1399, %v3721
  %v4136 = vmul.f32 %v1403, %v3722
  %v4137 = vmul.f32 %v1407, %v3723
  %v4138 = vmul.f32 %v1411, %v3724
  %4145 = vrot.lane.b32.xlu0 %v4133, 116
  %v4146 = vpop.permute.xlu0 %4145
  %4147 = vrot.lane.b32.xlu0 %v4134, 116
  %v4148 = vpop.permute.xlu0 %4147
  %4149 = vrot.lane.b32.xlu0 %v4135, 116
  %v4150 = vpop.permute.xlu0 %4149
  %4151 = vrot.lane.b32.xlu0 %v4136, 116
  %v4152 = vpop.permute.xlu0 %4151
  %4153 = vrot.lane.b32.xlu0 %v4137, 116
  %v4154 = vpop.permute.xlu0 %4153
  %4155 = vrot.lane.b32.xlu0 %v4138, 116
  %v4156 = vpop.permute.xlu0 %4155
  %v4163 = vadd.f32 %v4127, %v4146
  %v4164 = vadd.f32 %v4128, %v4148
  %v4165 = vadd.f32 %v4129, %v4150
  %v4166 = vadd.f32 %v4130, %v4152
  %v4167 = vadd.f32 %v4131, %v4154
  %v4168 = vadd.f32 %v4132, %v4156
  %v4169 = vmul.f32 %v1451, %v3719
  %v4170 = vmul.f32 %v1455, %v3720
  %v4171 = vmul.f32 %v1459, %v3721
  %v4172 = vmul.f32 %v1463, %v3722
  %v4173 = vmul.f32 %v1467, %v3723
  %v4174 = vmul.f32 %v1471, %v3724
  %4181 = vrot.lane.b32.xlu0 %v4169, 115
  %v4182 = vpop.permute.xlu0 %4181
  %4183 = vrot.lane.b32.xlu0 %v4170, 115
  %v4184 = vpop.permute.xlu0 %4183
  %4185 = vrot.lane.b32.xlu0 %v4171, 115
  %v4186 = vpop.permute.xlu0 %4185
  %4187 = vrot.lane.b32.xlu0 %v4172, 115
  %v4188 = vpop.permute.xlu0 %4187
  %4189 = vrot.lane.b32.xlu0 %v4173, 115
  %v4190 = vpop.permute.xlu0 %4189
  %4191 = vrot.lane.b32.xlu0 %v4174, 115
  %v4192 = vpop.permute.xlu0 %4191
  %v4199 = vadd.f32 %v4163, %v4182
  %v4200 = vadd.f32 %v4164, %v4184
  %v4201 = vadd.f32 %v4165, %v4186
  %v4202 = vadd.f32 %v4166, %v4188
  %v4203 = vadd.f32 %v4167, %v4190
  %v4204 = vadd.f32 %v4168, %v4192
  %v4205 = vmul.f32 %v1511, %v3719
  %v4206 = vmul.f32 %v1515, %v3720
  %v4207 = vmul.f32 %v1519, %v3721
  %v4208 = vmul.f32 %v1523, %v3722
  %v4209 = vmul.f32 %v1527, %v3723
  %v4210 = vmul.f32 %v1531, %v3724
  %4217 = vrot.lane.b32.xlu0 %v4205, 114
  %v4218 = vpop.permute.xlu0 %4217
  %4219 = vrot.lane.b32.xlu0 %v4206, 114
  %v4220 = vpop.permute.xlu0 %4219
  %4221 = vrot.lane.b32.xlu0 %v4207, 114
  %v4222 = vpop.permute.xlu0 %4221
  %4223 = vrot.lane.b32.xlu0 %v4208, 114
  %v4224 = vpop.permute.xlu0 %4223
  %4225 = vrot.lane.b32.xlu0 %v4209, 114
  %v4226 = vpop.permute.xlu0 %4225
  %4227 = vrot.lane.b32.xlu0 %v4210, 114
  %v4228 = vpop.permute.xlu0 %4227
  %v4235 = vadd.f32 %v4199, %v4218
  %v4236 = vadd.f32 %v4200, %v4220
  %v4237 = vadd.f32 %v4201, %v4222
  %v4238 = vadd.f32 %v4202, %v4224
  %v4239 = vadd.f32 %v4203, %v4226
  %v4240 = vadd.f32 %v4204, %v4228
  %v4241 = vmul.f32 %v1571, %v3719
  %v4242 = vmul.f32 %v1575, %v3720
  %v4243 = vmul.f32 %v1579, %v3721
  %v4244 = vmul.f32 %v1583, %v3722
  %v4245 = vmul.f32 %v1587, %v3723
  %v4246 = vmul.f32 %v1591, %v3724
  %4253 = vrot.lane.b32.xlu0 %v4241, 113
  %v4254 = vpop.permute.xlu0 %4253
  %4255 = vrot.lane.b32.xlu0 %v4242, 113
  %v4256 = vpop.permute.xlu0 %4255
  %4257 = vrot.lane.b32.xlu0 %v4243, 113
  %v4258 = vpop.permute.xlu0 %4257
  %4259 = vrot.lane.b32.xlu0 %v4244, 113
  %v4260 = vpop.permute.xlu0 %4259
  %4261 = vrot.lane.b32.xlu0 %v4245, 113
  %v4262 = vpop.permute.xlu0 %4261
  %4263 = vrot.lane.b32.xlu0 %v4246, 113
  %v4264 = vpop.permute.xlu0 %4263
  %v4271 = vadd.f32 %v4235, %v4254
  %v4272 = vadd.f32 %v4236, %v4256
  %v4273 = vadd.f32 %v4237, %v4258
  %v4274 = vadd.f32 %v4238, %v4260
  %v4275 = vadd.f32 %v4239, %v4262
  %v4276 = vadd.f32 %v4240, %v4264
  %v4277 = vpack.c.bf16 %v4272, %v4271
  %v4278 = vpack.c.bf16 %v4274, %v4273
  %v4279 = vpack.c.bf16 %v4276, %v4275
  %4280 = vmatprep.subr.bf16.mxu0 0
  %4281 = vmatpush1.bf16.msra.mxu0 %v4277
  %4282 = vmatprep.subr.bf16.mxu0 0
  %4283 = vmatpush1.bf16.msra.mxu0 %v4278
  %4284 = vmatprep.subr.bf16.mxu0 0
  %4285 = vmatpush1.bf16.msra.mxu0 %v4279
  %4286 = vmatprep.subr.bf16.mxu0 0
  %4287 = vmatpush1.bf16.msra.mxu0 0
  %4288 = vmatprep.subr.bf16.mxu0 0
  %4289 = vmatpush1.bf16.msra.mxu0 0
  %4290 = vmatprep.subr.bf16.mxu0 0
  %4291 = vmatpush1.bf16.msra.mxu0 0
  %4292 = vmatprep.subr.bf16.mxu0 0
  %4293 = vmatpush1.bf16.msra.mxu0 0
  %4294 = vmatprep.subr.bf16.mxu0 0
  %4295 = vmatpush1.bf16.msra.mxu0 0
  %4296 = vmatprep.subr.bf16.mxu0 0
  %4297 = vmatpush1.bf16.msra.mxu0 0
  %4298 = vmatprep.subr.bf16.mxu0 0
  %4299 = vmatpush1.bf16.msra.mxu0 0
  %4300 = vmatprep.subr.bf16.mxu0 0
  %4301 = vmatpush1.bf16.msra.mxu0 0
  %4302 = vmatprep.subr.bf16.mxu0 0
  %4303 = vmatpush1.bf16.msra.mxu0 0
  %4304 = vmatprep.subr.bf16.mxu0 0
  %4305 = vmatpush1.bf16.msra.mxu0 0
  %4306 = vmatprep.subr.bf16.mxu0 0
  %4307 = vmatpush1.bf16.msra.mxu0 0
  %4308 = vmatprep.subr.bf16.mxu0 0
  %4309 = vmatpush1.bf16.msra.mxu0 0
  %4310 = vmatprep.subr.bf16.mxu0 0
  %4311 = vmatpush1.bf16.msra.mxu0 0
  %4312 = vmatprep.mubr.bf16.mxu0 0
  %4313 = vmatmul.mubr.bf16.gmra.mrb[0].mxu0 %v1679
  %v4314 = vpop.f32.mrb[0].mxu0
  %v4315 = vadd.f32 %v1635, %v4314
  %v4316 = vpop.f32.mrb[0].mxu0
  %v4317 = vpop.f32.mrb[0].mxu0
  %v4318 = vadd.f32 %v1640, %v4317
  %v4319 = vpop.f32.mrb[0].mxu0
  %4320 = vmatprep.mubr.bf16.mxu0 0
  %4321 = vmatmul.mubr.bf16.gmra.mrb[0].mxu0 %v1682
  %v4322 = vpop.f32.mrb[0].mxu0
  %v4323 = vadd.f32 %v1645, %v4322
  %v4324 = vpop.f32.mrb[0].mxu0
  %v4325 = vpop.f32.mrb[0].mxu0
  %v4326 = vadd.f32 %v1650, %v4325
  %v4327 = vpop.f32.mrb[0].mxu0
  %4328 = vmatprep.mubr.bf16.mxu0 0
  %4329 = vmatmul.mubr.bf16.gmra.mrb[0].mxu0 %v1685
  %v4330 = vpop.f32.mrb[0].mxu0
  %v4331 = vadd.f32 %v1655, %v4330
  %v4332 = vpop.f32.mrb[0].mxu0
  %v4333 = vpop.f32.mrb[0].mxu0
  %v4334 = vadd.f32 %v1660, %v4333
  %v4335 = vpop.f32.mrb[0].mxu0
  %4336 = vdwg.mxu0
  %vm4337 = vcmp.gt.f32.partialorder %v4315, 0.0
  %vm4338 = vcmp.gt.f32.partialorder %v4318, 0.0
  %vm4339 = vcmp.gt.f32.partialorder %v4323, 0.0
  %vm4340 = vcmp.gt.f32.partialorder %v4326, 0.0
  %vm4341 = vcmp.gt.f32.partialorder %v4331, 0.0
  %vm4342 = vcmp.gt.f32.partialorder %v4334, 0.0
  %v4343 = vmin.f32 %v4315, 0.0
  %v4344 = vmin.f32 %v4318, 0.0
  %v4345 = vmin.f32 %v4323, 0.0
  %v4346 = vmin.f32 %v4326, 0.0
  %v4347 = vmin.f32 %v4331, 0.0
  %v4348 = vmin.f32 %v4334, 0.0
  %v4349 = vmul.f32 %v4343, 1.442695
  %v4350 = vpow.pop %v4349
  %v4351 = vmul.f32 %v4344, 1.442695
  %v4352 = vpow.pop %v4351
  %v4353 = vmul.f32 %v4345, 1.442695
  %v4354 = vpow.pop %v4353
  %v4355 = vmul.f32 %v4346, 1.442695
  %v4356 = vpow.pop %v4355
  %v4357 = vmul.f32 %v4347, 1.442695
  %v4358 = vpow.pop %v4357
  %v4359 = vmul.f32 %v4348, 1.442695
  %v4360 = vpow.pop %v4359
  %v4361 = vsub.f32 %v4350, 1.0
  %v4362 = vsub.f32 %v4352, 1.0
  %v4363 = vsub.f32 %v4354, 1.0
  %v4364 = vsub.f32 %v4356, 1.0
  %v4365 = vsub.f32 %v4358, 1.0
  %v4366 = vsub.f32 %v4360, 1.0
  %v4367 = vsel %vm4337, %v4315, %v4361
  %v4368 = vsel %vm4338, %v4318, %v4362
  %v4369 = vsel %vm4339, %v4323, %v4363
  %v4370 = vsel %vm4340, %v4326, %v4364
  %v4371 = vsel %vm4341, %v4331, %v4365
  %v4372 = vsel %vm4342, %v4334, %v4366
  %v4374 = vsel %vm1780, %v4367, 0
  %v4377 = vsel %vm1780, %v4368, 0
  %v4380 = vsel %vm1780, %v4369, 0
  %v4383 = vsel %vm1780, %v4370, 0
  %v4386 = vsel %vm1780, %v4371, 0
  %v4389 = vsel %vm1780, %v4372, 0
  %4391 = vmatprep.subr.mxu0 0.0
  %4392 = vmatpush1.msra.mxu0 %v139
  %4393 = vmatprep.subr.mxu0 0.0
  %4394 = vmatpush1.msra.mxu0 %v140
  %4395 = vmatprep.subr.mxu0 0.0
  %4396 = vmatpush1.msra.mxu0 %v141
  %4397 = vmatprep.subr.mxu0 0.0
  %4398 = vmatpush1.msra.mxu0 %v142
  %4399 = vmatprep.subr.mxu0 0.0
  %4400 = vmatpush1.msra.mxu0 %v1800
  %4401 = vmatprep.subr.mxu0 0.0
  %4402 = vmatpush1.msra.mxu0 0.0
  %4403 = vmatprep.subr.mxu0 0.0
  %4404 = vmatpush1.msra.mxu0 0.0
  %4405 = vmatprep.subr.mxu0 0.0
  %4406 = vmatpush1.msra.mxu0 0.0
  %4407 = vmatprep.subr.mxu0 0.0
  %4408 = vmatpush1.msra.mxu0 0.0
  %4409 = vmatprep.subr.mxu0 0.0
  %4410 = vmatpush1.msra.mxu0 0.0
  %4411 = vmatprep.subr.mxu0 0.0
  %4412 = vmatpush1.msra.mxu0 0.0
  %4413 = vmatprep.subr.mxu0 0.0
  %4414 = vmatpush1.msra.mxu0 0.0
  %4415 = vmatprep.subr.mxu0 0.0
  %4416 = vmatpush1.msra.mxu0 0.0
  %4417 = vmatprep.subr.mxu0 0.0
  %4418 = vmatpush1.msra.mxu0 0.0
  %4419 = vmatprep.subr.mxu0 0.0
  %4420 = vmatpush1.msra.mxu0 0.0
  %4421 = vmatprep.subr.mxu0 0.0
  %4422 = vmatpush1.msra.mxu0 0.0
  %4423 = vmatprep.subr.mxu0 0.0
  %4424 = vmatpush1.msra.mxu0 0.0
  %4425 = vmatprep.subr.mxu0 0.0
  %4426 = vmatpush1.msra.mxu0 0.0
  %4427 = vmatprep.subr.mxu0 0.0
  %4428 = vmatpush1.msra.mxu0 0.0
  %4429 = vmatprep.subr.mxu0 0.0
  %4430 = vmatpush1.msra.mxu0 0.0
  %4431 = vmatprep.subr.mxu0 0.0
  %4432 = vmatpush1.msra.mxu0 0.0
  %4433 = vmatprep.subr.mxu0 0.0
  %4434 = vmatpush1.msra.mxu0 0.0
  %4435 = vmatprep.subr.mxu0 0.0
  %4436 = vmatpush1.msra.mxu0 0.0
  %4437 = vmatprep.subr.mxu0 0.0
  %4438 = vmatpush1.msra.mxu0 0.0
  %4439 = vmatprep.subr.mxu0 0.0
  %4440 = vmatpush1.msra.mxu0 0.0
  %4441 = vmatprep.subr.mxu0 0.0
  %4442 = vmatpush1.msra.mxu0 0.0
  %4443 = vmatprep.subr.mxu0 0.0
  %4444 = vmatpush1.msra.mxu0 0.0
  %4445 = vmatprep.subr.mxu0 0.0
  %4446 = vmatpush1.msra.mxu0 0.0
  %4447 = vmatprep.subr.mxu0 0.0
  %4448 = vmatpush1.msra.mxu0 0.0
  %4449 = vmatprep.subr.mxu0 0.0
  %4450 = vmatpush1.msra.mxu0 0.0
  %4451 = vmatprep.subr.mxu0 0.0
  %4452 = vmatpush1.msra.mxu0 0.0
  %4453 = vmatprep.subr.mxu0 0.0
  %4454 = vmatpush1.msra.mxu0 0.0
  %4455 = vmatprep.mubr.f32.mxu0 0.0
  %4456 = vmatmul.mubr.f32.gmra.mrb[0].mxu0 %v4374
  %v4457 = vpop.f32.mrb[0].mxu0
  %v4458 = vadd.f32 0.0, %v4457
  %v4459 = vpop.f32.mrb[0].mxu0
  %4460 = vmatprep.mubr.f32.mxu0 0.0
  %4461 = vmatmul.mubr.f32.gmra.mrb[0].mxu0 %v4377
  %v4462 = vpop.f32.mrb[0].mxu0
  %v4463 = vadd.f32 0.0, %v4462
  %v4464 = vpop.f32.mrb[0].mxu0
  %4465 = vmatprep.mubr.f32.mxu0 0.0
  %4466 = vmatmul.mubr.f32.gmra.mrb[0].mxu0 %v4380
  %v4467 = vpop.f32.mrb[0].mxu0
  %v4468 = vadd.f32 0.0, %v4467
  %v4469 = vpop.f32.mrb[0].mxu0
  %4470 = vmatprep.mubr.f32.mxu0 0.0
  %4471 = vmatmul.mubr.f32.gmra.mrb[0].mxu0 %v4383
  %v4472 = vpop.f32.mrb[0].mxu0
  %v4473 = vadd.f32 0.0, %v4472
  %v4474 = vpop.f32.mrb[0].mxu0
  %4475 = vmatprep.mubr.f32.mxu0 0.0
  %4476 = vmatmul.mubr.f32.gmra.mrb[0].mxu0 %v4386
  %v4477 = vpop.f32.mrb[0].mxu0
  %v4478 = vadd.f32 0.0, %v4477
  %v4479 = vpop.f32.mrb[0].mxu0
  %4480 = vmatprep.mubr.f32.mxu0 0.0
  %4481 = vmatmul.mubr.f32.gmra.mrb[0].mxu0 %v4389
  %v4482 = vpop.f32.mrb[0].mxu0
  %v4483 = vadd.f32 0.0, %v4482
  %v4484 = vpop.f32.mrb[0].mxu0
  %4485 = vdwg.mxu0
  %s4486 = scalar_lea.vmem %s1, 52
  %v4487 = vld [vmem:[%s4486] sm:$0xf]
  %v4488 = vld [vmem:[%s4486 + $0x4] sm:$0xf]
  %v4489 = vld [vmem:[%s4486 + $0x8] sm:$0xf]
  %v4490 = vld [vmem:[%s4486 + $0xc] sm:$0xf]
  %v4491 = vld [vmem:[%s4486 + $0x10] sm:$0xf]
  %v4492 = vld [vmem:[%s4486 + $0x14] sm:$0xf]
  %v4493 = vld [vmem:[%s4486 + $0x18] sm:$0xf]
  %v4494 = vld [vmem:[%s4486 + $0x1c] sm:$0xf]
  %v4495 = vld [vmem:[%s4486 + $0x20] sm:$0xf]
  %v4496 = vld [vmem:[%s4486 + $0x24] sm:$0xf]
  %v4497 = vld [vmem:[%s4486 + $0x28] sm:$0xf]
  %v4498 = vld [vmem:[%s4486 + $0x2c] sm:$0xf]
  %v4499 = vld [vmem:[%s4486 + $0x30] sm:$0x3]
  %v4513 = vunpack.c.l.b16 %v4487
  %v4514 = vunpack.c.l.b16 %v4488
  %v4515 = vunpack.c.l.b16 %v4489
  %v4516 = vunpack.c.l.b16 %v4490
  %v4517 = vunpack.c.l.b16 %v4491
  %v4518 = vunpack.c.l.b16 %v4492
  %v4519 = vunpack.c.l.b16 %v4493
  %v4520 = vunpack.c.l.b16 %v4494
  %v4521 = vunpack.c.l.b16 %v4495
  %v4522 = vunpack.c.l.b16 %v4496
  %v4523 = vunpack.c.l.b16 %v4497
  %v4524 = vunpack.c.l.b16 %v4498
  %v4525 = vunpack.c.l.b16 %v4499
  %v4526 = vpack.c.b16 %v4514, %v4513
  %v4527 = vpack.c.b16 %v4516, %v4515
  %v4528 = vpack.c.b16 %v4518, %v4517
  %v4529 = vpack.c.b16 %v4520, %v4519
  %v4530 = vpack.c.b16 %v4522, %v4521
  %v4531 = vpack.c.b16 %v4524, %v4523
  %v4532 = vpack.c.b16 %v4525, %v4525
  %v4540 = vsel %vm2040, %v4532, 0
  %4542 = vmatprep.subr.bf16.mxu0 0
  %4543 = vmatpush1.bf16.msra.mxu0 %v4526
  %4544 = vmatprep.subr.bf16.mxu0 0
  %4545 = vmatpush1.bf16.msra.mxu0 %v4527
  %4546 = vmatprep.subr.bf16.mxu0 0
  %4547 = vmatpush1.bf16.msra.mxu0 %v4528
  %4548 = vmatprep.subr.bf16.mxu0 0
  %4549 = vmatpush1.bf16.msra.mxu0 %v4529
  %4550 = vmatprep.subr.bf16.mxu0 0
  %4551 = vmatpush1.bf16.msra.mxu0 %v4530
  %4552 = vmatprep.subr.bf16.mxu0 0
  %4553 = vmatpush1.bf16.msra.mxu0 %v4531
  %4554 = vmatprep.subr.bf16.mxu0 0
  %4555 = vmatpush1.bf16.msra.mxu0 %v4540
  %4556 = vmatprep.subr.bf16.mxu0 0
  %4557 = vmatpush1.bf16.msra.mxu0 0
  %4558 = vmatprep.subr.bf16.mxu0 0
  %4559 = vmatpush1.bf16.msra.mxu0 0
  %4560 = vmatprep.subr.bf16.mxu0 0
  %4561 = vmatpush1.bf16.msra.mxu0 0
  %4562 = vmatprep.subr.bf16.mxu0 0
  %4563 = vmatpush1.bf16.msra.mxu0 0
  %4564 = vmatprep.subr.bf16.mxu0 0
  %4565 = vmatpush1.bf16.msra.mxu0 0
  %4566 = vmatprep.subr.bf16.mxu0 0
  %4567 = vmatpush1.bf16.msra.mxu0 0
  %4568 = vmatprep.subr.bf16.mxu0 0
  %4569 = vmatpush1.bf16.msra.mxu0 0
  %4570 = vmatprep.subr.bf16.mxu0 0
  %4571 = vmatpush1.bf16.msra.mxu0 0
  %4572 = vmatprep.subr.bf16.mxu0 0
  %4573 = vmatpush1.bf16.msra.mxu0 0
  %4574 = vmatprep.mubr.bf16.mxu0 0
  %4575 = vmatmul.mubr.bf16.gmra.mrb[0].mxu0 %v2026
  %v4576 = vpop.f32.mrb[0].mxu0
  %v4577 = vadd.f32 %v1913, %v4576
  %v4578 = vpop.f32.mrb[0].mxu0
  %v4579 = vpop.f32.mrb[0].mxu0
  %v4580 = vadd.f32 %v1918, %v4579
  %v4581 = vpop.f32.mrb[0].mxu0
  %4582 = vmatprep.mubr.bf16.mxu0 0
  %4583 = vmatmul.mubr.bf16.gmra.mrb[0].mxu0 %v2029
  %v4584 = vpop.f32.mrb[0].mxu0
  %v4585 = vadd.f32 %v1923, %v4584
  %v4586 = vpop.f32.mrb[0].mxu0
  %v4587 = vpop.f32.mrb[0].mxu0
  %v4588 = vadd.f32 %v1928, %v4587
  %v4589 = vpop.f32.mrb[0].mxu0
  %4590 = vmatprep.mubr.bf16.mxu0 0
  %4591 = vmatmul.mubr.bf16.gmra.mrb[0].mxu0 %v2032
  %v4592 = vpop.f32.mrb[0].mxu0
  %v4593 = vadd.f32 %v1933, %v4592
  %v4594 = vpop.f32.mrb[0].mxu0
  %v4595 = vpop.f32.mrb[0].mxu0
  %v4596 = vadd.f32 %v1938, %v4595
  %v4597 = vpop.f32.mrb[0].mxu0
  %4598 = vmatprep.mubr.bf16.mxu0 0
  %4599 = vmatmul.mubr.bf16.gmra.mrb[0].mxu0 %v2035
  %v4600 = vpop.f32.mrb[0].mxu0
  %v4601 = vadd.f32 %v1943, %v4600
  %v4602 = vpop.f32.mrb[0].mxu0
  %v4603 = vpop.f32.mrb[0].mxu0
  %v4604 = vadd.f32 %v1948, %v4603
  %v4605 = vpop.f32.mrb[0].mxu0
  %4606 = vmatprep.mubr.bf16.mxu0 0
  %4607 = vmatmul.mubr.bf16.gmra.mrb[0].mxu0 %v2038
  %v4608 = vpop.f32.mrb[0].mxu0
  %v4609 = vadd.f32 %v1953, %v4608
  %v4610 = vpop.f32.mrb[0].mxu0
  %v4611 = vpop.f32.mrb[0].mxu0
  %v4612 = vadd.f32 %v1958, %v4611
  %v4613 = vpop.f32.mrb[0].mxu0
  %4614 = vdwg.mxu0
  %v4615 = vmul.f32 %v4577, %v4577
  %v4616 = vmul.f32 %v4580, %v4580
  %v4617 = vmul.f32 %v4585, %v4585
  %v4618 = vmul.f32 %v4588, %v4588
  %v4619 = vmul.f32 %v4593, %v4593
  %v4620 = vmul.f32 %v4596, %v4596
  %v4621 = vmul.f32 %v4601, %v4601
  %v4622 = vmul.f32 %v4604, %v4604
  %v4623 = vmul.f32 %v4609, %v4609
  %v4624 = vmul.f32 %v4612, %v4612
  %v4625 = vsel %vm2127, %v4615, 0.0
  %4626 = vadd.xlane.f32.xlu0 %v4625
  %v4627 = vpop.xlane.xlu0 %4626
  %v4628 = vsel %vm2127, %v4616, 0.0
  %4629 = vadd.xlane.f32.xlu0 %v4628
  %v4630 = vpop.xlane.xlu0 %4629
  %v4631 = vsel %vm2127, %v4617, 0.0
  %4632 = vadd.xlane.f32.xlu0 %v4631
  %v4633 = vpop.xlane.xlu0 %4632
  %v4634 = vsel %vm2127, %v4618, 0.0
  %4635 = vadd.xlane.f32.xlu0 %v4634
  %v4636 = vpop.xlane.xlu0 %4635
  %v4637 = vsel %vm2127, %v4619, 0.0
  %4638 = vadd.xlane.f32.xlu0 %v4637
  %v4639 = vpop.xlane.xlu0 %4638
  %v4640 = vsel %vm2127, %v4620, 0.0
  %4641 = vadd.xlane.f32.xlu0 %v4640
  %v4642 = vpop.xlane.xlu0 %4641
  %v4643 = vsel %vm2127, %v4621, 0.0
  %4644 = vadd.xlane.f32.xlu0 %v4643
  %v4645 = vpop.xlane.xlu0 %4644
  %v4646 = vsel %vm2127, %v4622, 0.0
  %4647 = vadd.xlane.f32.xlu0 %v4646
  %v4648 = vpop.xlane.xlu0 %4647
  %v4649 = vsel %vm2127, %v4623, 0.0
  %4650 = vadd.xlane.f32.xlu0 %v4649
  %v4651 = vpop.xlane.xlu0 %4650
  %v4652 = vsel %vm2127, %v4624, 0.0
  %4653 = vadd.xlane.f32.xlu0 %v4652
  %v4654 = vpop.xlane.xlu0 %4653
  %v4655 = vmul.f32 %v4627, %v2158
  %v4656 = vmul.f32 %v4630, %v2158
  %v4657 = vmul.f32 %v4633, %v2158
  %v4658 = vmul.f32 %v4636, %v2158
  %v4659 = vmul.f32 %v4639, %v2158
  %v4660 = vmul.f32 %v4642, %v2158
  %v4661 = vmul.f32 %v4645, %v2158
  %v4662 = vmul.f32 %v4648, %v2158
  %v4663 = vmul.f32 %v4651, %v2158
  %v4664 = vmul.f32 %v4654, %v2158
  %4675 = vrot.lane.b32.xlu0 %v4615, 113
  %v4676 = vpop.permute.xlu0 %4675
  %4677 = vrot.lane.b32.xlu0 %v4616, 113
  %v4678 = vpop.permute.xlu0 %4677
  %4679 = vrot.lane.b32.xlu0 %v4617, 113
  %v4680 = vpop.permute.xlu0 %4679
  %4681 = vrot.lane.b32.xlu0 %v4618, 113
  %v4682 = vpop.permute.xlu0 %4681
  %4683 = vrot.lane.b32.xlu0 %v4619, 113
  %v4684 = vpop.permute.xlu0 %4683
  %4685 = vrot.lane.b32.xlu0 %v4620, 113
  %v4686 = vpop.permute.xlu0 %4685
  %4687 = vrot.lane.b32.xlu0 %v4621, 113
  %v4688 = vpop.permute.xlu0 %4687
  %4689 = vrot.lane.b32.xlu0 %v4622, 113
  %v4690 = vpop.permute.xlu0 %4689
  %4691 = vrot.lane.b32.xlu0 %v4623, 113
  %v4692 = vpop.permute.xlu0 %4691
  %4693 = vrot.lane.b32.xlu0 %v4624, 113
  %v4694 = vpop.permute.xlu0 %4693
  %v4705 = vsel %vm2127, %v4676, 0.0
  %4706 = vadd.xlane.f32.xlu0 %v4705
  %v4707 = vpop.xlane.xlu0 %4706
  %v4708 = vsel %vm2127, %v4678, 0.0
  %4709 = vadd.xlane.f32.xlu0 %v4708
  %v4710 = vpop.xlane.xlu0 %4709
  %v4711 = vsel %vm2127, %v4680, 0.0
  %4712 = vadd.xlane.f32.xlu0 %v4711
  %v4713 = vpop.xlane.xlu0 %4712
  %v4714 = vsel %vm2127, %v4682, 0.0
  %4715 = vadd.xlane.f32.xlu0 %v4714
  %v4716 = vpop.xlane.xlu0 %4715
  %v4717 = vsel %vm2127, %v4684, 0.0
  %4718 = vadd.xlane.f32.xlu0 %v4717
  %v4719 = vpop.xlane.xlu0 %4718
  %v4720 = vsel %vm2127, %v4686, 0.0
  %4721 = vadd.xlane.f32.xlu0 %v4720
  %v4722 = vpop.xlane.xlu0 %4721
  %v4723 = vsel %vm2127, %v4688, 0.0
  %4724 = vadd.xlane.f32.xlu0 %v4723
  %v4725 = vpop.xlane.xlu0 %4724
  %v4726 = vsel %vm2127, %v4690, 0.0
  %4727 = vadd.xlane.f32.xlu0 %v4726
  %v4728 = vpop.xlane.xlu0 %4727
  %v4729 = vsel %vm2127, %v4692, 0.0
  %4730 = vadd.xlane.f32.xlu0 %v4729
  %v4731 = vpop.xlane.xlu0 %4730
  %v4732 = vsel %vm2127, %v4694, 0.0
  %4733 = vadd.xlane.f32.xlu0 %v4732
  %v4734 = vpop.xlane.xlu0 %4733
  %v4735 = vmul.f32 %v4707, %v2158
  %v4736 = vmul.f32 %v4710, %v2158
  %v4737 = vmul.f32 %v4713, %v2158
  %v4738 = vmul.f32 %v4716, %v2158
  %v4739 = vmul.f32 %v4719, %v2158
  %v4740 = vmul.f32 %v4722, %v2158
  %v4741 = vmul.f32 %v4725, %v2158
  %v4742 = vmul.f32 %v4728, %v2158
  %v4743 = vmul.f32 %v4731, %v2158
  %v4744 = vmul.f32 %v4734, %v2158
  %v4745 = vsel %vm531, %v4655, %v4735
  %v4746 = vsel %vm531, %v4656, %v4736
  %v4747 = vsel %vm531, %v4657, %v4737
  %v4748 = vsel %vm531, %v4658, %v4738
  %v4749 = vsel %vm531, %v4659, %v4739
  %v4750 = vsel %vm531, %v4660, %v4740
  %v4751 = vsel %vm531, %v4661, %v4741
  %v4752 = vsel %vm531, %v4662, %v4742
  %v4753 = vsel %vm531, %v4663, %v4743
  %v4754 = vsel %vm531, %v4664, %v4744
  %v4755 = vmax.f32 %v4745, 1e-06
  %v4756 = vmax.f32 %v4746, 1e-06
  %v4757 = vmax.f32 %v4747, 1e-06
  %v4758 = vmax.f32 %v4748, 1e-06
  %v4759 = vmax.f32 %v4749, 1e-06
  %v4760 = vmax.f32 %v4750, 1e-06
  %v4761 = vmax.f32 %v4751, 1e-06
  %v4762 = vmax.f32 %v4752, 1e-06
  %v4763 = vmax.f32 %v4753, 1e-06
  %v4764 = vmax.f32 %v4754, 1e-06
  %v4765 = vlog2.pop %v4755
  %v4766 = vmul.f32 %v4765, 0.6931472
  %v4767 = vlog2.pop %v4756
  %v4768 = vmul.f32 %v4767, 0.6931472
  %v4769 = vlog2.pop %v4757
  %v4770 = vmul.f32 %v4769, 0.6931472
  %v4771 = vlog2.pop %v4758
  %v4772 = vmul.f32 %v4771, 0.6931472
  %v4773 = vlog2.pop %v4759
  %v4774 = vmul.f32 %v4773, 0.6931472
  %v4775 = vlog2.pop %v4760
  %v4776 = vmul.f32 %v4775, 0.6931472
  %v4777 = vlog2.pop %v4761
  %v4778 = vmul.f32 %v4777, 0.6931472
  %v4779 = vlog2.pop %v4762
  %v4780 = vmul.f32 %v4779, 0.6931472
  %v4781 = vlog2.pop %v4763
  %v4782 = vmul.f32 %v4781, 0.6931472
  %v4783 = vlog2.pop %v4764
  %v4784 = vmul.f32 %v4783, 0.6931472
  %v4785 = vmul.f32 %v2289, %v4458
  %v4786 = vmul.f32 %v2290, %v4463
  %v4787 = vmul.f32 %v2291, %v4458
  %v4788 = vmul.f32 %v2292, %v4463
  %v4789 = vmul.f32 %v2293, %v4458
  %v4790 = vmul.f32 %v2294, %v4463
  %v4791 = vmul.f32 %v2295, %v4458
  %v4792 = vmul.f32 %v2296, %v4463
  %v4793 = vsel %vm2306, %v4785, 0.0
  %4794 = vadd.xlane.f32.xlu0 %v4793
  %v4795 = vpop.xlane.xlu0 %4794
  %v4796 = vsel %vm2306, %v4786, 0.0
  %4797 = vadd.xlane.f32.xlu0 %v4796
  %v4798 = vpop.xlane.xlu0 %4797
  %v4799 = vsel %vm2306, %v4787, 0.0
  %4800 = vadd.xlane.f32.xlu0 %v4799
  %v4801 = vpop.xlane.xlu0 %4800
  %v4802 = vsel %vm2306, %v4788, 0.0
  %4803 = vadd.xlane.f32.xlu0 %v4802
  %v4804 = vpop.xlane.xlu0 %4803
  %v4805 = vsel %vm2306, %v4789, 0.0
  %4806 = vadd.xlane.f32.xlu0 %v4805
  %v4807 = vpop.xlane.xlu0 %4806
  %v4808 = vsel %vm2306, %v4790, 0.0
  %4809 = vadd.xlane.f32.xlu0 %v4808
  %v4810 = vpop.xlane.xlu0 %4809
  %v4811 = vsel %vm2306, %v4791, 0.0
  %4812 = vadd.xlane.f32.xlu0 %v4811
  %v4813 = vpop.xlane.xlu0 %4812
  %v4814 = vsel %vm2306, %v4792, 0.0
  %4815 = vadd.xlane.f32.xlu0 %v4814
  %v4816 = vpop.xlane.xlu0 %4815
  %v4825 = vlaneseq
  %v4826 = vshrl.u32 %v4825, 7
  %v4827 = vsub.s32 %v2340, %v4826
  %v4828 = vrot.slane %v4795, %v4827
  %v4829 = vlaneseq
  %v4830 = vshrl.u32 %v4829, 7
  %v4831 = vsub.s32 %v2345, %v4830
  %v4832 = vrot.slane %v4798, %v4831
  %v4833 = vsel %vm2350, %v4832, %v4828
  %v4834 = vlaneseq
  %v4835 = vshrl.u32 %v4834, 7
  %v4836 = vsub.s32 %v2340, %v4835
  %v4837 = vrot.slane %v4801, %v4836
  %v4838 = vlaneseq
  %v4839 = vshrl.u32 %v4838, 7
  %v4840 = vsub.s32 %v2345, %v4839
  %v4841 = vrot.slane %v4804, %v4840
  %v4842 = vsel %vm2350, %v4841, %v4837
  %v4843 = vlaneseq
  %v4844 = vshrl.u32 %v4843, 7
  %v4845 = vsub.s32 %v2340, %v4844
  %v4846 = vrot.slane %v4807, %v4845
  %v4847 = vlaneseq
  %v4848 = vshrl.u32 %v4847, 7
  %v4849 = vsub.s32 %v2345, %v4848
  %v4850 = vrot.slane %v4810, %v4849
  %v4851 = vsel %vm2350, %v4850, %v4846
  %v4852 = vlaneseq
  %v4853 = vshrl.u32 %v4852, 7
  %v4854 = vsub.s32 %v2340, %v4853
  %v4855 = vrot.slane %v4813, %v4854
  %v4856 = vlaneseq
  %v4857 = vshrl.u32 %v4856, 7
  %v4858 = vsub.s32 %v2345, %v4857
  %v4859 = vrot.slane %v4816, %v4858
  %v4860 = vsel %vm2350, %v4859, %v4855
  %v4861 = vsel %vm2379, %v4842, %v4833
  %v4862 = vsel %vm2381, %v4851, %v4861
  %v4863 = vsel %vm2383, %v4860, %v4862
  %v4865 = vsel %vm2386, %v4863, 0.0
  %4866 = vadd.xlane.f32.xlu0 %v4865
  %v4867 = vpop.xlane.xlu0 %4866
  %v4868 = vadd.f32 %v4867, %v2297
  %v4869 = vsel %vm2391, %v4868, -inf
  %v4870 = vrot.slane %v4869, 4
  %v4871 = vmax.f32 %v4869, %v4870
  %v4872 = vrot.slane %v4871, 2
  %v4873 = vmax.f32 %v4871, %v4872
  %v4874 = vrot.slane %v4873, 1
  %v4875 = vmax.f32 %v4873, %v4874
  %v4876 = vsub.f32 %v4868, %v4875
  %v4877 = vmul.f32 %v4876, 1.442695
  %v4878 = vpow.pop %v4877
  %v4879 = vsel %vm2391, %v4878, 0.0
  %v4880 = vrot.slane %v4879, 4
  %v4881 = vadd.f32 %v4879, %v4880
  %v4882 = vrot.slane %v4881, 2
  %v4883 = vadd.f32 %v4881, %v4882
  %v4884 = vrot.slane %v4883, 1
  %v4885 = vadd.f32 %v4883, %v4884
  %v4886 = vlog2.pop %v4885
  %v4887 = vmul.f32 %v4886, 0.6931472
  %v4888 = vsub.f32 %v4876, %v4887
  %v4889 = vmul.f32 %v2412, %v4468
  %v4890 = vmul.f32 %v2413, %v4473
  %v4891 = vmul.f32 %v2414, %v4468
  %v4892 = vmul.f32 %v2415, %v4473
  %v4893 = vmul.f32 %v2416, %v4468
  %v4894 = vmul.f32 %v2417, %v4473
  %v4895 = vmul.f32 %v2418, %v4468
  %v4896 = vmul.f32 %v2419, %v4473
  %v4897 = vsel %vm2306, %v4889, 0.0
  %4898 = vadd.xlane.f32.xlu0 %v4897
  %v4899 = vpop.xlane.xlu0 %4898
  %v4900 = vsel %vm2306, %v4890, 0.0
  %4901 = vadd.xlane.f32.xlu0 %v4900
  %v4902 = vpop.xlane.xlu0 %4901
  %v4903 = vsel %vm2306, %v4891, 0.0
  %4904 = vadd.xlane.f32.xlu0 %v4903
  %v4905 = vpop.xlane.xlu0 %4904
  %v4906 = vsel %vm2306, %v4892, 0.0
  %4907 = vadd.xlane.f32.xlu0 %v4906
  %v4908 = vpop.xlane.xlu0 %4907
  %v4909 = vsel %vm2306, %v4893, 0.0
  %4910 = vadd.xlane.f32.xlu0 %v4909
  %v4911 = vpop.xlane.xlu0 %4910
  %v4912 = vsel %vm2306, %v4894, 0.0
  %4913 = vadd.xlane.f32.xlu0 %v4912
  %v4914 = vpop.xlane.xlu0 %4913
  %v4915 = vsel %vm2306, %v4895, 0.0
  %4916 = vadd.xlane.f32.xlu0 %v4915
  %v4917 = vpop.xlane.xlu0 %4916
  %v4918 = vsel %vm2306, %v4896, 0.0
  %4919 = vadd.xlane.f32.xlu0 %v4918
  %v4920 = vpop.xlane.xlu0 %4919
  %v4929 = vlaneseq
  %v4930 = vshrl.u32 %v4929, 7
  %v4931 = vsub.s32 %v2340, %v4930
  %v4932 = vrot.slane %v4899, %v4931
  %v4933 = vlaneseq
  %v4934 = vshrl.u32 %v4933, 7
  %v4935 = vsub.s32 %v2345, %v4934
  %v4936 = vrot.slane %v4902, %v4935
  %v4937 = vsel %vm2350, %v4936, %v4932
  %v4938 = vlaneseq
  %v4939 = vshrl.u32 %v4938, 7
  %v4940 = vsub.s32 %v2340, %v4939
  %v4941 = vrot.slane %v4905, %v4940
  %v4942 = vlaneseq
  %v4943 = vshrl.u32 %v4942, 7
  %v4944 = vsub.s32 %v2345, %v4943
  %v4945 = vrot.slane %v4908, %v4944
  %v4946 = vsel %vm2350, %v4945, %v4941
  %v4947 = vlaneseq
  %v4948 = vshrl.u32 %v4947, 7
  %v4949 = vsub.s32 %v2340, %v4948
  %v4950 = vrot.slane %v4911, %v4949
  %v4951 = vlaneseq
  %v4952 = vshrl.u32 %v4951, 7
  %v4953 = vsub.s32 %v2345, %v4952
  %v4954 = vrot.slane %v4914, %v4953
  %v4955 = vsel %vm2350, %v4954, %v4950
  %v4956 = vlaneseq
  %v4957 = vshrl.u32 %v4956, 7
  %v4958 = vsub.s32 %v2340, %v4957
  %v4959 = vrot.slane %v4917, %v4958
  %v4960 = vlaneseq
  %v4961 = vshrl.u32 %v4960, 7
  %v4962 = vsub.s32 %v2345, %v4961
  %v4963 = vrot.slane %v4920, %v4962
  %v4964 = vsel %vm2350, %v4963, %v4959
  %v4965 = vsel %vm2379, %v4946, %v4937
  %v4966 = vsel %vm2381, %v4955, %v4965
  %v4967 = vsel %vm2383, %v4964, %v4966
  %v4969 = vsel %vm2386, %v4967, 0.0
  %4970 = vadd.xlane.f32.xlu0 %v4969
  %v4971 = vpop.xlane.xlu0 %4970
  %v4972 = vadd.f32 %v4971, %v2420
  %v4973 = vsel %vm2391, %v4972, -inf
  %v4974 = vrot.slane %v4973, 4
  %v4975 = vmax.f32 %v4973, %v4974
  %v4976 = vrot.slane %v4975, 2
  %v4977 = vmax.f32 %v4975, %v4976
  %v4978 = vrot.slane %v4977, 1
  %v4979 = vmax.f32 %v4977, %v4978
  %v4980 = vsub.f32 %v4972, %v4979
  %v4981 = vmul.f32 %v4980, 1.442695
  %v4982 = vpow.pop %v4981
  %v4983 = vsel %vm2391, %v4982, 0.0
  %v4984 = vrot.slane %v4983, 4
  %v4985 = vadd.f32 %v4983, %v4984
  %v4986 = vrot.slane %v4985, 2
  %v4987 = vadd.f32 %v4985, %v4986
  %v4988 = vrot.slane %v4987, 1
  %v4989 = vadd.f32 %v4987, %v4988
  %v4990 = vlog2.pop %v4989
  %v4991 = vmul.f32 %v4990, 0.6931472
  %v4992 = vsub.f32 %v4980, %v4991
  %v4993 = vmul.f32 %v2525, %v4478
  %v4994 = vmul.f32 %v2526, %v4483
  %v4995 = vmul.f32 %v2527, %v4478
  %v4996 = vmul.f32 %v2528, %v4483
  %v4997 = vmul.f32 %v2529, %v4478
  %v4998 = vmul.f32 %v2530, %v4483
  %v4999 = vmul.f32 %v2531, %v4478
  %v5000 = vmul.f32 %v2532, %v4483
  %v5001 = vsel %vm2306, %v4993, 0.0
  %5002 = vadd.xlane.f32.xlu0 %v5001
  %v5003 = vpop.xlane.xlu0 %5002
  %v5004 = vsel %vm2306, %v4994, 0.0
  %5005 = vadd.xlane.f32.xlu0 %v5004
  %v5006 = vpop.xlane.xlu0 %5005
  %v5007 = vsel %vm2306, %v4995, 0.0
  %5008 = vadd.xlane.f32.xlu0 %v5007
  %v5009 = vpop.xlane.xlu0 %5008
  %v5010 = vsel %vm2306, %v4996, 0.0
  %5011 = vadd.xlane.f32.xlu0 %v5010
  %v5012 = vpop.xlane.xlu0 %5011
  %v5013 = vsel %vm2306, %v4997, 0.0
  %5014 = vadd.xlane.f32.xlu0 %v5013
  %v5015 = vpop.xlane.xlu0 %5014
  %v5016 = vsel %vm2306, %v4998, 0.0
  %5017 = vadd.xlane.f32.xlu0 %v5016
  %v5018 = vpop.xlane.xlu0 %5017
  %v5019 = vsel %vm2306, %v4999, 0.0
  %5020 = vadd.xlane.f32.xlu0 %v5019
  %v5021 = vpop.xlane.xlu0 %5020
  %v5022 = vsel %vm2306, %v5000, 0.0
  %5023 = vadd.xlane.f32.xlu0 %v5022
  %v5024 = vpop.xlane.xlu0 %5023
  %v5033 = vlaneseq
  %v5034 = vshrl.u32 %v5033, 7
  %v5035 = vsub.s32 %v2340, %v5034
  %v5036 = vrot.slane %v5003, %v5035
  %v5037 = vlaneseq
  %v5038 = vshrl.u32 %v5037, 7
  %v5039 = vsub.s32 %v2345, %v5038
  %v5040 = vrot.slane %v5006, %v5039
  %v5041 = vsel %vm2350, %v5040, %v5036
  %v5042 = vlaneseq
  %v5043 = vshrl.u32 %v5042, 7
  %v5044 = vsub.s32 %v2340, %v5043
  %v5045 = vrot.slane %v5009, %v5044
  %v5046 = vlaneseq
  %v5047 = vshrl.u32 %v5046, 7
  %v5048 = vsub.s32 %v2345, %v5047
  %v5049 = vrot.slane %v5012, %v5048
  %v5050 = vsel %vm2350, %v5049, %v5045
  %v5051 = vlaneseq
  %v5052 = vshrl.u32 %v5051, 7
  %v5053 = vsub.s32 %v2340, %v5052
  %v5054 = vrot.slane %v5015, %v5053
  %v5055 = vlaneseq
  %v5056 = vshrl.u32 %v5055, 7
  %v5057 = vsub.s32 %v2345, %v5056
  %v5058 = vrot.slane %v5018, %v5057
  %v5059 = vsel %vm2350, %v5058, %v5054
  %v5060 = vlaneseq
  %v5061 = vshrl.u32 %v5060, 7
  %v5062 = vsub.s32 %v2340, %v5061
  %v5063 = vrot.slane %v5021, %v5062
  %v5064 = vlaneseq
  %v5065 = vshrl.u32 %v5064, 7
  %v5066 = vsub.s32 %v2345, %v5065
  %v5067 = vrot.slane %v5024, %v5066
  %v5068 = vsel %vm2350, %v5067, %v5063
  %v5069 = vsel %vm2379, %v5050, %v5041
  %v5070 = vsel %vm2381, %v5059, %v5069
  %v5071 = vsel %vm2383, %v5068, %v5070
  %v5073 = vsel %vm2386, %v5071, 0.0
  %5074 = vadd.xlane.f32.xlu0 %v5073
  %v5075 = vpop.xlane.xlu0 %5074
  %v5076 = vadd.f32 %v5075, %v2533
  %v5077 = vsel %vm2391, %v5076, -inf
  %v5078 = vrot.slane %v5077, 4
  %v5079 = vmax.f32 %v5077, %v5078
  %v5080 = vrot.slane %v5079, 2
  %v5081 = vmax.f32 %v5079, %v5080
  %v5082 = vrot.slane %v5081, 1
  %v5083 = vmax.f32 %v5081, %v5082
  %v5084 = vsub.f32 %v5076, %v5083
  %v5085 = vmul.f32 %v5084, 1.442695
  %v5086 = vpow.pop %v5085
  %v5087 = vsel %vm2391, %v5086, 0.0
  %v5088 = vrot.slane %v5087, 4
  %v5089 = vadd.f32 %v5087, %v5088
  %v5090 = vrot.slane %v5089, 2
  %v5091 = vadd.f32 %v5089, %v5090
  %v5092 = vrot.slane %v5091, 1
  %v5093 = vadd.f32 %v5091, %v5092
  %v5094 = vlog2.pop %v5093
  %v5095 = vmul.f32 %v5094, 0.6931472
  %v5096 = vsub.f32 %v5084, %v5095
  %v5097 = vmul.f32 %v2638, %v4766
  %v5098 = vmul.f32 %v2639, %v4768
  %v5099 = vmul.f32 %v2640, %v4770
  %v5100 = vmul.f32 %v2641, %v4772
  %v5101 = vmul.f32 %v2642, %v4774
  %v5102 = vmul.f32 %v2643, %v4766
  %v5103 = vmul.f32 %v2644, %v4768
  %v5104 = vmul.f32 %v2645, %v4770
  %v5105 = vmul.f32 %v2646, %v4772
  %v5106 = vmul.f32 %v2647, %v4774
  %v5107 = vmul.f32 %v2648, %v4766
  %v5108 = vmul.f32 %v2649, %v4768
  %v5109 = vmul.f32 %v2650, %v4770
  %v5110 = vmul.f32 %v2651, %v4772
  %v5111 = vmul.f32 %v2652, %v4774
  %v5112 = vmul.f32 %v2653, %v4766
  %v5113 = vmul.f32 %v2654, %v4768
  %v5114 = vmul.f32 %v2655, %v4770
  %v5115 = vmul.f32 %v2656, %v4772
  %v5116 = vmul.f32 %v2657, %v4774
  %v5117 = vsel %vm2679, %v5097, 0.0
  %5118 = vadd.xlane.f32.xlu0 %v5117
  %v5119 = vpop.xlane.xlu0 %5118
  %v5120 = vsel %vm2679, %v5098, 0.0
  %5121 = vadd.xlane.f32.xlu0 %v5120
  %v5122 = vpop.xlane.xlu0 %5121
  %v5123 = vsel %vm2679, %v5099, 0.0
  %5124 = vadd.xlane.f32.xlu0 %v5123
  %v5125 = vpop.xlane.xlu0 %5124
  %v5126 = vsel %vm2679, %v5100, 0.0
  %5127 = vadd.xlane.f32.xlu0 %v5126
  %v5128 = vpop.xlane.xlu0 %5127
  %v5129 = vsel %vm2679, %v5101, 0.0
  %5130 = vadd.xlane.f32.xlu0 %v5129
  %v5131 = vpop.xlane.xlu0 %5130
  %v5132 = vsel %vm2679, %v5102, 0.0
  %5133 = vadd.xlane.f32.xlu0 %v5132
  %v5134 = vpop.xlane.xlu0 %5133
  %v5135 = vsel %vm2679, %v5103, 0.0
  %5136 = vadd.xlane.f32.xlu0 %v5135
  %v5137 = vpop.xlane.xlu0 %5136
  %v5138 = vsel %vm2679, %v5104, 0.0
  %5139 = vadd.xlane.f32.xlu0 %v5138
  %v5140 = vpop.xlane.xlu0 %5139
  %v5141 = vsel %vm2679, %v5105, 0.0
  %5142 = vadd.xlane.f32.xlu0 %v5141
  %v5143 = vpop.xlane.xlu0 %5142
  %v5144 = vsel %vm2679, %v5106, 0.0
  %5145 = vadd.xlane.f32.xlu0 %v5144
  %v5146 = vpop.xlane.xlu0 %5145
  %v5147 = vsel %vm2679, %v5107, 0.0
  %5148 = vadd.xlane.f32.xlu0 %v5147
  %v5149 = vpop.xlane.xlu0 %5148
  %v5150 = vsel %vm2679, %v5108, 0.0
  %5151 = vadd.xlane.f32.xlu0 %v5150
  %v5152 = vpop.xlane.xlu0 %5151
  %v5153 = vsel %vm2679, %v5109, 0.0
  %5154 = vadd.xlane.f32.xlu0 %v5153
  %v5155 = vpop.xlane.xlu0 %5154
  %v5156 = vsel %vm2679, %v5110, 0.0
  %5157 = vadd.xlane.f32.xlu0 %v5156
  %v5158 = vpop.xlane.xlu0 %5157
  %v5159 = vsel %vm2679, %v5111, 0.0
  %5160 = vadd.xlane.f32.xlu0 %v5159
  %v5161 = vpop.xlane.xlu0 %5160
  %v5162 = vsel %vm2679, %v5112, 0.0
  %5163 = vadd.xlane.f32.xlu0 %v5162
  %v5164 = vpop.xlane.xlu0 %5163
  %v5165 = vsel %vm2679, %v5113, 0.0
  %5166 = vadd.xlane.f32.xlu0 %v5165
  %v5167 = vpop.xlane.xlu0 %5166
  %v5168 = vsel %vm2679, %v5114, 0.0
  %5169 = vadd.xlane.f32.xlu0 %v5168
  %v5170 = vpop.xlane.xlu0 %5169
  %v5171 = vsel %vm2679, %v5115, 0.0
  %5172 = vadd.xlane.f32.xlu0 %v5171
  %v5173 = vpop.xlane.xlu0 %5172
  %v5174 = vsel %vm2679, %v5116, 0.0
  %5175 = vadd.xlane.f32.xlu0 %v5174
  %v5176 = vpop.xlane.xlu0 %5175
  %v5197 = vlaneseq
  %v5198 = vshrl.u32 %v5197, 7
  %v5199 = vsub.s32 %v2340, %v5198
  %v5200 = vrot.slane %v5119, %v5199
  %v5201 = vlaneseq
  %v5202 = vshrl.u32 %v5201, 7
  %v5203 = vsub.s32 %v2345, %v5202
  %v5204 = vrot.slane %v5122, %v5203
  %v5205 = vsel %vm2350, %v5204, %v5200
  %v5206 = vlaneseq
  %v5207 = vshrl.u32 %v5206, 7
  %v5208 = vsub.s32 %v2769, %v5207
  %v5209 = vrot.slane %v5125, %v5208
  %v5210 = vsel %vm2774, %v5209, %v5205
  %v5211 = vlaneseq
  %v5212 = vshrl.u32 %v5211, 7
  %v5213 = vsub.s32 %v2776, %v5212
  %v5214 = vrot.slane %v5128, %v5213
  %v5215 = vsel %vm2781, %v5214, %v5210
  %v5216 = vlaneseq
  %v5217 = vshrl.u32 %v5216, 7
  %v5218 = vsub.s32 %v2783, %v5217
  %v5219 = vrot.slane %v5131, %v5218
  %v5220 = vsel %vm2788, %v5219, %v5215
  %v5221 = vlaneseq
  %v5222 = vshrl.u32 %v5221, 7
  %v5223 = vsub.s32 %v2340, %v5222
  %v5224 = vrot.slane %v5134, %v5223
  %v5225 = vlaneseq
  %v5226 = vshrl.u32 %v5225, 7
  %v5227 = vsub.s32 %v2345, %v5226
  %v5228 = vrot.slane %v5137, %v5227
  %v5229 = vsel %vm2350, %v5228, %v5224
  %v5230 = vlaneseq
  %v5231 = vshrl.u32 %v5230, 7
  %v5232 = vsub.s32 %v2769, %v5231
  %v5233 = vrot.slane %v5140, %v5232
  %v5234 = vsel %vm2774, %v5233, %v5229
  %v5235 = vlaneseq
  %v5236 = vshrl.u32 %v5235, 7
  %v5237 = vsub.s32 %v2776, %v5236
  %v5238 = vrot.slane %v5143, %v5237
  %v5239 = vsel %vm2781, %v5238, %v5234
  %v5240 = vlaneseq
  %v5241 = vshrl.u32 %v5240, 7
  %v5242 = vsub.s32 %v2783, %v5241
  %v5243 = vrot.slane %v5146, %v5242
  %v5244 = vsel %vm2788, %v5243, %v5239
  %v5245 = vlaneseq
  %v5246 = vshrl.u32 %v5245, 7
  %v5247 = vsub.s32 %v2340, %v5246
  %v5248 = vrot.slane %v5149, %v5247
  %v5249 = vlaneseq
  %v5250 = vshrl.u32 %v5249, 7
  %v5251 = vsub.s32 %v2345, %v5250
  %v5252 = vrot.slane %v5152, %v5251
  %v5253 = vsel %vm2350, %v5252, %v5248
  %v5254 = vlaneseq
  %v5255 = vshrl.u32 %v5254, 7
  %v5256 = vsub.s32 %v2769, %v5255
  %v5257 = vrot.slane %v5155, %v5256
  %v5258 = vsel %vm2774, %v5257, %v5253
  %v5259 = vlaneseq
  %v5260 = vshrl.u32 %v5259, 7
  %v5261 = vsub.s32 %v2776, %v5260
  %v5262 = vrot.slane %v5158, %v5261
  %v5263 = vsel %vm2781, %v5262, %v5258
  %v5264 = vlaneseq
  %v5265 = vshrl.u32 %v5264, 7
  %v5266 = vsub.s32 %v2783, %v5265
  %v5267 = vrot.slane %v5161, %v5266
  %v5268 = vsel %vm2788, %v5267, %v5263
  %v5269 = vlaneseq
  %v5270 = vshrl.u32 %v5269, 7
  %v5271 = vsub.s32 %v2340, %v5270
  %v5272 = vrot.slane %v5164, %v5271
  %v5273 = vlaneseq
  %v5274 = vshrl.u32 %v5273, 7
  %v5275 = vsub.s32 %v2345, %v5274
  %v5276 = vrot.slane %v5167, %v5275
  %v5277 = vsel %vm2350, %v5276, %v5272
  %v5278 = vlaneseq
  %v5279 = vshrl.u32 %v5278, 7
  %v5280 = vsub.s32 %v2769, %v5279
  %v5281 = vrot.slane %v5170, %v5280
  %v5282 = vsel %vm2774, %v5281, %v5277
  %v5283 = vlaneseq
  %v5284 = vshrl.u32 %v5283, 7
  %v5285 = vsub.s32 %v2776, %v5284
  %v5286 = vrot.slane %v5173, %v5285
  %v5287 = vsel %vm2781, %v5286, %v5282
  %v5288 = vlaneseq
  %v5289 = vshrl.u32 %v5288, 7
  %v5290 = vsub.s32 %v2783, %v5289
  %v5291 = vrot.slane %v5176, %v5290
  %v5292 = vsel %vm2788, %v5291, %v5287
  %v5293 = vsel %vm2379, %v5244, %v5220
  %v5294 = vsel %vm2381, %v5268, %v5293
  %v5295 = vsel %vm2383, %v5292, %v5294
  %v5297 = vsel %vm2866, %v5295, 0.0
  %5298 = vadd.xlane.f32.xlu0 %v5297
  %v5299 = vpop.xlane.xlu0 %5298
  %v5300 = vadd.f32 %v5299, %v2658
  %v5301 = vsel %vm2391, %v5300, -inf
  %v5302 = vrot.slane %v5301, 4
  %v5303 = vmax.f32 %v5301, %v5302
  %v5304 = vrot.slane %v5303, 2
  %v5305 = vmax.f32 %v5303, %v5304
  %v5306 = vrot.slane %v5305, 1
  %v5307 = vmax.f32 %v5305, %v5306
  %v5308 = vsub.f32 %v5300, %v5307
  %v5309 = vmul.f32 %v5308, 1.442695
  %v5310 = vpow.pop %v5309
  %v5311 = vsel %vm2391, %v5310, 0.0
  %v5312 = vrot.slane %v5311, 4
  %v5313 = vadd.f32 %v5311, %v5312
  %v5314 = vrot.slane %v5313, 2
  %v5315 = vadd.f32 %v5313, %v5314
  %v5316 = vrot.slane %v5315, 1
  %v5317 = vadd.f32 %v5315, %v5316
  %v5318 = vlog2.pop %v5317
  %v5319 = vmul.f32 %v5318, 0.6931472
  %v5320 = vsub.f32 %v5308, %v5319
  %v5321 = vmul.f32 %v2891, %v4776
  %v5322 = vmul.f32 %v2892, %v4778
  %v5323 = vmul.f32 %v2893, %v4780
  %v5324 = vmul.f32 %v2894, %v4782
  %v5325 = vmul.f32 %v2895, %v4784
  %v5326 = vmul.f32 %v2896, %v4776
  %v5327 = vmul.f32 %v2897, %v4778
  %v5328 = vmul.f32 %v2898, %v4780
  %v5329 = vmul.f32 %v2899, %v4782
  %v5330 = vmul.f32 %v2900, %v4784
  %v5331 = vmul.f32 %v2901, %v4776
  %v5332 = vmul.f32 %v2902, %v4778
  %v5333 = vmul.f32 %v2903, %v4780
  %v5334 = vmul.f32 %v2904, %v4782
  %v5335 = vmul.f32 %v2905, %v4784
  %v5336 = vmul.f32 %v2906, %v4776
  %v5337 = vmul.f32 %v2907, %v4778
  %v5338 = vmul.f32 %v2908, %v4780
  %v5339 = vmul.f32 %v2909, %v4782
  %v5340 = vmul.f32 %v2910, %v4784
  %v5341 = vsel %vm2679, %v5321, 0.0
  %5342 = vadd.xlane.f32.xlu0 %v5341
  %v5343 = vpop.xlane.xlu0 %5342
  %v5344 = vsel %vm2679, %v5322, 0.0
  %5345 = vadd.xlane.f32.xlu0 %v5344
  %v5346 = vpop.xlane.xlu0 %5345
  %v5347 = vsel %vm2679, %v5323, 0.0
  %5348 = vadd.xlane.f32.xlu0 %v5347
  %v5349 = vpop.xlane.xlu0 %5348
  %v5350 = vsel %vm2679, %v5324, 0.0
  %5351 = vadd.xlane.f32.xlu0 %v5350
  %v5352 = vpop.xlane.xlu0 %5351
  %v5353 = vsel %vm2679, %v5325, 0.0
  %5354 = vadd.xlane.f32.xlu0 %v5353
  %v5355 = vpop.xlane.xlu0 %5354
  %v5356 = vsel %vm2679, %v5326, 0.0
  %5357 = vadd.xlane.f32.xlu0 %v5356
  %v5358 = vpop.xlane.xlu0 %5357
  %v5359 = vsel %vm2679, %v5327, 0.0
  %5360 = vadd.xlane.f32.xlu0 %v5359
  %v5361 = vpop.xlane.xlu0 %5360
  %v5362 = vsel %vm2679, %v5328, 0.0
  %5363 = vadd.xlane.f32.xlu0 %v5362
  %v5364 = vpop.xlane.xlu0 %5363
  %v5365 = vsel %vm2679, %v5329, 0.0
  %5366 = vadd.xlane.f32.xlu0 %v5365
  %v5367 = vpop.xlane.xlu0 %5366
  %v5368 = vsel %vm2679, %v5330, 0.0
  %5369 = vadd.xlane.f32.xlu0 %v5368
  %v5370 = vpop.xlane.xlu0 %5369
  %v5371 = vsel %vm2679, %v5331, 0.0
  %5372 = vadd.xlane.f32.xlu0 %v5371
  %v5373 = vpop.xlane.xlu0 %5372
  %v5374 = vsel %vm2679, %v5332, 0.0
  %5375 = vadd.xlane.f32.xlu0 %v5374
  %v5376 = vpop.xlane.xlu0 %5375
  %v5377 = vsel %vm2679, %v5333, 0.0
  %5378 = vadd.xlane.f32.xlu0 %v5377
  %v5379 = vpop.xlane.xlu0 %5378
  %v5380 = vsel %vm2679, %v5334, 0.0
  %5381 = vadd.xlane.f32.xlu0 %v5380
  %v5382 = vpop.xlane.xlu0 %5381
  %v5383 = vsel %vm2679, %v5335, 0.0
  %5384 = vadd.xlane.f32.xlu0 %v5383
  %v5385 = vpop.xlane.xlu0 %5384
  %v5386 = vsel %vm2679, %v5336, 0.0
  %5387 = vadd.xlane.f32.xlu0 %v5386
  %v5388 = vpop.xlane.xlu0 %5387
  %v5389 = vsel %vm2679, %v5337, 0.0
  %5390 = vadd.xlane.f32.xlu0 %v5389
  %v5391 = vpop.xlane.xlu0 %5390
  %v5392 = vsel %vm2679, %v5338, 0.0
  %5393 = vadd.xlane.f32.xlu0 %v5392
  %v5394 = vpop.xlane.xlu0 %5393
  %v5395 = vsel %vm2679, %v5339, 0.0
  %5396 = vadd.xlane.f32.xlu0 %v5395
  %v5397 = vpop.xlane.xlu0 %5396
  %v5398 = vsel %vm2679, %v5340, 0.0
  %5399 = vadd.xlane.f32.xlu0 %v5398
  %v5400 = vpop.xlane.xlu0 %5399
  %v5421 = vlaneseq
  %v5422 = vshrl.u32 %v5421, 7
  %v5423 = vsub.s32 %v2340, %v5422
  %v5424 = vrot.slane %v5343, %v5423
  %v5425 = vlaneseq
  %v5426 = vshrl.u32 %v5425, 7
  %v5427 = vsub.s32 %v2345, %v5426
  %v5428 = vrot.slane %v5346, %v5427
  %v5429 = vsel %vm2350, %v5428, %v5424
  %v5430 = vlaneseq
  %v5431 = vshrl.u32 %v5430, 7
  %v5432 = vsub.s32 %v2769, %v5431
  %v5433 = vrot.slane %v5349, %v5432
  %v5434 = vsel %vm2774, %v5433, %v5429
  %v5435 = vlaneseq
  %v5436 = vshrl.u32 %v5435, 7
  %v5437 = vsub.s32 %v2776, %v5436
  %v5438 = vrot.slane %v5352, %v5437
  %v5439 = vsel %vm2781, %v5438, %v5434
  %v5440 = vlaneseq
  %v5441 = vshrl.u32 %v5440, 7
  %v5442 = vsub.s32 %v2783, %v5441
  %v5443 = vrot.slane %v5355, %v5442
  %v5444 = vsel %vm2788, %v5443, %v5439
  %v5445 = vlaneseq
  %v5446 = vshrl.u32 %v5445, 7
  %v5447 = vsub.s32 %v2340, %v5446
  %v5448 = vrot.slane %v5358, %v5447
  %v5449 = vlaneseq
  %v5450 = vshrl.u32 %v5449, 7
  %v5451 = vsub.s32 %v2345, %v5450
  %v5452 = vrot.slane %v5361, %v5451
  %v5453 = vsel %vm2350, %v5452, %v5448
  %v5454 = vlaneseq
  %v5455 = vshrl.u32 %v5454, 7
  %v5456 = vsub.s32 %v2769, %v5455
  %v5457 = vrot.slane %v5364, %v5456
  %v5458 = vsel %vm2774, %v5457, %v5453
  %v5459 = vlaneseq
  %v5460 = vshrl.u32 %v5459, 7
  %v5461 = vsub.s32 %v2776, %v5460
  %v5462 = vrot.slane %v5367, %v5461
  %v5463 = vsel %vm2781, %v5462, %v5458
  %v5464 = vlaneseq
  %v5465 = vshrl.u32 %v5464, 7
  %v5466 = vsub.s32 %v2783, %v5465
  %v5467 = vrot.slane %v5370, %v5466
  %v5468 = vsel %vm2788, %v5467, %v5463
  %v5469 = vlaneseq
  %v5470 = vshrl.u32 %v5469, 7
  %v5471 = vsub.s32 %v2340, %v5470
  %v5472 = vrot.slane %v5373, %v5471
  %v5473 = vlaneseq
  %v5474 = vshrl.u32 %v5473, 7
  %v5475 = vsub.s32 %v2345, %v5474
  %v5476 = vrot.slane %v5376, %v5475
  %v5477 = vsel %vm2350, %v5476, %v5472
  %v5478 = vlaneseq
  %v5479 = vshrl.u32 %v5478, 7
  %v5480 = vsub.s32 %v2769, %v5479
  %v5481 = vrot.slane %v5379, %v5480
  %v5482 = vsel %vm2774, %v5481, %v5477
  %v5483 = vlaneseq
  %v5484 = vshrl.u32 %v5483, 7
  %v5485 = vsub.s32 %v2776, %v5484
  %v5486 = vrot.slane %v5382, %v5485
  %v5487 = vsel %vm2781, %v5486, %v5482
  %v5488 = vlaneseq
  %v5489 = vshrl.u32 %v5488, 7
  %v5490 = vsub.s32 %v2783, %v5489
  %v5491 = vrot.slane %v5385, %v5490
  %v5492 = vsel %vm2788, %v5491, %v5487
  %v5493 = vlaneseq
  %v5494 = vshrl.u32 %v5493, 7
  %v5495 = vsub.s32 %v2340, %v5494
  %v5496 = vrot.slane %v5388, %v5495
  %v5497 = vlaneseq
  %v5498 = vshrl.u32 %v5497, 7
  %v5499 = vsub.s32 %v2345, %v5498
  %v5500 = vrot.slane %v5391, %v5499
  %v5501 = vsel %vm2350, %v5500, %v5496
  %v5502 = vlaneseq
  %v5503 = vshrl.u32 %v5502, 7
  %v5504 = vsub.s32 %v2769, %v5503
  %v5505 = vrot.slane %v5394, %v5504
  %v5506 = vsel %vm2774, %v5505, %v5501
  %v5507 = vlaneseq
  %v5508 = vshrl.u32 %v5507, 7
  %v5509 = vsub.s32 %v2776, %v5508
  %v5510 = vrot.slane %v5397, %v5509
  %v5511 = vsel %vm2781, %v5510, %v5506
  %v5512 = vlaneseq
  %v5513 = vshrl.u32 %v5512, 7
  %v5514 = vsub.s32 %v2783, %v5513
  %v5515 = vrot.slane %v5400, %v5514
  %v5516 = vsel %vm2788, %v5515, %v5511
  %v5517 = vsel %vm2379, %v5468, %v5444
  %v5518 = vsel %vm2381, %v5492, %v5517
  %v5519 = vsel %vm2383, %v5516, %v5518
  %v5521 = vsel %vm2866, %v5519, 0.0
  %5522 = vadd.xlane.f32.xlu0 %v5521
  %v5523 = vpop.xlane.xlu0 %5522
  %v5524 = vadd.f32 %v5523, %v2911
  %v5525 = vsel %vm2391, %v5524, -inf
  %v5526 = vrot.slane %v5525, 4
  %v5527 = vmax.f32 %v5525, %v5526
  %v5528 = vrot.slane %v5527, 2
  %v5529 = vmax.f32 %v5527, %v5528
  %v5530 = vrot.slane %v5529, 1
  %v5531 = vmax.f32 %v5529, %v5530
  %v5532 = vsub.f32 %v5524, %v5531
  %v5533 = vmul.f32 %v5532, 1.442695
  %v5534 = vpow.pop %v5533
  %v5535 = vsel %vm2391, %v5534, 0.0
  %v5536 = vrot.slane %v5535, 4
  %v5537 = vadd.f32 %v5535, %v5536
  %v5538 = vrot.slane %v5537, 2
  %v5539 = vadd.f32 %v5537, %v5538
  %v5540 = vrot.slane %v5539, 1
  %v5541 = vadd.f32 %v5539, %v5540
  %v5542 = vlog2.pop %v5541
  %v5543 = vmul.f32 %v5542, 0.6931472
  %v5544 = vsub.f32 %v5532, %v5543
  %v5545 = vsel %vm2391, %v4888, -inf
  %v5546 = vrot.slane %v5545, 4
  %v5547 = vmax.f32 %v5545, %v5546
  %v5548 = vrot.slane %v5547, 2
  %v5549 = vmax.f32 %v5547, %v5548
  %v5550 = vrot.slane %v5549, 1
  %v5551 = vmax.f32 %v5549, %v5550
  %v5552 = vsub.f32 %v4888, %v5551
  %v5553 = vmul.f32 %v5552, 1.442695
  %v5554 = vpow.pop %v5553
  %v5555 = vsel %vm2391, %v5554, 0.0
  %v5556 = vrot.slane %v5555, 4
  %v5557 = vadd.f32 %v5555, %v5556
  %v5558 = vrot.slane %v5557, 2
  %v5559 = vadd.f32 %v5557, %v5558
  %v5560 = vrot.slane %v5559, 1
  %v5561 = vadd.f32 %v5559, %v5560
  %v5562 = vrcp.pop %v5561
  %v5563 = vmul.f32 %v5554, %v5562
  %5565 = vrot.lane.b32.xlu0 %v5320, 1
  %v5566 = vpop.permute.xlu0 %5565
  %5569 = vrot.lane.b32.xlu0 %v5096, 2
  %v5570 = vpop.permute.xlu0 %5569
  %5573 = vrot.lane.b32.xlu0 %v5544, 3
  %v5574 = vpop.permute.xlu0 %5573
  %v5576 = vsel %vm531, %v4992, %v5566
  %v5577 = vsel %vm2679, %v5576, %v5570
  %v5578 = vsel %vm3169, %v5577, %v5574
  %v5580 = vsel %vm2306, %v5578, 0
  %v5583 = vsel %vm3174, %v5563, 0
  %5585 = vmatprep.subr.mxu0 0.0
  %5586 = vmatpush1.msra.mxu0 %v5583
  %5587 = vmatprep.subr.mxu0 0.0
  %5588 = vmatpush1.msra.mxu0 0.0
  %5589 = vmatprep.subr.mxu0 0.0
  %5590 = vmatpush1.msra.mxu0 0.0
  %5591 = vmatprep.subr.mxu0 0.0
  %5592 = vmatpush1.msra.mxu0 0.0
  %5593 = vmatprep.subr.mxu0 0.0
  %5594 = vmatpush1.msra.mxu0 0.0
  %5595 = vmatprep.subr.mxu0 0.0
  %5596 = vmatpush1.msra.mxu0 0.0
  %5597 = vmatprep.subr.mxu0 0.0
  %5598 = vmatpush1.msra.mxu0 0.0
  %5599 = vmatprep.subr.mxu0 0.0
  %5600 = vmatpush1.msra.mxu0 0.0
  %5601 = vmatprep.subr.mxu0 0.0
  %5602 = vmatpush1.msra.mxu0 0.0
  %5603 = vmatprep.subr.mxu0 0.0
  %5604 = vmatpush1.msra.mxu0 0.0
  %5605 = vmatprep.subr.mxu0 0.0
  %5606 = vmatpush1.msra.mxu0 0.0
  %5607 = vmatprep.subr.mxu0 0.0
  %5608 = vmatpush1.msra.mxu0 0.0
  %5609 = vmatprep.subr.mxu0 0.0
  %5610 = vmatpush1.msra.mxu0 0.0
  %5611 = vmatprep.subr.mxu0 0.0
  %5612 = vmatpush1.msra.mxu0 0.0
  %5613 = vmatprep.subr.mxu0 0.0
  %5614 = vmatpush1.msra.mxu0 0.0
  %5615 = vmatprep.subr.mxu0 0.0
  %5616 = vmatpush1.msra.mxu0 0.0
  %5617 = vmatprep.subr.mxu0 0.0
  %5618 = vmatpush1.msra.mxu0 0.0
  %5619 = vmatprep.subr.mxu0 0.0
  %5620 = vmatpush1.msra.mxu0 0.0
  %5621 = vmatprep.subr.mxu0 0.0
  %5622 = vmatpush1.msra.mxu0 0.0
  %5623 = vmatprep.subr.mxu0 0.0
  %5624 = vmatpush1.msra.mxu0 0.0
  %5625 = vmatprep.subr.mxu0 0.0
  %5626 = vmatpush1.msra.mxu0 0.0
  %5627 = vmatprep.subr.mxu0 0.0
  %5628 = vmatpush1.msra.mxu0 0.0
  %5629 = vmatprep.subr.mxu0 0.0
  %5630 = vmatpush1.msra.mxu0 0.0
  %5631 = vmatprep.subr.mxu0 0.0
  %5632 = vmatpush1.msra.mxu0 0.0
  %5633 = vmatprep.subr.mxu0 0.0
  %5634 = vmatpush1.msra.mxu0 0.0
  %5635 = vmatprep.subr.mxu0 0.0
  %5636 = vmatpush1.msra.mxu0 0.0
  %5637 = vmatprep.subr.mxu0 0.0
  %5638 = vmatpush1.msra.mxu0 0.0
  %5639 = vmatprep.subr.mxu0 0.0
  %5640 = vmatpush1.msra.mxu0 0.0
  %5641 = vmatprep.subr.mxu0 0.0
  %5642 = vmatpush1.msra.mxu0 0.0
  %5643 = vmatprep.subr.mxu0 0.0
  %5644 = vmatpush1.msra.mxu0 0.0
  %5645 = vmatprep.subr.mxu0 0.0
  %5646 = vmatpush1.msra.mxu0 0.0
  %5647 = vmatprep.subr.mxu0 0.0
  %5648 = vmatpush1.msra.mxu0 0.0
  %5649 = vmatprep.mubr.f32.mxu0 0.0
  %5650 = vmatmul.mubr.f32.gmra.mrb[0].mxu0 %v5580
  %v5651 = vpop.f32.mrb[0].mxu0
  %v5652 = vadd.f32 0.0, %v5651
  %v5653 = vpop.f32.mrb[0].mxu0
  %5654 = vdwg.mxu0
  %5656 = vrot.lane.b32.xlu0 %v5652, 1
  %v5657 = vpop.permute.xlu0 %5656
  %v5659 = vsel %vm531, %v3245, %v5657
  %vm5660 = vcmask 11264
  %5661 = vst.msk [vmem:[%s21] sm:$0xf] %vm5660, %v5659
  %5662 = vrot.lane.b32.xlu0 %v5563, 1
  %v5663 = vpop.permute.xlu0 %5662
  %v5665 = vsel %vm531, %v3154, %v5663
  %5666 = vst.msk [vmem:[%s22] sm:$0xf] %vm5660, %v5665
  %vm5667 = vcmask 27648
  %5668 = vst.msk [vmem:[%s23] sm:$0xf] %vm5667, %v3170
  %5669 = vst.msk [vmem:[%s23 + $0x4] sm:$0xf] %vm5667, %v5578
  // Predicated region
  $region86: #{model_forward.1} parent=0 // pred_check
    _
  $region87: #{model_forward.1} parent=0 // pred_check_branch
    %5671 = sbr.rel (0) target = $region89
  $region88: #{model_forward.1} parent=0 // pred_region
    _
  $region89: #{model_forward.1} parent=0 // pred_fallthru
    _
  // Predicated region
  $region90: #{model_forward.1} parent=0 // pred_check
    _
  $region91: #{model_forward.1} parent=0 // pred_check_branch
    %5673 = sbr.rel (0) target = $region93
  $region92: #{model_forward.1} parent=0 // pred_region
    _
  $region93: #{model_forward.1} parent=0 // pred_fallthru
    _
  // Predicated region
  $region94: #{model_forward.1} parent=0 // pred_check
    _
  $region95: #{model_forward.1} parent=0 // pred_check_branch
    %5675 = sbr.rel (0) target = $region97
  $region96: #{model_forward.1} parent=0 // pred_region
    _
  $region97: #{model_forward.1} parent=0 // pred_fallthru
    _
  // Predicated region
  $region98: #{model_forward.1} parent=0 // pred_check
    _
  $region99: #{model_forward.1} parent=0 // pred_check_branch
    %5677 = sbr.rel (0) target = $region101
  $region100: #{model_forward.1} parent=0 // pred_region
    _
  $region101: #{model_forward.1} parent=0 // pred_fallthru
    _
  // Predicated region
  $region102: #{model_forward.1} parent=0 // pred_check
    _
  $region103: #{model_forward.1} parent=0 // pred_check_branch
    %5679 = sbr.rel (0) target = $region105
  $region104: #{model_forward.1} parent=0 // pred_region
    _
  $region105: #{model_forward.1} parent=0 // pred_fallthru
    _
  // Predicated region
  $region106: #{model_forward.1} parent=0 // pred_check
    _
  $region107: #{model_forward.1} parent=0 // pred_check_branch
    %5681 = sbr.rel (0) target = $region109
  $region108: #{model_forward.1} parent=0 // pred_region
    _
  $region109: #{model_forward.1} parent=0 // pred_fallthru
    _

</llo_original>
